<compile_context>
chip_gen: v7x
topology: tpu7x:2x2x1
jax: 0.10.0
libtpu: 0.0.40
codegen_flags: <defaults>
</compile_context>

<pallas_src>
import jax
import jax.numpy as jnp
from jax.experimental import pallas as pl
from jax.experimental.pallas import tpu as pltpu


def _round_up(x, m):
    return -(-x // m) * m


def _bahdanau_kernel(decpb_ref, enc_ref, bias_ref, we_ref, v_ref, ctx_ref, attw_ref):
    # Block shapes:
    #   decpb_ref : (BT, Dd)        f32   dec_hidden @ Wd^T + b (hoisted in wrapper)
    #   enc_ref   : (BT, Sp, E2p)   bf16  encoder outputs (lane-padded)
    #   bias_ref  : (BT, Sp)        f32   additive mask bias (0 keep / -1e10 masked)
    #   we_ref    : (E2p, Dd)       bf16  encoder half of W, transposed (shared)
    #   v_ref     : (1, Dd)         bf16  v weight row (shared)
    #   ctx_ref   : (BT, E2p)       f32
    #   attw_ref  : (BT, Sp)        f32
    enc = enc_ref[...]                                               # (BT, Sp, E2p) bf16
    bt, sp, e2p = enc.shape
    we = we_ref[...]                                                 # (E2p, Dd) bf16
    dd = we.shape[1]

    # Encoder projection: one tall bf16 MXU matmul over all BT*Sp rows, f32 accumulate.
    # Reshapes are tile-aligned (E2p lane-padded, Sp multiple of 8) -> no relayout copies.
    enc_proj = jnp.dot(enc.reshape(bt * sp, e2p), we,
                       preferred_element_type=jnp.float32)           # (BT*Sp, Dd) f32

    # energy = tanh(enc @ We^T + dec @ Wd^T + b); decoder part precomputed in wrapper.
    # tanh + v-dot in bf16 (bf16 EUP/VPU path on v6e/v7x); softmax stays f32.
    energy = jnp.tanh(
        (enc_proj.reshape(bt, sp, dd) + decpb_ref[...][:, None, :]
         ).astype(jnp.bfloat16))                                     # (BT, Sp, Dd) bf16

    # atten_score = v(energy): VPU multiply + lane reduce (no 1-wide MXU op).
    score = jnp.sum((energy * v_ref[...]).astype(jnp.float32), axis=-1)  # (BT, Sp) f32

    # Masked softmax over src_len (lane axis); mask was pre-folded into an additive bias.
    score = score + bias_ref[...]
    m = jnp.max(score, axis=-1, keepdims=True)                       # (BT, 1)
    e = jnp.exp(score - m)
    denom = jnp.sum(e, axis=-1, keepdims=True)                       # (BT, 1)
    w = e * pl.reciprocal(denom, approx=True)                        # (BT, Sp) f32

    # context = sum_s w[b,s] * enc[b,s,:] : VPU multiply + XLU sublane reduce,
    # f32 accumulate.  (An MXU bmm here would use only 1 of 128/256 rows per item.)
    ctx = jnp.sum(w[:, :, None] * enc, axis=1)                       # (BT, E2p) f32

    ctx_ref[...] = ctx
    attw_ref[...] = w


def bahdanau_attention(dec_hidden, encoder_outputs, mask, W_w, W_b, v_w,
                       *, block_b=None):
    """dec_hidden: (1,B,Dd); encoder_outputs: (B,S,2E); mask: (B,1,S) int.

    W_w: (Dd, Dd+2E) (torch Linear weight, out x in), W_b: (Dd,), v_w: (1, Dd).
    Returns (context (B,1,2E), atten_weights (B,S)).
    """
    B, S, E2 = encoder_outputs.shape
    Dd = dec_hidden.shape[-1]
    f32 = jnp.float32
    cdt = jnp.bfloat16    # streaming / compute dtype for the large tensors

    # torch.cat((dec_hidden, encoder_outputs), dim=2): first Dd input cols of W are Wd.
    Wd = W_w[:, :Dd]                                                 # (Dd, Dd)
    We = W_w[:, Dd:]                                                 # (Dd, E2)

    # Hoisted decoder projection + bias (tiny (B,Dd) matmul stays in XLA, f32).
    dec = jnp.transpose(dec_hidden, (1, 0, 2)).reshape(B, Dd).astype(f32)
    dec_pb = dec @ jnp.transpose(Wd).astype(f32) + W_b.astype(f32)   # (B, Dd)

    # Lane padding: make the softmax / store last dims lane-dense when small.
    Sp = _round_up(S, 128) if S < 128 else _round_up(S, 8)
    E2p = _round_up(E2, 128) if E2 < 128 else _round_up(E2, 8)

    # ---- batch tile from a generation-aware VMEM budget ---------------------------
    try:
        vmem_cap = int(pltpu.get_tpu_info().vmem_capacity_bytes)
    except Exception:
        vmem_cap = 64 * 1024 * 1024          # conservative fallback (v7x per-TC VMEM)
    vmem_limit = int(min(vmem_cap * 3 // 4, 100 * 1024 * 1024))
    budget = int(vmem_limit * 0.8)

    bytes_per_sample = (
        2 * Sp * E2p * 2       # enc block, bf16, double-buffered
        + Sp * E2p * 4         # f32 weighted-sum intermediate for the context
        + Sp * Dd * 6          # enc_proj (f32) + energy (bf16)
        + 6 * Sp * 4           # bias in + attw out + softmax temps
        + 4 * E2p * 4          # ctx out
        + 4 * Dd * 4)          # dec proj block
    fixed_bytes = E2p * Dd * 2 + Dd * 2     # shared We^T and v

    if block_b is None:
        bt_budget = max(8, (budget - fixed_bytes) // bytes_per_sample // 8 * 8)
        # Aim for >=2 (B>8) / >=4 (B>=32) grid steps so the "parallel" batch axis
        # can load-balance across v7x's two TensorCores.
        target_steps = 4 if B >= 32 else (2 if B > 8 else 1)
        BT = int(min(bt_budget, 512, max(8, _round_up(-(-B // target_steps), 8))))
    else:
        BT = int(max(8, _round_up(block_b, 8)))   # keep (8,128) divisibility legal
    Bp = _round_up(B, BT)

    # ---- padded operands (zeros contribute nothing; padded src gets -1e10 bias) ---
    enc = jnp.zeros((Bp, Sp, E2p), cdt).at[:B, :S, :E2].set(encoder_outputs.astype(cdt))
    decpb_p = jnp.zeros((Bp, Dd), f32).at[:B, :].set(dec_pb)
    bias = jnp.full((Bp, Sp), -1e10, f32).at[:B, :S].set(
        (mask.reshape(B, S).astype(f32) - 1.0) * 1e10)
    we_t = jnp.zeros((E2p, Dd), cdt).at[:E2, :].set(jnp.transpose(We).astype(cdt))
    v_row = v_w.reshape(1, Dd).astype(cdt)

    ctx, attw = pl.pallas_call(
        _bahdanau_kernel,
        out_shape=(
            jax.ShapeDtypeStruct((Bp, E2p), f32),
            jax.ShapeDtypeStruct((Bp, Sp), f32),
        ),
        grid=(Bp // BT,),
        in_specs=[
            pl.BlockSpec((BT, Dd), lambda i: (i, 0)),           # dec proj + bias
            pl.BlockSpec((BT, Sp, E2p), lambda i: (i, 0, 0)),   # encoder outputs (bf16)
            pl.BlockSpec((BT, Sp), lambda i: (i, 0)),           # additive mask bias
            pl.BlockSpec((E2p, Dd), lambda i: (0, 0)),          # We^T (shared, bf16)
            pl.BlockSpec((1, Dd), lambda i: (0, 0)),            # v row (shared, bf16)
        ],
        out_specs=(
            pl.BlockSpec((BT, E2p), lambda i: (i, 0)),          # context
            pl.BlockSpec((BT, Sp), lambda i: (i, 0)),           # attention weights
        ),
        compiler_params=pltpu.CompilerParams(
            dimension_semantics=("parallel",),
            vmem_limit_bytes=vmem_limit,
        ),
    )(decpb_p, enc, bias, we_t, v_row)

    return ctx[:B, :E2].reshape(B, 1, E2), attw[:B, :S]


def _reference(dec_hidden, encoder_outputs, mask, W_w, W_b, v_w):
    B, S, E2 = encoder_outputs.shape
    Dd = dec_hidden.shape[-1]
    dec = jnp.transpose(dec_hidden, (1, 0, 2))                   # (B,1,Dd)
    dec = jnp.broadcast_to(dec, (B, S, Dd))                      # repeat over src_len
    cat = jnp.concatenate([dec, encoder_outputs], axis=2)
    energy = jnp.tanh(jnp.einsum("bsi,oi->bso", cat, W_w) + W_b)
    score = jnp.einsum("bso,o->bs", energy, v_w[0])[:, None, :]  # (B,1,S)
    score = jnp.where(mask == 0, -10000000000.0, score)
    w = jax.nn.softmax(score, axis=2)
    ctx = jnp.matmul(w, encoder_outputs)
    return ctx, w[:, 0, :]


if __name__ == "__main__":
    B, S = 2, 8
    enc_hidden_dim, dec_hidden_dim = 16, 32
    E2 = enc_hidden_dim * 2
    Din = E2 + dec_hidden_dim

    key = jax.random.PRNGKey(0)
    k1, k2, k3, k4, k5 = jax.random.split(key, 5)

    # Deterministic parameter init (torch Linear shapes: (out, in)).
    W_w = jax.random.normal(k1, (dec_hidden_dim, Din), jnp.float32) * 0.1
    W_b = jax.random.normal(k2, (dec_hidden_dim,), jnp.float32) * 0.1
    v_w = jax.random.normal(k3, (1, dec_hidden_dim), jnp.float32) * 0.1

    # Inputs.
    dec_hidden = jax.random.normal(k4, (1, B, dec_hidden_dim), jnp.float32)
    encoder_outputs = jax.random.normal(k5, (B, S, E2), jnp.float32)
    lengths = jnp.array([S, S - 3], dtype=jnp.int32)
    mask = (jnp.arange(S)[None, :] < lengths[:, None]).astype(jnp.int32)[:, None, :]

    ctx, attw = bahdanau_attention(dec_hidden, encoder_outputs, mask, W_w, W_b, v_w)
    jax.block_until_ready((ctx, attw))

    ctx_ref, attw_ref = _reference(dec_hidden, encoder_outputs, mask, W_w, W_b, v_w)
    assert ctx.shape == (B, 1, E2) and attw.shape == (B, S)
    # bf16 streaming + bf16 energy + approx-reciprocal softmax -> looser tolerance
    # than exact f32 (accumulation and softmax are still f32).
    assert jnp.allclose(attw, attw_ref, atol=2e-2, rtol=2e-2)
    assert jnp.allclose(ctx, ctx_ref, atol=2e-2, rtol=2e-2)

    print("KERNEL_OK")
</pallas_src>

<mosaic_0001>
module attributes {stable_mosaic.version = 11 : i64} {
  func.func @_bahdanau_kernel(%arg0: i32, %arg1: memref<8x32xf32, #tpu.memory_space<vmem>>, %arg2: memref<8x128x128xbf16, #tpu.memory_space<vmem>>, %arg3: memref<8x128xf32, #tpu.memory_space<vmem>>, %arg4: memref<128x32xbf16, #tpu.memory_space<vmem>>, %arg5: memref<1x32xbf16, #tpu.memory_space<vmem>>, %arg6: memref<8x128xf32, #tpu.memory_space<vmem>>, %arg7: memref<8x128xf32, #tpu.memory_space<vmem>>) attributes {dimension_semantics = [#tpu.dimension_semantics<parallel>], iteration_bounds = array<i64: 1>, scalar_prefetch = 0 : i64, scratch_operands = 0 : i64, tpu.core_type = #tpu.core_type<tc>, window_params = [{transform_indices = @transform_0, window_bounds = array<i64: 8, 32>}, {transform_indices = @transform_1, window_bounds = array<i64: 8, 128, 128>}, {transform_indices = @transform_2, window_bounds = array<i64: 8, 128>}, {pipeline_mode = #tpu.pipeline_mode<synchronous>, transform_indices = @transform_3, window_bounds = array<i64: 128, 32>}, {pipeline_mode = #tpu.pipeline_mode<synchronous>, transform_indices = @transform_4, window_bounds = array<i64: 1, 32>}, {transform_indices = @transform_5, window_bounds = array<i64: 8, 128>}, {transform_indices = @transform_6, window_bounds = array<i64: 8, 128>}]} {
    %c0 = arith.constant 0 : index
    %c0_0 = arith.constant 0 : index
    %c0_1 = arith.constant 0 : index
    %0 = vector.load %arg2[%c0, %c0_0, %c0_1] : memref<8x128x128xbf16, #tpu.memory_space<vmem>>, vector<8x128x128xbf16>
    %c0_2 = arith.constant 0 : index
    %c0_3 = arith.constant 0 : index
    %1 = vector.load %arg4[%c0_2, %c0_3] : memref<128x32xbf16, #tpu.memory_space<vmem>>, vector<128x32xbf16>
    %2 = vector.shape_cast %0 : vector<8x128x128xbf16> to vector<1024x128xbf16>
    %cst = arith.constant dense<0.000000e+00> : vector<1024x32xf32>
    %3 = tpu.matmul %2, %1, %cst {dimension_numbers = #tpu.dot_dimension_numbers<[1], [0], [0], [1], [0, 0, 1, 1], [], []>} : vector<1024x128xbf16>, vector<128x32xbf16>, vector<1024x32xf32> -> vector<1024x32xf32>
    %4 = vector.shape_cast %3 : vector<1024x32xf32> to vector<8x128x32xf32>
    %c0_4 = arith.constant 0 : index
    %c0_5 = arith.constant 0 : index
    %5 = vector.load %arg1[%c0_4, %c0_5] : memref<8x32xf32, #tpu.memory_space<vmem>>, vector<8x32xf32>
    %6 = vector.shape_cast %5 : vector<8x32xf32> to vector<8x1x32xf32>
    %7 = vector.broadcast %6 : vector<8x1x32xf32> to vector<8x128x32xf32>
    %8 = arith.addf %4, %7 : vector<8x128x32xf32>
    %9 = arith.truncf %8 : vector<8x128x32xf32> to vector<8x128x32xbf16>
    %10 = math.tanh %9 : vector<8x128x32xbf16>
    %c0_6 = arith.constant 0 : index
    %c0_7 = arith.constant 0 : index
    %11 = vector.load %arg5[%c0_6, %c0_7] : memref<1x32xbf16, #tpu.memory_space<vmem>>, vector<1x32xbf16>
    %12 = vector.shape_cast %11 : vector<1x32xbf16> to vector<1x1x32xbf16>
    %13 = vector.broadcast %12 : vector<1x1x32xbf16> to vector<8x128x32xbf16>
    %14 = arith.mulf %10, %13 : vector<8x128x32xbf16>
    %15 = arith.extf %14 : vector<8x128x32xbf16> to vector<8x128x32xf32>
    %cst_8 = arith.constant dense<0.000000e+00> : vector<8x128xf32>
    %16 = vector.multi_reduction <add>, %15, %cst_8 [2] : vector<8x128x32xf32> to vector<8x128xf32>
    %c0_9 = arith.constant 0 : index
    %c0_10 = arith.constant 0 : index
    %17 = vector.load %arg3[%c0_9, %c0_10] : memref<8x128xf32, #tpu.memory_space<vmem>>, vector<8x128xf32>
    %18 = arith.addf %16, %17 : vector<8x128xf32>
    %cst_11 = arith.constant dense<0xFF800000> : vector<8xf32>
    %19 = vector.multi_reduction <maximumf>, %18, %cst_11 [1] : vector<8x128xf32> to vector<8xf32>
    %20 = vector.shape_cast %19 : vector<8xf32> to vector<8x1xf32>
    %21 = vector.broadcast %20 : vector<8x1xf32> to vector<8x128xf32>
    %22 = arith.subf %18, %21 : vector<8x128xf32>
    %23 = math.exp %22 : vector<8x128xf32>
    %cst_12 = arith.constant dense<0.000000e+00> : vector<8xf32>
    %24 = vector.multi_reduction <add>, %23, %cst_12 [1] : vector<8x128xf32> to vector<8xf32>
    %25 = vector.shape_cast %24 : vector<8xf32> to vector<8x1xf32>
    %26 = tpu.reciprocal %25 {approx = true} : vector<8x1xf32> -> vector<8x1xf32>
    %27 = vector.broadcast %26 : vector<8x1xf32> to vector<8x128xf32>
    %28 = arith.mulf %23, %27 : vector<8x128xf32>
    %29 = vector.shape_cast %28 : vector<8x128xf32> to vector<8x128x1xf32>
    %30 = arith.extf %0 : vector<8x128x128xbf16> to vector<8x128x128xf32>
    %31 = vector.broadcast %29 : vector<8x128x1xf32> to vector<8x128x128xf32>
    %32 = arith.mulf %31, %30 : vector<8x128x128xf32>
    %cst_13 = arith.constant dense<0.000000e+00> : vector<8x128xf32>
    %33 = vector.multi_reduction <add>, %32, %cst_13 [1] : vector<8x128x128xf32> to vector<8x128xf32>
    %c0_14 = arith.constant 0 : index
    %c0_15 = arith.constant 0 : index
    %34 = vector.load %arg6[%c0_14, %c0_15] : memref<8x128xf32, #tpu.memory_space<vmem>>, vector<8x128xf32>
    tpu.vector_store %arg6[%c0_14, %c0_15], %33 {strides = array<i32>} : memref<8x128xf32, #tpu.memory_space<vmem>>, vector<8x128xf32>,
    %c0_16 = arith.constant 0 : index
    %c0_17 = arith.constant 0 : index
    %35 = vector.load %arg7[%c0_16, %c0_17] : memref<8x128xf32, #tpu.memory_space<vmem>>, vector<8x128xf32>
    tpu.vector_store %arg7[%c0_16, %c0_17], %28 {strides = array<i32>} : memref<8x128xf32, #tpu.memory_space<vmem>>, vector<8x128xf32>,
    return
  }
  func.func @transform_0(%arg0: i32) -> (i32, i32) {
    %c0_i32 = arith.constant 0 : i32
    %c0_i32_0 = arith.constant 0 : i32
    return %arg0, %c0_i32 : i32, i32
  }
  func.func @transform_1(%arg0: i32) -> (i32, i32, i32) {
    %c0_i32 = arith.constant 0 : i32
    %c0_i32_0 = arith.constant 0 : i32
    %c0_i32_1 = arith.constant 0 : i32
    return %arg0, %c0_i32, %c0_i32_0 : i32, i32, i32
  }
  func.func @transform_2(%arg0: i32) -> (i32, i32) {
    %c0_i32 = arith.constant 0 : i32
    %c0_i32_0 = arith.constant 0 : i32
    return %arg0, %c0_i32 : i32, i32
  }
  func.func @transform_3(%arg0: i32) -> (i32, i32) {
    %c0_i32 = arith.constant 0 : i32
    %c0_i32_0 = arith.constant 0 : i32
    %c0_i32_1 = arith.constant 0 : i32
    return %c0_i32, %c0_i32_0 : i32, i32
  }
  func.func @transform_4(%arg0: i32) -> (i32, i32) {
    %c0_i32 = arith.constant 0 : i32
    %c0_i32_0 = arith.constant 0 : i32
    %c0_i32_1 = arith.constant 0 : i32
    return %c0_i32, %c0_i32_0 : i32, i32
  }
  func.func @transform_5(%arg0: i32) -> (i32, i32) {
    %c0_i32 = arith.constant 0 : i32
    %c0_i32_0 = arith.constant 0 : i32
    return %arg0, %c0_i32 : i32, i32
  }
  func.func @transform_6(%arg0: i32) -> (i32, i32) {
    %c0_i32 = arith.constant 0 : i32
    %c0_i32_0 = arith.constant 0 : i32
    return %arg0, %c0_i32 : i32, i32
  }
}

</mosaic_0001>

<llo_original>
// kernel: tpu_custom_call.1
$region0: #{tpu_custom_call.1}
  #allocation0 [shape = 'u32[]', space=smem, size = 0x4, offset = 0x4, fixed_abs, tag = 'smem constant byte address 0x4 - core index']
  #allocation1 [shape = 'u32[144,128]{1,0:T(1,128)}', space=vmem, size = 0x12000, scoped, tag = 'internal scratch']
  %s0 = inlined_call_operand.vmem [shape: f32[8,32], index: 0, kind: input, shape index: {}]
  %s1 = inlined_call_operand.hbm [shape: bf16[8,128,128], index: 1, kind: input, shape index: {}]
  %s2 = inlined_call_operand.vmem [shape: f32[8,128], index: 2, kind: input, shape index: {}]
  %s3 = inlined_call_operand.vmem [shape: bf16[128,32], index: 3, kind: input, shape index: {}]
  %s4 = inlined_call_operand.vmem [shape: bf16[1,32], index: 4, kind: input, shape index: {}]
  %s5 = inlined_call_operand.hbm [shape: f32[8,128], index: 5, kind: output, shape index: {0}]
  %s6 = inlined_call_operand.hbm [shape: f32[8,128], index: 6, kind: output, shape index: {1}]
  %7 = xla_tuple %s5, %s6
  %s8 = sld [smem:[#allocation0]]
  $region42: #{tpu_custom_call.1} parent=0
    _
  %s10 = ssub.s32 1, %s8
  %s11 = scalar_select 0, %s10, %s8
  $region1: #{tpu_custom_call.1} parent=0
    #allocation2 [shape = 'u8[262144]{0}', space=vmem, size = 0x40000, scoped, tag = 'input window, operand 1, single buffered']
    #allocation3 [shape = 's32[1]{0}', space=sflag, size = 0x4, scoped, tag = 'scoped memory for tpu_custom_call.1']
    #allocation4 [shape = 's32[1]{0}', space=sflag, size = 0x4, scoped, tag = 'scoped memory for tpu_custom_call.1']
    #allocation5 [shape = 'u8[4096]{0}', space=vmem, size = 0x1000, scoped, tag = 'output window, operand 0, single buffered']
    #allocation6 [shape = 'u8[4096]{0}', space=vmem, size = 0x1000, scoped, tag = 'output window, operand 1, single buffered']
    #allocation7 [shape = 's32[1]{0}', space=sflag, size = 0x4, scoped, tag = 'scoped memory for tpu_custom_call.1']
    %12 = vsyncpa [#allocation3], 0
    %13 = vsyncpa [#allocation4], 0
    %14 = vsyncpa [#allocation7], 0
    // Predicated region
    $region2: #{tpu_custom_call.1} parent=1 // pred_check
      _
    $region3: #{tpu_custom_call.1} parent=1 // pred_check_branch
      %16 = sbr.rel (0) target = $region5
    $region4: #{tpu_custom_call.1} parent=1 // pred_region
      _
    $region5: #{tpu_custom_call.1} parent=1 // pred_fallthru
      _
    // Predicated region
    $region6: #{tpu_custom_call.1} parent=1 // pred_check
      _
    $region7: #{tpu_custom_call.1} parent=1 // pred_check_branch
      %18 = sbr.rel (0) target = $region9
    $region8: #{tpu_custom_call.1} parent=1 // pred_region
      %s20 = ssub.s32 8192, 8192
      %21 = vsyncadd [#allocation3], %s20
      %s22 = sshll.u32 [#allocation2], 4
      %s23 = int_to_ptr.vmem [resolvable:$true] %s22
      %28 = dma.hbm_to_vmem [thread:$0]  %s1, 8192, %s23, [#allocation3], 64, 64, 4
    $region9: #{tpu_custom_call.1} parent=1 // pred_fallthru
      _
    // Predicated region
    $region10: #{tpu_custom_call.1} parent=1 // pred_check
      _
    $region11: #{tpu_custom_call.1} parent=1 // pred_check_branch
      %30 = sbr.rel (0) target = $region13
    $region12: #{tpu_custom_call.1} parent=1 // pred_region
      _
    $region13: #{tpu_custom_call.1} parent=1 // pred_fallthru
      _
    // Predicated region
    $region14: #{tpu_custom_call.1} parent=1 // pred_check
      _
    $region15: #{tpu_custom_call.1} parent=1 // pred_check_branch
      %32 = sbr.rel (0) target = $region17
    $region16: #{tpu_custom_call.1} parent=1 // pred_region
      _
    $region17: #{tpu_custom_call.1} parent=1 // pred_fallthru
      _
    // Predicated region
    $region18: #{tpu_custom_call.1} parent=1 // pred_check
      _
    $region19: #{tpu_custom_call.1} parent=1 // pred_check_branch
      %34 = sbr.rel (0) target = $region21
    $region20: #{tpu_custom_call.1} parent=1 // pred_region
      _
    $region21: #{tpu_custom_call.1} parent=1 // pred_fallthru
      _
    // Predicated region
    $region22: #{tpu_custom_call.1} parent=1 // pred_check
      _
    $region23: #{tpu_custom_call.1} parent=1 // pred_check_branch
      %36 = sbr.rel (0) target = $region25
    $region24: #{tpu_custom_call.1} parent=1 // pred_region
      %37 = dma.done [#allocation3], 8192
    $region25: #{tpu_custom_call.1} parent=1 // pred_fallthru
      _
    %v39 = vld [vmem:[#allocation2] sm:$0xf]
    %v40 = vld [vmem:[#allocation2 + $0x4] sm:$0xf]
    %v41 = vld [vmem:[#allocation2 + $0x8] sm:$0xf]
    %v42 = vld [vmem:[#allocation2 + $0xc] sm:$0xf]
    %v43 = vld [vmem:[#allocation2 + $0x10] sm:$0xf]
    %v44 = vld [vmem:[#allocation2 + $0x14] sm:$0xf]
    %v45 = vld [vmem:[#allocation2 + $0x18] sm:$0xf]
    %v46 = vld [vmem:[#allocation2 + $0x1c] sm:$0xf]
    %v47 = vld [vmem:[#allocation2 + $0x20] sm:$0xf]
    %v48 = vld [vmem:[#allocation2 + $0x24] sm:$0xf]
    %v49 = vld [vmem:[#allocation2 + $0x28] sm:$0xf]
    %v50 = vld [vmem:[#allocation2 + $0x2c] sm:$0xf]
    %v51 = vld [vmem:[#allocation2 + $0x30] sm:$0xf]
    %v52 = vld [vmem:[#allocation2 + $0x34] sm:$0xf]
    %v53 = vld [vmem:[#allocation2 + $0x38] sm:$0xf]
    %v54 = vld [vmem:[#allocation2 + $0x3c] sm:$0xf]
    %v55 = vld [vmem:[#allocation2 + $0x40] sm:$0xf]
    %v56 = vld [vmem:[#allocation2 + $0x44] sm:$0xf]
    %v57 = vld [vmem:[#allocation2 + $0x48] sm:$0xf]
    %v58 = vld [vmem:[#allocation2 + $0x4c] sm:$0xf]
    %v59 = vld [vmem:[#allocation2 + $0x50] sm:$0xf]
    %v60 = vld [vmem:[#allocation2 + $0x54] sm:$0xf]
    %v61 = vld [vmem:[#allocation2 + $0x58] sm:$0xf]
    %v62 = vld [vmem:[#allocation2 + $0x5c] sm:$0xf]
    %v63 = vld [vmem:[#allocation2 + $0x60] sm:$0xf]
    %v64 = vld [vmem:[#allocation2 + $0x64] sm:$0xf]
    %v65 = vld [vmem:[#allocation2 + $0x68] sm:$0xf]
    %v66 = vld [vmem:[#allocation2 + $0x6c] sm:$0xf]
    %v67 = vld [vmem:[#allocation2 + $0x70] sm:$0xf]
    %v68 = vld [vmem:[#allocation2 + $0x74] sm:$0xf]
    %v69 = vld [vmem:[#allocation2 + $0x78] sm:$0xf]
    %v70 = vld [vmem:[#allocation2 + $0x7c] sm:$0xf]
    %v71 = vld [vmem:[#allocation2 + $0x80] sm:$0xf]
    %v72 = vld [vmem:[#allocation2 + $0x84] sm:$0xf]
    %v73 = vld [vmem:[#allocation2 + $0x88] sm:$0xf]
    %v74 = vld [vmem:[#allocation2 + $0x8c] sm:$0xf]
    %v75 = vld [vmem:[#allocation2 + $0x90] sm:$0xf]
    %v76 = vld [vmem:[#allocation2 + $0x94] sm:$0xf]
    %v77 = vld [vmem:[#allocation2 + $0x98] sm:$0xf]
    %v78 = vld [vmem:[#allocation2 + $0x9c] sm:$0xf]
    %v79 = vld [vmem:[#allocation2 + $0xa0] sm:$0xf]
    %v80 = vld [vmem:[#allocation2 + $0xa4] sm:$0xf]
    %v81 = vld [vmem:[#allocation2 + $0xa8] sm:$0xf]
    %v82 = vld [vmem:[#allocation2 + $0xac] sm:$0xf]
    %v83 = vld [vmem:[#allocation2 + $0xb0] sm:$0xf]
    %v84 = vld [vmem:[#allocation2 + $0xb4] sm:$0xf]
    %v85 = vld [vmem:[#allocation2 + $0xb8] sm:$0xf]
    %v86 = vld [vmem:[#allocation2 + $0xbc] sm:$0xf]
    %v87 = vld [vmem:[#allocation2 + $0xc0] sm:$0xf]
    %v88 = vld [vmem:[#allocation2 + $0xc4] sm:$0xf]
    %v89 = vld [vmem:[#allocation2 + $0xc8] sm:$0xf]
    %v90 = vld [vmem:[#allocation2 + $0xcc] sm:$0xf]
    %v91 = vld [vmem:[#allocation2 + $0xd0] sm:$0xf]
    %v92 = vld [vmem:[#allocation2 + $0xd4] sm:$0xf]
    %v93 = vld [vmem:[#allocation2 + $0xd8] sm:$0xf]
    %v94 = vld [vmem:[#allocation2 + $0xdc] sm:$0xf]
    %v95 = vld [vmem:[#allocation2 + $0xe0] sm:$0xf]
    %v96 = vld [vmem:[#allocation2 + $0xe4] sm:$0xf]
    %v97 = vld [vmem:[#allocation2 + $0xe8] sm:$0xf]
    %v98 = vld [vmem:[#allocation2 + $0xec] sm:$0xf]
    %v99 = vld [vmem:[#allocation2 + $0xf0] sm:$0xf]
    %v100 = vld [vmem:[#allocation2 + $0xf4] sm:$0xf]
    %v101 = vld [vmem:[#allocation2 + $0xf8] sm:$0xf]
    %v102 = vld [vmem:[#allocation2 + $0xfc] sm:$0xf]
    %v103 = vld [vmem:[#allocation2 + $0x100] sm:$0xf]
    %v104 = vld [vmem:[#allocation2 + $0x104] sm:$0xf]
    %v105 = vld [vmem:[#allocation2 + $0x108] sm:$0xf]
    %v106 = vld [vmem:[#allocation2 + $0x10c] sm:$0xf]
    %v107 = vld [vmem:[#allocation2 + $0x110] sm:$0xf]
    %v108 = vld [vmem:[#allocation2 + $0x114] sm:$0xf]
    %v109 = vld [vmem:[#allocation2 + $0x118] sm:$0xf]
    %v110 = vld [vmem:[#allocation2 + $0x11c] sm:$0xf]
    %v111 = vld [vmem:[#allocation2 + $0x120] sm:$0xf]
    %v112 = vld [vmem:[#allocation2 + $0x124] sm:$0xf]
    %v113 = vld [vmem:[#allocation2 + $0x128] sm:$0xf]
    %v114 = vld [vmem:[#allocation2 + $0x12c] sm:$0xf]
    %v115 = vld [vmem:[#allocation2 + $0x130] sm:$0xf]
    %v116 = vld [vmem:[#allocation2 + $0x134] sm:$0xf]
    %v117 = vld [vmem:[#allocation2 + $0x138] sm:$0xf]
    %v118 = vld [vmem:[#allocation2 + $0x13c] sm:$0xf]
    %v119 = vld [vmem:[#allocation2 + $0x140] sm:$0xf]
    %v120 = vld [vmem:[#allocation2 + $0x144] sm:$0xf]
    %v121 = vld [vmem:[#allocation2 + $0x148] sm:$0xf]
    %v122 = vld [vmem:[#allocation2 + $0x14c] sm:$0xf]
    %v123 = vld [vmem:[#allocation2 + $0x150] sm:$0xf]
    %v124 = vld [vmem:[#allocation2 + $0x154] sm:$0xf]
    %v125 = vld [vmem:[#allocation2 + $0x158] sm:$0xf]
    %v126 = vld [vmem:[#allocation2 + $0x15c] sm:$0xf]
    %v127 = vld [vmem:[#allocation2 + $0x160] sm:$0xf]
    %v128 = vld [vmem:[#allocation2 + $0x164] sm:$0xf]
    %v129 = vld [vmem:[#allocation2 + $0x168] sm:$0xf]
    %v130 = vld [vmem:[#allocation2 + $0x16c] sm:$0xf]
    %v131 = vld [vmem:[#allocation2 + $0x170] sm:$0xf]
    %v132 = vld [vmem:[#allocation2 + $0x174] sm:$0xf]
    %v133 = vld [vmem:[#allocation2 + $0x178] sm:$0xf]
    %v134 = vld [vmem:[#allocation2 + $0x17c] sm:$0xf]
    %v135 = vld [vmem:[#allocation2 + $0x180] sm:$0xf]
    %v136 = vld [vmem:[#allocation2 + $0x184] sm:$0xf]
    %v137 = vld [vmem:[#allocation2 + $0x188] sm:$0xf]
    %v138 = vld [vmem:[#allocation2 + $0x18c] sm:$0xf]
    %v139 = vld [vmem:[#allocation2 + $0x190] sm:$0xf]
    %v140 = vld [vmem:[#allocation2 + $0x194] sm:$0xf]
    %v141 = vld [vmem:[#allocation2 + $0x198] sm:$0xf]
    %v142 = vld [vmem:[#allocation2 + $0x19c] sm:$0xf]
    %v143 = vld [vmem:[#allocation2 + $0x1a0] sm:$0xf]
    %v144 = vld [vmem:[#allocation2 + $0x1a4] sm:$0xf]
    %v145 = vld [vmem:[#allocation2 + $0x1a8] sm:$0xf]
    %v146 = vld [vmem:[#allocation2 + $0x1ac] sm:$0xf]
    %v147 = vld [vmem:[#allocation2 + $0x1b0] sm:$0xf]
    %v148 = vld [vmem:[#allocation2 + $0x1b4] sm:$0xf]
    %v149 = vld [vmem:[#allocation2 + $0x1b8] sm:$0xf]
    %v150 = vld [vmem:[#allocation2 + $0x1bc] sm:$0xf]
    %v151 = vld [vmem:[#allocation2 + $0x1c0] sm:$0xf]
    %v152 = vld [vmem:[#allocation2 + $0x1c4] sm:$0xf]
    %v153 = vld [vmem:[#allocation2 + $0x1c8] sm:$0xf]
    %v154 = vld [vmem:[#allocation2 + $0x1cc] sm:$0xf]
    %v155 = vld [vmem:[#allocation2 + $0x1d0] sm:$0xf]
    %v156 = vld [vmem:[#allocation2 + $0x1d4] sm:$0xf]
    %v157 = vld [vmem:[#allocation2 + $0x1d8] sm:$0xf]
    %v158 = vld [vmem:[#allocation2 + $0x1dc] sm:$0xf]
    %v159 = vld [vmem:[#allocation2 + $0x1e0] sm:$0xf]
    %v160 = vld [vmem:[#allocation2 + $0x1e4] sm:$0xf]
    %v161 = vld [vmem:[#allocation2 + $0x1e8] sm:$0xf]
    %v162 = vld [vmem:[#allocation2 + $0x1ec] sm:$0xf]
    %v163 = vld [vmem:[#allocation2 + $0x1f0] sm:$0xf]
    %v164 = vld [vmem:[#allocation2 + $0x1f4] sm:$0xf]
    %v165 = vld [vmem:[#allocation2 + $0x1f8] sm:$0xf]
    %v166 = vld [vmem:[#allocation2 + $0x1fc] sm:$0xf]
    %v167 = vld [vmem:[%s3] sm:$0xf]
    %v168 = vld [vmem:[%s3 + $0x4] sm:$0xf]
    %v169 = vld [vmem:[%s3 + $0x8] sm:$0xf]
    %v170 = vld [vmem:[%s3 + $0xc] sm:$0xf]
    %v171 = vld [vmem:[%s3 + $0x10] sm:$0xf]
    %v172 = vld [vmem:[%s3 + $0x14] sm:$0xf]
    %v173 = vld [vmem:[%s3 + $0x18] sm:$0xf]
    %v174 = vld [vmem:[%s3 + $0x1c] sm:$0xf]
    %v175 = vld [vmem:[%s3 + $0x20] sm:$0xf]
    %v176 = vld [vmem:[%s3 + $0x24] sm:$0xf]
    %v177 = vld [vmem:[%s3 + $0x28] sm:$0xf]
    %v178 = vld [vmem:[%s3 + $0x2c] sm:$0xf]
    %v179 = vld [vmem:[%s3 + $0x30] sm:$0xf]
    %v180 = vld [vmem:[%s3 + $0x34] sm:$0xf]
    %v181 = vld [vmem:[%s3 + $0x38] sm:$0xf]
    %v182 = vld [vmem:[%s3 + $0x3c] sm:$0xf]
    %v311 = vunpack.c.l.b16 %v39
    %v312 = vunpack.c.l.b16 %v40
    %v313 = vunpack.c.l.b16 %v41
    %v314 = vunpack.c.l.b16 %v42
    %v315 = vunpack.c.l.b16 %v43
    %v316 = vunpack.c.l.b16 %v44
    %v317 = vunpack.c.l.b16 %v45
    %v318 = vunpack.c.l.b16 %v46
    %v319 = vunpack.c.l.b16 %v47
    %v320 = vunpack.c.l.b16 %v48
    %v321 = vunpack.c.l.b16 %v49
    %v322 = vunpack.c.l.b16 %v50
    %v323 = vunpack.c.l.b16 %v51
    %v324 = vunpack.c.l.b16 %v52
    %v325 = vunpack.c.l.b16 %v53
    %v326 = vunpack.c.l.b16 %v54
    %v327 = vunpack.c.l.b16 %v55
    %v328 = vunpack.c.l.b16 %v56
    %v329 = vunpack.c.l.b16 %v57
    %v330 = vunpack.c.l.b16 %v58
    %v331 = vunpack.c.l.b16 %v59
    %v332 = vunpack.c.l.b16 %v60
    %v333 = vunpack.c.l.b16 %v61
    %v334 = vunpack.c.l.b16 %v62
    %v335 = vunpack.c.l.b16 %v63
    %v336 = vunpack.c.l.b16 %v64
    %v337 = vunpack.c.l.b16 %v65
    %v338 = vunpack.c.l.b16 %v66
    %v339 = vunpack.c.l.b16 %v67
    %v340 = vunpack.c.l.b16 %v68
    %v341 = vunpack.c.l.b16 %v69
    %v342 = vunpack.c.l.b16 %v70
    %v343 = vunpack.c.l.b16 %v71
    %v344 = vunpack.c.l.b16 %v72
    %v345 = vunpack.c.l.b16 %v73
    %v346 = vunpack.c.l.b16 %v74
    %v347 = vunpack.c.l.b16 %v75
    %v348 = vunpack.c.l.b16 %v76
    %v349 = vunpack.c.l.b16 %v77
    %v350 = vunpack.c.l.b16 %v78
    %v351 = vunpack.c.l.b16 %v79
    %v352 = vunpack.c.l.b16 %v80
    %v353 = vunpack.c.l.b16 %v81
    %v354 = vunpack.c.l.b16 %v82
    %v355 = vunpack.c.l.b16 %v83
    %v356 = vunpack.c.l.b16 %v84
    %v357 = vunpack.c.l.b16 %v85
    %v358 = vunpack.c.l.b16 %v86
    %v359 = vunpack.c.l.b16 %v87
    %v360 = vunpack.c.l.b16 %v88
    %v361 = vunpack.c.l.b16 %v89
    %v362 = vunpack.c.l.b16 %v90
    %v363 = vunpack.c.l.b16 %v91
    %v364 = vunpack.c.l.b16 %v92
    %v365 = vunpack.c.l.b16 %v93
    %v366 = vunpack.c.l.b16 %v94
    %v367 = vunpack.c.l.b16 %v95
    %v368 = vunpack.c.l.b16 %v96
    %v369 = vunpack.c.l.b16 %v97
    %v370 = vunpack.c.l.b16 %v98
    %v371 = vunpack.c.l.b16 %v99
    %v372 = vunpack.c.l.b16 %v100
    %v373 = vunpack.c.l.b16 %v101
    %v374 = vunpack.c.l.b16 %v102
    %v375 = vunpack.c.l.b16 %v103
    %v376 = vunpack.c.l.b16 %v104
    %v377 = vunpack.c.l.b16 %v105
    %v378 = vunpack.c.l.b16 %v106
    %v379 = vunpack.c.l.b16 %v107
    %v380 = vunpack.c.l.b16 %v108
    %v381 = vunpack.c.l.b16 %v109
    %v382 = vunpack.c.l.b16 %v110
    %v383 = vunpack.c.l.b16 %v111
    %v384 = vunpack.c.l.b16 %v112
    %v385 = vunpack.c.l.b16 %v113
    %v386 = vunpack.c.l.b16 %v114
    %v387 = vunpack.c.l.b16 %v115
    %v388 = vunpack.c.l.b16 %v116
    %v389 = vunpack.c.l.b16 %v117
    %v390 = vunpack.c.l.b16 %v118
    %v391 = vunpack.c.l.b16 %v119
    %v392 = vunpack.c.l.b16 %v120
    %v393 = vunpack.c.l.b16 %v121
    %v394 = vunpack.c.l.b16 %v122
    %v395 = vunpack.c.l.b16 %v123
    %v396 = vunpack.c.l.b16 %v124
    %v397 = vunpack.c.l.b16 %v125
    %v398 = vunpack.c.l.b16 %v126
    %v399 = vunpack.c.l.b16 %v127
    %v400 = vunpack.c.l.b16 %v128
    %v401 = vunpack.c.l.b16 %v129
    %v402 = vunpack.c.l.b16 %v130
    %v403 = vunpack.c.l.b16 %v131
    %v404 = vunpack.c.l.b16 %v132
    %v405 = vunpack.c.l.b16 %v133
    %v406 = vunpack.c.l.b16 %v134
    %v407 = vunpack.c.l.b16 %v135
    %v408 = vunpack.c.l.b16 %v136
    %v409 = vunpack.c.l.b16 %v137
    %v410 = vunpack.c.l.b16 %v138
    %v411 = vunpack.c.l.b16 %v139
    %v412 = vunpack.c.l.b16 %v140
    %v413 = vunpack.c.l.b16 %v141
    %v414 = vunpack.c.l.b16 %v142
    %v415 = vunpack.c.l.b16 %v143
    %v416 = vunpack.c.l.b16 %v144
    %v417 = vunpack.c.l.b16 %v145
    %v418 = vunpack.c.l.b16 %v146
    %v419 = vunpack.c.l.b16 %v147
    %v420 = vunpack.c.l.b16 %v148
    %v421 = vunpack.c.l.b16 %v149
    %v422 = vunpack.c.l.b16 %v150
    %v423 = vunpack.c.l.b16 %v151
    %v424 = vunpack.c.l.b16 %v152
    %v425 = vunpack.c.l.b16 %v153
    %v426 = vunpack.c.l.b16 %v154
    %v427 = vunpack.c.l.b16 %v155
    %v428 = vunpack.c.l.b16 %v156
    %v429 = vunpack.c.l.b16 %v157
    %v430 = vunpack.c.l.b16 %v158
    %v431 = vunpack.c.l.b16 %v159
    %v432 = vunpack.c.l.b16 %v160
    %v433 = vunpack.c.l.b16 %v161
    %v434 = vunpack.c.l.b16 %v162
    %v435 = vunpack.c.l.b16 %v163
    %v436 = vunpack.c.l.b16 %v164
    %v437 = vunpack.c.l.b16 %v165
    %v438 = vunpack.c.l.b16 %v166
    %v439 = vpack.c.b16 %v312, %v311
    %v440 = vpack.c.b16 %v314, %v313
    %v441 = vpack.c.b16 %v316, %v315
    %v442 = vpack.c.b16 %v318, %v317
    %v443 = vpack.c.b16 %v320, %v319
    %v444 = vpack.c.b16 %v322, %v321
    %v445 = vpack.c.b16 %v324, %v323
    %v446 = vpack.c.b16 %v326, %v325
    %v447 = vpack.c.b16 %v328, %v327
    %v448 = vpack.c.b16 %v330, %v329
    %v449 = vpack.c.b16 %v332, %v331
    %v450 = vpack.c.b16 %v334, %v333
    %v451 = vpack.c.b16 %v336, %v335
    %v452 = vpack.c.b16 %v338, %v337
    %v453 = vpack.c.b16 %v340, %v339
    %v454 = vpack.c.b16 %v342, %v341
    %v455 = vpack.c.b16 %v344, %v343
    %v456 = vpack.c.b16 %v346, %v345
    %v457 = vpack.c.b16 %v348, %v347
    %v458 = vpack.c.b16 %v350, %v349
    %v459 = vpack.c.b16 %v352, %v351
    %v460 = vpack.c.b16 %v354, %v353
    %v461 = vpack.c.b16 %v356, %v355
    %v462 = vpack.c.b16 %v358, %v357
    %v463 = vpack.c.b16 %v360, %v359
    %v464 = vpack.c.b16 %v362, %v361
    %v465 = vpack.c.b16 %v364, %v363
    %v466 = vpack.c.b16 %v366, %v365
    %v467 = vpack.c.b16 %v368, %v367
    %v468 = vpack.c.b16 %v370, %v369
    %v469 = vpack.c.b16 %v372, %v371
    %v470 = vpack.c.b16 %v374, %v373
    %v471 = vpack.c.b16 %v376, %v375
    %v472 = vpack.c.b16 %v378, %v377
    %v473 = vpack.c.b16 %v380, %v379
    %v474 = vpack.c.b16 %v382, %v381
    %v475 = vpack.c.b16 %v384, %v383
    %v476 = vpack.c.b16 %v386, %v385
    %v477 = vpack.c.b16 %v388, %v387
    %v478 = vpack.c.b16 %v390, %v389
    %v479 = vpack.c.b16 %v392, %v391
    %v480 = vpack.c.b16 %v394, %v393
    %v481 = vpack.c.b16 %v396, %v395
    %v482 = vpack.c.b16 %v398, %v397
    %v483 = vpack.c.b16 %v400, %v399
    %v484 = vpack.c.b16 %v402, %v401
    %v485 = vpack.c.b16 %v404, %v403
    %v486 = vpack.c.b16 %v406, %v405
    %v487 = vpack.c.b16 %v408, %v407
    %v488 = vpack.c.b16 %v410, %v409
    %v489 = vpack.c.b16 %v412, %v411
    %v490 = vpack.c.b16 %v414, %v413
    %v491 = vpack.c.b16 %v416, %v415
    %v492 = vpack.c.b16 %v418, %v417
    %v493 = vpack.c.b16 %v420, %v419
    %v494 = vpack.c.b16 %v422, %v421
    %v495 = vpack.c.b16 %v424, %v423
    %v496 = vpack.c.b16 %v426, %v425
    %v497 = vpack.c.b16 %v428, %v427
    %v498 = vpack.c.b16 %v430, %v429
    %v499 = vpack.c.b16 %v432, %v431
    %v500 = vpack.c.b16 %v434, %v433
    %v501 = vpack.c.b16 %v436, %v435
    %v502 = vpack.c.b16 %v438, %v437
    %v583 = vunpack.c.l.b16 %v167
    %v584 = vunpack.c.l.b16 %v168
    %v585 = vunpack.c.l.b16 %v169
    %v586 = vunpack.c.l.b16 %v170
    %v587 = vunpack.c.l.b16 %v171
    %v588 = vunpack.c.l.b16 %v172
    %v589 = vunpack.c.l.b16 %v173
    %v590 = vunpack.c.l.b16 %v174
    %v591 = vunpack.c.l.b16 %v175
    %v592 = vunpack.c.l.b16 %v176
    %v593 = vunpack.c.l.b16 %v177
    %v594 = vunpack.c.l.b16 %v178
    %v595 = vunpack.c.l.b16 %v179
    %v596 = vunpack.c.l.b16 %v180
    %v597 = vunpack.c.l.b16 %v181
    %v598 = vunpack.c.l.b16 %v182
    %v599 = vpack.c.b16 %v584, %v583
    %v600 = vpack.c.b16 %v586, %v585
    %v601 = vpack.c.b16 %v588, %v587
    %v602 = vpack.c.b16 %v590, %v589
    %v603 = vpack.c.b16 %v592, %v591
    %v604 = vpack.c.b16 %v594, %v593
    %v605 = vpack.c.b16 %v596, %v595
    %v606 = vpack.c.b16 %v598, %v597
    %615 = vmatprep.subr.bf16.mxu0 0
    %616 = vmatpush1.bf16.msra.mxu0 %v599
    %617 = vmatprep.subr.bf16.mxu0 0
    %618 = vmatpush1.bf16.msra.mxu0 %v600
    %619 = vmatprep.subr.bf16.mxu0 0
    %620 = vmatpush1.bf16.msra.mxu0 %v601
    %621 = vmatprep.subr.bf16.mxu0 0
    %622 = vmatpush1.bf16.msra.mxu0 %v602
    %623 = vmatprep.subr.bf16.mxu0 0
    %624 = vmatpush1.bf16.msra.mxu0 %v603
    %625 = vmatprep.subr.bf16.mxu0 0
    %626 = vmatpush1.bf16.msra.mxu0 %v604
    %627 = vmatprep.subr.bf16.mxu0 0
    %628 = vmatpush1.bf16.msra.mxu0 %v605
    %629 = vmatprep.subr.bf16.mxu0 0
    %630 = vmatpush1.bf16.msra.mxu0 %v606
    %631 = vmatprep.subr.bf16.mxu0 0
    %632 = vmatpush1.bf16.msra.mxu0 0
    %633 = vmatprep.subr.bf16.mxu0 0
    %634 = vmatpush1.bf16.msra.mxu0 0
    %635 = vmatprep.subr.bf16.mxu0 0
    %636 = vmatpush1.bf16.msra.mxu0 0
    %637 = vmatprep.subr.bf16.mxu0 0
    %638 = vmatpush1.bf16.msra.mxu0 0
    %639 = vmatprep.subr.bf16.mxu0 0
    %640 = vmatpush1.bf16.msra.mxu0 0
    %641 = vmatprep.subr.bf16.mxu0 0
    %642 = vmatpush1.bf16.msra.mxu0 0
    %643 = vmatprep.subr.bf16.mxu0 0
    %644 = vmatpush1.bf16.msra.mxu0 0
    %645 = vmatprep.subr.bf16.mxu0 0
    %646 = vmatpush1.bf16.msra.mxu0 0
    %647 = vmatprep.mubr.bf16.mxu0 0
    %648 = vmatmul.mubr.bf16.gmra.mrb[0].mxu0 %v439
    %v649 = vpop.f32.mrb[0].mxu0
    %v650 = vadd.f32 0.0, %v649
    %v651 = vpop.f32.mrb[0].mxu0
    %v652 = vpop.f32.mrb[0].mxu0
    %v653 = vadd.f32 0.0, %v652
    %v654 = vpop.f32.mrb[0].mxu0
    %655 = vmatprep.mubr.bf16.mxu0 0
    %656 = vmatmul.mubr.bf16.gmra.mrb[0].mxu0 %v440
    %v657 = vpop.f32.mrb[0].mxu0
    %v658 = vadd.f32 0.0, %v657
    %v659 = vpop.f32.mrb[0].mxu0
    %v660 = vpop.f32.mrb[0].mxu0
    %v661 = vadd.f32 0.0, %v660
    %v662 = vpop.f32.mrb[0].mxu0
    %663 = vmatprep.mubr.bf16.mxu0 0
    %664 = vmatmul.mubr.bf16.gmra.mrb[0].mxu0 %v441
    %v665 = vpop.f32.mrb[0].mxu0
    %v666 = vadd.f32 0.0, %v665
    %v667 = vpop.f32.mrb[0].mxu0
    %v668 = vpop.f32.mrb[0].mxu0
    %v669 = vadd.f32 0.0, %v668
    %v670 = vpop.f32.mrb[0].mxu0
    %671 = vmatprep.mubr.bf16.mxu0 0
    %672 = vmatmul.mubr.bf16.gmra.mrb[0].mxu0 %v442
    %v673 = vpop.f32.mrb[0].mxu0
    %v674 = vadd.f32 0.0, %v673
    %v675 = vpop.f32.mrb[0].mxu0
    %v676 = vpop.f32.mrb[0].mxu0
    %v677 = vadd.f32 0.0, %v676
    %v678 = vpop.f32.mrb[0].mxu0
    %679 = vmatprep.mubr.bf16.mxu0 0
    %680 = vmatmul.mubr.bf16.gmra.mrb[0].mxu0 %v443
    %v681 = vpop.f32.mrb[0].mxu0
    %v682 = vadd.f32 0.0, %v681
    %v683 = vpop.f32.mrb[0].mxu0
    %v684 = vpop.f32.mrb[0].mxu0
    %v685 = vadd.f32 0.0, %v684
    %v686 = vpop.f32.mrb[0].mxu0
    %687 = vmatprep.mubr.bf16.mxu0 0
    %688 = vmatmul.mubr.bf16.gmra.mrb[0].mxu0 %v444
    %v689 = vpop.f32.mrb[0].mxu0
    %v690 = vadd.f32 0.0, %v689
    %v691 = vpop.f32.mrb[0].mxu0
    %v692 = vpop.f32.mrb[0].mxu0
    %v693 = vadd.f32 0.0, %v692
    %v694 = vpop.f32.mrb[0].mxu0
    %695 = vmatprep.mubr.bf16.mxu0 0
    %696 = vmatmul.mubr.bf16.gmra.mrb[0].mxu0 %v445
    %v697 = vpop.f32.mrb[0].mxu0
    %v698 = vadd.f32 0.0, %v697
    %v699 = vpop.f32.mrb[0].mxu0
    %v700 = vpop.f32.mrb[0].mxu0
    %v701 = vadd.f32 0.0, %v700
    %v702 = vpop.f32.mrb[0].mxu0
    %703 = vmatprep.mubr.bf16.mxu0 0
    %704 = vmatmul.mubr.bf16.gmra.mrb[0].mxu0 %v446
    %v705 = vpop.f32.mrb[0].mxu0
    %v706 = vadd.f32 0.0, %v705
    %v707 = vpop.f32.mrb[0].mxu0
    %v708 = vpop.f32.mrb[0].mxu0
    %v709 = vadd.f32 0.0, %v708
    %v710 = vpop.f32.mrb[0].mxu0
    %711 = vmatprep.mubr.bf16.mxu0 0
    %712 = vmatmul.mubr.bf16.gmra.mrb[0].mxu0 %v447
    %v713 = vpop.f32.mrb[0].mxu0
    %v714 = vadd.f32 0.0, %v713
    %v715 = vpop.f32.mrb[0].mxu0
    %v716 = vpop.f32.mrb[0].mxu0
    %v717 = vadd.f32 0.0, %v716
    %v718 = vpop.f32.mrb[0].mxu0
    %719 = vmatprep.mubr.bf16.mxu0 0
    %720 = vmatmul.mubr.bf16.gmra.mrb[0].mxu0 %v448
    %v721 = vpop.f32.mrb[0].mxu0
    %v722 = vadd.f32 0.0, %v721
    %v723 = vpop.f32.mrb[0].mxu0
    %v724 = vpop.f32.mrb[0].mxu0
    %v725 = vadd.f32 0.0, %v724
    %v726 = vpop.f32.mrb[0].mxu0
    %727 = vmatprep.mubr.bf16.mxu0 0
    %728 = vmatmul.mubr.bf16.gmra.mrb[0].mxu0 %v449
    %v729 = vpop.f32.mrb[0].mxu0
    %v730 = vadd.f32 0.0, %v729
    %v731 = vpop.f32.mrb[0].mxu0
    %v732 = vpop.f32.mrb[0].mxu0
    %v733 = vadd.f32 0.0, %v732
    %v734 = vpop.f32.mrb[0].mxu0
    %735 = vmatprep.mubr.bf16.mxu0 0
    %736 = vmatmul.mubr.bf16.gmra.mrb[0].mxu0 %v450
    %v737 = vpop.f32.mrb[0].mxu0
    %v738 = vadd.f32 0.0, %v737
    %v739 = vpop.f32.mrb[0].mxu0
    %v740 = vpop.f32.mrb[0].mxu0
    %v741 = vadd.f32 0.0, %v740
    %v742 = vpop.f32.mrb[0].mxu0
    %743 = vmatprep.mubr.bf16.mxu0 0
    %744 = vmatmul.mubr.bf16.gmra.mrb[0].mxu0 %v451
    %v745 = vpop.f32.mrb[0].mxu0
    %v746 = vadd.f32 0.0, %v745
    %v747 = vpop.f32.mrb[0].mxu0
    %v748 = vpop.f32.mrb[0].mxu0
    %v749 = vadd.f32 0.0, %v748
    %v750 = vpop.f32.mrb[0].mxu0
    %751 = vmatprep.mubr.bf16.mxu0 0
    %752 = vmatmul.mubr.bf16.gmra.mrb[0].mxu0 %v452
    %v753 = vpop.f32.mrb[0].mxu0
    %v754 = vadd.f32 0.0, %v753
    %v755 = vpop.f32.mrb[0].mxu0
    %v756 = vpop.f32.mrb[0].mxu0
    %v757 = vadd.f32 0.0, %v756
    %v758 = vpop.f32.mrb[0].mxu0
    %759 = vmatprep.mubr.bf16.mxu0 0
    %760 = vmatmul.mubr.bf16.gmra.mrb[0].mxu0 %v453
    %v761 = vpop.f32.mrb[0].mxu0
    %v762 = vadd.f32 0.0, %v761
    %v763 = vpop.f32.mrb[0].mxu0
    %v764 = vpop.f32.mrb[0].mxu0
    %v765 = vadd.f32 0.0, %v764
    %v766 = vpop.f32.mrb[0].mxu0
    %767 = vmatprep.mubr.bf16.mxu0 0
    %768 = vmatmul.mubr.bf16.gmra.mrb[0].mxu0 %v454
    %v769 = vpop.f32.mrb[0].mxu0
    %v770 = vadd.f32 0.0, %v769
    %v771 = vpop.f32.mrb[0].mxu0
    %v772 = vpop.f32.mrb[0].mxu0
    %v773 = vadd.f32 0.0, %v772
    %v774 = vpop.f32.mrb[0].mxu0
    %775 = vmatprep.mubr.bf16.mxu0 0
    %776 = vmatmul.mubr.bf16.gmra.mrb[0].mxu0 %v455
    %v777 = vpop.f32.mrb[0].mxu0
    %v778 = vadd.f32 0.0, %v777
    %v779 = vpop.f32.mrb[0].mxu0
    %v780 = vpop.f32.mrb[0].mxu0
    %v781 = vadd.f32 0.0, %v780
    %v782 = vpop.f32.mrb[0].mxu0
    %783 = vmatprep.mubr.bf16.mxu0 0
    %784 = vmatmul.mubr.bf16.gmra.mrb[0].mxu0 %v456
    %v785 = vpop.f32.mrb[0].mxu0
    %v786 = vadd.f32 0.0, %v785
    %v787 = vpop.f32.mrb[0].mxu0
    %v788 = vpop.f32.mrb[0].mxu0
    %v789 = vadd.f32 0.0, %v788
    %v790 = vpop.f32.mrb[0].mxu0
    %791 = vmatprep.mubr.bf16.mxu0 0
    %792 = vmatmul.mubr.bf16.gmra.mrb[0].mxu0 %v457
    %v793 = vpop.f32.mrb[0].mxu0
    %v794 = vadd.f32 0.0, %v793
    %v795 = vpop.f32.mrb[0].mxu0
    %v796 = vpop.f32.mrb[0].mxu0
    %v797 = vadd.f32 0.0, %v796
    %v798 = vpop.f32.mrb[0].mxu0
    %799 = vmatprep.mubr.bf16.mxu0 0
    %800 = vmatmul.mubr.bf16.gmra.mrb[0].mxu0 %v458
    %v801 = vpop.f32.mrb[0].mxu0
    %v802 = vadd.f32 0.0, %v801
    %v803 = vpop.f32.mrb[0].mxu0
    %v804 = vpop.f32.mrb[0].mxu0
    %v805 = vadd.f32 0.0, %v804
    %v806 = vpop.f32.mrb[0].mxu0
    %807 = vmatprep.mubr.bf16.mxu0 0
    %808 = vmatmul.mubr.bf16.gmra.mrb[0].mxu0 %v459
    %v809 = vpop.f32.mrb[0].mxu0
    %v810 = vadd.f32 0.0, %v809
    %v811 = vpop.f32.mrb[0].mxu0
    %v812 = vpop.f32.mrb[0].mxu0
    %v813 = vadd.f32 0.0, %v812
    %v814 = vpop.f32.mrb[0].mxu0
    %815 = vmatprep.mubr.bf16.mxu0 0
    %816 = vmatmul.mubr.bf16.gmra.mrb[0].mxu0 %v460
    %v817 = vpop.f32.mrb[0].mxu0
    %v818 = vadd.f32 0.0, %v817
    %v819 = vpop.f32.mrb[0].mxu0
    %v820 = vpop.f32.mrb[0].mxu0
    %v821 = vadd.f32 0.0, %v820
    %v822 = vpop.f32.mrb[0].mxu0
    %823 = vmatprep.mubr.bf16.mxu0 0
    %824 = vmatmul.mubr.bf16.gmra.mrb[0].mxu0 %v461
    %v825 = vpop.f32.mrb[0].mxu0
    %v826 = vadd.f32 0.0, %v825
    %v827 = vpop.f32.mrb[0].mxu0
    %v828 = vpop.f32.mrb[0].mxu0
    %v829 = vadd.f32 0.0, %v828
    %v830 = vpop.f32.mrb[0].mxu0
    %831 = vmatprep.mubr.bf16.mxu0 0
    %832 = vmatmul.mubr.bf16.gmra.mrb[0].mxu0 %v462
    %v833 = vpop.f32.mrb[0].mxu0
    %v834 = vadd.f32 0.0, %v833
    %v835 = vpop.f32.mrb[0].mxu0
    %v836 = vpop.f32.mrb[0].mxu0
    %v837 = vadd.f32 0.0, %v836
    %v838 = vpop.f32.mrb[0].mxu0
    %839 = vmatprep.mubr.bf16.mxu0 0
    %840 = vmatmul.mubr.bf16.gmra.mrb[0].mxu0 %v463
    %v841 = vpop.f32.mrb[0].mxu0
    %v842 = vadd.f32 0.0, %v841
    %v843 = vpop.f32.mrb[0].mxu0
    %v844 = vpop.f32.mrb[0].mxu0
    %v845 = vadd.f32 0.0, %v844
    %v846 = vpop.f32.mrb[0].mxu0
    %847 = vmatprep.mubr.bf16.mxu0 0
    %848 = vmatmul.mubr.bf16.gmra.mrb[0].mxu0 %v464
    %v849 = vpop.f32.mrb[0].mxu0
    %v850 = vadd.f32 0.0, %v849
    %v851 = vpop.f32.mrb[0].mxu0
    %v852 = vpop.f32.mrb[0].mxu0
    %v853 = vadd.f32 0.0, %v852
    %v854 = vpop.f32.mrb[0].mxu0
    %855 = vmatprep.mubr.bf16.mxu0 0
    %856 = vmatmul.mubr.bf16.gmra.mrb[0].mxu0 %v465
    %v857 = vpop.f32.mrb[0].mxu0
    %v858 = vadd.f32 0.0, %v857
    %v859 = vpop.f32.mrb[0].mxu0
    %v860 = vpop.f32.mrb[0].mxu0
    %v861 = vadd.f32 0.0, %v860
    %v862 = vpop.f32.mrb[0].mxu0
    %863 = vmatprep.mubr.bf16.mxu0 0
    %864 = vmatmul.mubr.bf16.gmra.mrb[0].mxu0 %v466
    %v865 = vpop.f32.mrb[0].mxu0
    %v866 = vadd.f32 0.0, %v865
    %v867 = vpop.f32.mrb[0].mxu0
    %v868 = vpop.f32.mrb[0].mxu0
    %v869 = vadd.f32 0.0, %v868
    %v870 = vpop.f32.mrb[0].mxu0
    %871 = vmatprep.mubr.bf16.mxu0 0
    %872 = vmatmul.mubr.bf16.gmra.mrb[0].mxu0 %v467
    %v873 = vpop.f32.mrb[0].mxu0
    %v874 = vadd.f32 0.0, %v873
    %v875 = vpop.f32.mrb[0].mxu0
    %v876 = vpop.f32.mrb[0].mxu0
    %v877 = vadd.f32 0.0, %v876
    %v878 = vpop.f32.mrb[0].mxu0
    %879 = vmatprep.mubr.bf16.mxu0 0
    %880 = vmatmul.mubr.bf16.gmra.mrb[0].mxu0 %v468
    %v881 = vpop.f32.mrb[0].mxu0
    %v882 = vadd.f32 0.0, %v881
    %v883 = vpop.f32.mrb[0].mxu0
    %v884 = vpop.f32.mrb[0].mxu0
    %v885 = vadd.f32 0.0, %v884
    %v886 = vpop.f32.mrb[0].mxu0
    %887 = vmatprep.mubr.bf16.mxu0 0
    %888 = vmatmul.mubr.bf16.gmra.mrb[0].mxu0 %v469
    %v889 = vpop.f32.mrb[0].mxu0
    %v890 = vadd.f32 0.0, %v889
    %v891 = vpop.f32.mrb[0].mxu0
    %v892 = vpop.f32.mrb[0].mxu0
    %v893 = vadd.f32 0.0, %v892
    %v894 = vpop.f32.mrb[0].mxu0
    %895 = vmatprep.mubr.bf16.mxu0 0
    %896 = vmatmul.mubr.bf16.gmra.mrb[0].mxu0 %v470
    %v897 = vpop.f32.mrb[0].mxu0
    %v898 = vadd.f32 0.0, %v897
    %v899 = vpop.f32.mrb[0].mxu0
    %v900 = vpop.f32.mrb[0].mxu0
    %v901 = vadd.f32 0.0, %v900
    %v902 = vpop.f32.mrb[0].mxu0
    %903 = vmatprep.mubr.bf16.mxu0 0
    %904 = vmatmul.mubr.bf16.gmra.mrb[0].mxu0 %v471
    %v905 = vpop.f32.mrb[0].mxu0
    %v906 = vadd.f32 0.0, %v905
    %v907 = vpop.f32.mrb[0].mxu0
    %v908 = vpop.f32.mrb[0].mxu0
    %v909 = vadd.f32 0.0, %v908
    %v910 = vpop.f32.mrb[0].mxu0
    %911 = vmatprep.mubr.bf16.mxu0 0
    %912 = vmatmul.mubr.bf16.gmra.mrb[0].mxu0 %v472
    %v913 = vpop.f32.mrb[0].mxu0
    %v914 = vadd.f32 0.0, %v913
    %v915 = vpop.f32.mrb[0].mxu0
    %v916 = vpop.f32.mrb[0].mxu0
    %v917 = vadd.f32 0.0, %v916
    %v918 = vpop.f32.mrb[0].mxu0
    %919 = vmatprep.mubr.bf16.mxu0 0
    %920 = vmatmul.mubr.bf16.gmra.mrb[0].mxu0 %v473
    %v921 = vpop.f32.mrb[0].mxu0
    %v922 = vadd.f32 0.0, %v921
    %v923 = vpop.f32.mrb[0].mxu0
    %v924 = vpop.f32.mrb[0].mxu0
    %v925 = vadd.f32 0.0, %v924
    %v926 = vpop.f32.mrb[0].mxu0
    %927 = vmatprep.mubr.bf16.mxu0 0
    %928 = vmatmul.mubr.bf16.gmra.mrb[0].mxu0 %v474
    %v929 = vpop.f32.mrb[0].mxu0
    %v930 = vadd.f32 0.0, %v929
    %v931 = vpop.f32.mrb[0].mxu0
    %v932 = vpop.f32.mrb[0].mxu0
    %v933 = vadd.f32 0.0, %v932
    %v934 = vpop.f32.mrb[0].mxu0
    %935 = vmatprep.mubr.bf16.mxu0 0
    %936 = vmatmul.mubr.bf16.gmra.mrb[0].mxu0 %v475
    %v937 = vpop.f32.mrb[0].mxu0
    %v938 = vadd.f32 0.0, %v937
    %v939 = vpop.f32.mrb[0].mxu0
    %v940 = vpop.f32.mrb[0].mxu0
    %v941 = vadd.f32 0.0, %v940
    %v942 = vpop.f32.mrb[0].mxu0
    %943 = vmatprep.mubr.bf16.mxu0 0
    %944 = vmatmul.mubr.bf16.gmra.mrb[0].mxu0 %v476
    %v945 = vpop.f32.mrb[0].mxu0
    %v946 = vadd.f32 0.0, %v945
    %v947 = vpop.f32.mrb[0].mxu0
    %v948 = vpop.f32.mrb[0].mxu0
    %v949 = vadd.f32 0.0, %v948
    %v950 = vpop.f32.mrb[0].mxu0
    %951 = vmatprep.mubr.bf16.mxu0 0
    %952 = vmatmul.mubr.bf16.gmra.mrb[0].mxu0 %v477
    %v953 = vpop.f32.mrb[0].mxu0
    %v954 = vadd.f32 0.0, %v953
    %v955 = vpop.f32.mrb[0].mxu0
    %v956 = vpop.f32.mrb[0].mxu0
    %v957 = vadd.f32 0.0, %v956
    %v958 = vpop.f32.mrb[0].mxu0
    %959 = vmatprep.mubr.bf16.mxu0 0
    %960 = vmatmul.mubr.bf16.gmra.mrb[0].mxu0 %v478
    %v961 = vpop.f32.mrb[0].mxu0
    %v962 = vadd.f32 0.0, %v961
    %v963 = vpop.f32.mrb[0].mxu0
    %v964 = vpop.f32.mrb[0].mxu0
    %v965 = vadd.f32 0.0, %v964
    %v966 = vpop.f32.mrb[0].mxu0
    %967 = vmatprep.mubr.bf16.mxu0 0
    %968 = vmatmul.mubr.bf16.gmra.mrb[0].mxu0 %v479
    %v969 = vpop.f32.mrb[0].mxu0
    %v970 = vadd.f32 0.0, %v969
    %v971 = vpop.f32.mrb[0].mxu0
    %v972 = vpop.f32.mrb[0].mxu0
    %v973 = vadd.f32 0.0, %v972
    %v974 = vpop.f32.mrb[0].mxu0
    %975 = vmatprep.mubr.bf16.mxu0 0
    %976 = vmatmul.mubr.bf16.gmra.mrb[0].mxu0 %v480
    %v977 = vpop.f32.mrb[0].mxu0
    %v978 = vadd.f32 0.0, %v977
    %v979 = vpop.f32.mrb[0].mxu0
    %v980 = vpop.f32.mrb[0].mxu0
    %v981 = vadd.f32 0.0, %v980
    %v982 = vpop.f32.mrb[0].mxu0
    %983 = vmatprep.mubr.bf16.mxu0 0
    %984 = vmatmul.mubr.bf16.gmra.mrb[0].mxu0 %v481
    %v985 = vpop.f32.mrb[0].mxu0
    %v986 = vadd.f32 0.0, %v985
    %v987 = vpop.f32.mrb[0].mxu0
    %v988 = vpop.f32.mrb[0].mxu0
    %v989 = vadd.f32 0.0, %v988
    %v990 = vpop.f32.mrb[0].mxu0
    %991 = vmatprep.mubr.bf16.mxu0 0
    %992 = vmatmul.mubr.bf16.gmra.mrb[0].mxu0 %v482
    %v993 = vpop.f32.mrb[0].mxu0
    %v994 = vadd.f32 0.0, %v993
    %v995 = vpop.f32.mrb[0].mxu0
    %v996 = vpop.f32.mrb[0].mxu0
    %v997 = vadd.f32 0.0, %v996
    %v998 = vpop.f32.mrb[0].mxu0
    %999 = vmatprep.mubr.bf16.mxu0 0
    %1000 = vmatmul.mubr.bf16.gmra.mrb[0].mxu0 %v483
    %v1001 = vpop.f32.mrb[0].mxu0
    %v1002 = vadd.f32 0.0, %v1001
    %v1003 = vpop.f32.mrb[0].mxu0
    %v1004 = vpop.f32.mrb[0].mxu0
    %v1005 = vadd.f32 0.0, %v1004
    %v1006 = vpop.f32.mrb[0].mxu0
    %1007 = vmatprep.mubr.bf16.mxu0 0
    %1008 = vmatmul.mubr.bf16.gmra.mrb[0].mxu0 %v484
    %v1009 = vpop.f32.mrb[0].mxu0
    %v1010 = vadd.f32 0.0, %v1009
    %v1011 = vpop.f32.mrb[0].mxu0
    %v1012 = vpop.f32.mrb[0].mxu0
    %v1013 = vadd.f32 0.0, %v1012
    %v1014 = vpop.f32.mrb[0].mxu0
    %1015 = vmatprep.mubr.bf16.mxu0 0
    %1016 = vmatmul.mubr.bf16.gmra.mrb[0].mxu0 %v485
    %v1017 = vpop.f32.mrb[0].mxu0
    %v1018 = vadd.f32 0.0, %v1017
    %v1019 = vpop.f32.mrb[0].mxu0
    %v1020 = vpop.f32.mrb[0].mxu0
    %v1021 = vadd.f32 0.0, %v1020
    %v1022 = vpop.f32.mrb[0].mxu0
    %1023 = vmatprep.mubr.bf16.mxu0 0
    %1024 = vmatmul.mubr.bf16.gmra.mrb[0].mxu0 %v486
    %v1025 = vpop.f32.mrb[0].mxu0
    %v1026 = vadd.f32 0.0, %v1025
    %v1027 = vpop.f32.mrb[0].mxu0
    %v1028 = vpop.f32.mrb[0].mxu0
    %v1029 = vadd.f32 0.0, %v1028
    %v1030 = vpop.f32.mrb[0].mxu0
    %1031 = vmatprep.mubr.bf16.mxu0 0
    %1032 = vmatmul.mubr.bf16.gmra.mrb[0].mxu0 %v487
    %v1033 = vpop.f32.mrb[0].mxu0
    %v1034 = vadd.f32 0.0, %v1033
    %v1035 = vpop.f32.mrb[0].mxu0
    %v1036 = vpop.f32.mrb[0].mxu0
    %v1037 = vadd.f32 0.0, %v1036
    %v1038 = vpop.f32.mrb[0].mxu0
    %1039 = vmatprep.mubr.bf16.mxu0 0
    %1040 = vmatmul.mubr.bf16.gmra.mrb[0].mxu0 %v488
    %v1041 = vpop.f32.mrb[0].mxu0
    %v1042 = vadd.f32 0.0, %v1041
    %v1043 = vpop.f32.mrb[0].mxu0
    %v1044 = vpop.f32.mrb[0].mxu0
    %v1045 = vadd.f32 0.0, %v1044
    %v1046 = vpop.f32.mrb[0].mxu0
    %1047 = vmatprep.mubr.bf16.mxu0 0
    %1048 = vmatmul.mubr.bf16.gmra.mrb[0].mxu0 %v489
    %v1049 = vpop.f32.mrb[0].mxu0
    %v1050 = vadd.f32 0.0, %v1049
    %v1051 = vpop.f32.mrb[0].mxu0
    %v1052 = vpop.f32.mrb[0].mxu0
    %v1053 = vadd.f32 0.0, %v1052
    %v1054 = vpop.f32.mrb[0].mxu0
    %1055 = vmatprep.mubr.bf16.mxu0 0
    %1056 = vmatmul.mubr.bf16.gmra.mrb[0].mxu0 %v490
    %v1057 = vpop.f32.mrb[0].mxu0
    %v1058 = vadd.f32 0.0, %v1057
    %v1059 = vpop.f32.mrb[0].mxu0
    %v1060 = vpop.f32.mrb[0].mxu0
    %v1061 = vadd.f32 0.0, %v1060
    %v1062 = vpop.f32.mrb[0].mxu0
    %1063 = vmatprep.mubr.bf16.mxu0 0
    %1064 = vmatmul.mubr.bf16.gmra.mrb[0].mxu0 %v491
    %v1065 = vpop.f32.mrb[0].mxu0
    %v1066 = vadd.f32 0.0, %v1065
    %v1067 = vpop.f32.mrb[0].mxu0
    %v1068 = vpop.f32.mrb[0].mxu0
    %v1069 = vadd.f32 0.0, %v1068
    %v1070 = vpop.f32.mrb[0].mxu0
    %1071 = vmatprep.mubr.bf16.mxu0 0
    %1072 = vmatmul.mubr.bf16.gmra.mrb[0].mxu0 %v492
    %v1073 = vpop.f32.mrb[0].mxu0
    %v1074 = vadd.f32 0.0, %v1073
    %v1075 = vpop.f32.mrb[0].mxu0
    %v1076 = vpop.f32.mrb[0].mxu0
    %v1077 = vadd.f32 0.0, %v1076
    %v1078 = vpop.f32.mrb[0].mxu0
    %1079 = vmatprep.mubr.bf16.mxu0 0
    %1080 = vmatmul.mubr.bf16.gmra.mrb[0].mxu0 %v493
    %v1081 = vpop.f32.mrb[0].mxu0
    %v1082 = vadd.f32 0.0, %v1081
    %v1083 = vpop.f32.mrb[0].mxu0
    %v1084 = vpop.f32.mrb[0].mxu0
    %v1085 = vadd.f32 0.0, %v1084
    %v1086 = vpop.f32.mrb[0].mxu0
    %1087 = vmatprep.mubr.bf16.mxu0 0
    %1088 = vmatmul.mubr.bf16.gmra.mrb[0].mxu0 %v494
    %v1089 = vpop.f32.mrb[0].mxu0
    %v1090 = vadd.f32 0.0, %v1089
    %v1091 = vpop.f32.mrb[0].mxu0
    %v1092 = vpop.f32.mrb[0].mxu0
    %v1093 = vadd.f32 0.0, %v1092
    %v1094 = vpop.f32.mrb[0].mxu0
    %1095 = vmatprep.mubr.bf16.mxu0 0
    %1096 = vmatmul.mubr.bf16.gmra.mrb[0].mxu0 %v495
    %v1097 = vpop.f32.mrb[0].mxu0
    %v1098 = vadd.f32 0.0, %v1097
    %v1099 = vpop.f32.mrb[0].mxu0
    %v1100 = vpop.f32.mrb[0].mxu0
    %v1101 = vadd.f32 0.0, %v1100
    %v1102 = vpop.f32.mrb[0].mxu0
    %1103 = vmatprep.mubr.bf16.mxu0 0
    %1104 = vmatmul.mubr.bf16.gmra.mrb[0].mxu0 %v496
    %v1105 = vpop.f32.mrb[0].mxu0
    %v1106 = vadd.f32 0.0, %v1105
    %v1107 = vpop.f32.mrb[0].mxu0
    %v1108 = vpop.f32.mrb[0].mxu0
    %v1109 = vadd.f32 0.0, %v1108
    %v1110 = vpop.f32.mrb[0].mxu0
    %1111 = vmatprep.mubr.bf16.mxu0 0
    %1112 = vmatmul.mubr.bf16.gmra.mrb[0].mxu0 %v497
    %v1113 = vpop.f32.mrb[0].mxu0
    %v1114 = vadd.f32 0.0, %v1113
    %v1115 = vpop.f32.mrb[0].mxu0
    %v1116 = vpop.f32.mrb[0].mxu0
    %v1117 = vadd.f32 0.0, %v1116
    %v1118 = vpop.f32.mrb[0].mxu0
    %1119 = vmatprep.mubr.bf16.mxu0 0
    %1120 = vmatmul.mubr.bf16.gmra.mrb[0].mxu0 %v498
    %v1121 = vpop.f32.mrb[0].mxu0
    %v1122 = vadd.f32 0.0, %v1121
    %v1123 = vpop.f32.mrb[0].mxu0
    %v1124 = vpop.f32.mrb[0].mxu0
    %v1125 = vadd.f32 0.0, %v1124
    %v1126 = vpop.f32.mrb[0].mxu0
    %1127 = vmatprep.mubr.bf16.mxu0 0
    %1128 = vmatmul.mubr.bf16.gmra.mrb[0].mxu0 %v499
    %v1129 = vpop.f32.mrb[0].mxu0
    %v1130 = vadd.f32 0.0, %v1129
    %v1131 = vpop.f32.mrb[0].mxu0
    %v1132 = vpop.f32.mrb[0].mxu0
    %v1133 = vadd.f32 0.0, %v1132
    %v1134 = vpop.f32.mrb[0].mxu0
    %1135 = vmatprep.mubr.bf16.mxu0 0
    %1136 = vmatmul.mubr.bf16.gmra.mrb[0].mxu0 %v500
    %v1137 = vpop.f32.mrb[0].mxu0
    %v1138 = vadd.f32 0.0, %v1137
    %v1139 = vpop.f32.mrb[0].mxu0
    %v1140 = vpop.f32.mrb[0].mxu0
    %v1141 = vadd.f32 0.0, %v1140
    %v1142 = vpop.f32.mrb[0].mxu0
    %1143 = vmatprep.mubr.bf16.mxu0 0
    %1144 = vmatmul.mubr.bf16.gmra.mrb[0].mxu0 %v501
    %v1145 = vpop.f32.mrb[0].mxu0
    %v1146 = vadd.f32 0.0, %v1145
    %v1147 = vpop.f32.mrb[0].mxu0
    %v1148 = vpop.f32.mrb[0].mxu0
    %v1149 = vadd.f32 0.0, %v1148
    %v1150 = vpop.f32.mrb[0].mxu0
    %1151 = vmatprep.mubr.bf16.mxu0 0
    %1152 = vmatmul.mubr.bf16.gmra.mrb[0].mxu0 %v502
    %v1153 = vpop.f32.mrb[0].mxu0
    %v1154 = vadd.f32 0.0, %v1153
    %v1155 = vpop.f32.mrb[0].mxu0
    %v1156 = vpop.f32.mrb[0].mxu0
    %v1157 = vadd.f32 0.0, %v1156
    %v1158 = vpop.f32.mrb[0].mxu0
    %1159 = vdwg.mxu0
    %v1160 = vld [vmem:[%s0] sm:$0xff]
    %v1162 = vcombine.high %v1160, %v1160
    %v1164 = vunpack.c.l.s4 1966171168
    %v1165 = vunpack.c.0.s8 %v1164
    %v1166 = vlaneseq
    %v1167 = vshrl.u32 %v1166, 7
    %v1168 = vsub.s32 %v1165, %v1167
    %v1169 = vrot.slane %v1160, %v1168
    %v1171 = vunpack.c.l.s4 1966171168
    %v1172 = vunpack.c.0.s8 %v1171
    %v1173 = vlaneseq
    %v1174 = vshrl.u32 %v1173, 7
    %v1175 = vsub.s32 %v1172, %v1174
    %v1176 = vrot.slane %v1162, %v1175
    %v1177 = vcombine.high %v1169, %v1169
    %v1178 = vcombine.high %v1176, %v1176
    %v1180 = vunpack.c.l.s4 1966171168
    %v1181 = vunpack.c.0.s8 %v1180
    %v1182 = vlaneseq
    %v1183 = vshrl.u32 %v1182, 7
    %v1184 = vsub.s32 %v1181, %v1183
    %v1185 = vrot.slane %v1169, %v1184
    %v1187 = vunpack.c.l.s4 1966171168
    %v1188 = vunpack.c.0.s8 %v1187
    %v1189 = vlaneseq
    %v1190 = vshrl.u32 %v1189, 7
    %v1191 = vsub.s32 %v1188, %v1190
    %v1192 = vrot.slane %v1176, %v1191
    %v1194 = vunpack.c.l.s4 1966171168
    %v1195 = vunpack.c.0.s8 %v1194
    %v1196 = vlaneseq
    %v1197 = vshrl.u32 %v1196, 7
    %v1198 = vsub.s32 %v1195, %v1197
    %v1199 = vrot.slane %v1177, %v1198
    %v1201 = vunpack.c.l.s4 1966171168
    %v1202 = vunpack.c.0.s8 %v1201
    %v1203 = vlaneseq
    %v1204 = vshrl.u32 %v1203, 7
    %v1205 = vsub.s32 %v1202, %v1204
    %v1206 = vrot.slane %v1178, %v1205
    %v1207 = vcombine.high %v1185, %v1185
    %v1208 = vcombine.high %v1192, %v1192
    %v1209 = vcombine.high %v1199, %v1199
    %v1210 = vcombine.high %v1206, %v1206
    %v1211 = vlaneseq
    %v1212 = vshrl.u32 %v1211, 7
    %v1213 = vsub.s32 0, %v1212
    %v1214 = vrot.slane %v1185, %v1213
    %v1215 = vlaneseq
    %v1216 = vshrl.u32 %v1215, 7
    %v1217 = vsub.s32 0, %v1216
    %v1218 = vrot.slane %v1199, %v1217
    %v1219 = vlaneseq
    %v1220 = vshrl.u32 %v1219, 7
    %v1221 = vsub.s32 0, %v1220
    %v1222 = vrot.slane %v1207, %v1221
    %v1223 = vlaneseq
    %v1224 = vshrl.u32 %v1223, 7
    %v1225 = vsub.s32 0, %v1224
    %v1226 = vrot.slane %v1209, %v1225
    %v1227 = vlaneseq
    %v1228 = vshrl.u32 %v1227, 7
    %v1229 = vsub.s32 0, %v1228
    %v1230 = vrot.slane %v1192, %v1229
    %v1231 = vlaneseq
    %v1232 = vshrl.u32 %v1231, 7
    %v1233 = vsub.s32 0, %v1232
    %v1234 = vrot.slane %v1206, %v1233
    %v1235 = vlaneseq
    %v1236 = vshrl.u32 %v1235, 7
    %v1237 = vsub.s32 0, %v1236
    %v1238 = vrot.slane %v1208, %v1237
    %v1239 = vlaneseq
    %v1240 = vshrl.u32 %v1239, 7
    %v1241 = vsub.s32 0, %v1240
    %v1242 = vrot.slane %v1210, %v1241
    %v1251 = vadd.f32 %v650, %v1214
    %v1252 = vadd.f32 %v653, %v1214
    %v1253 = vadd.f32 %v658, %v1214
    %v1254 = vadd.f32 %v661, %v1214
    %v1255 = vadd.f32 %v666, %v1214
    %v1256 = vadd.f32 %v669, %v1214
    %v1257 = vadd.f32 %v674, %v1214
    %v1258 = vadd.f32 %v677, %v1214
    %v1259 = vadd.f32 %v682, %v1214
    %v1260 = vadd.f32 %v685, %v1214
    %v1261 = vadd.f32 %v690, %v1214
    %v1262 = vadd.f32 %v693, %v1214
    %v1263 = vadd.f32 %v698, %v1214
    %v1264 = vadd.f32 %v701, %v1214
    %v1265 = vadd.f32 %v706, %v1214
    %v1266 = vadd.f32 %v709, %v1214
    %v1267 = vadd.f32 %v714, %v1218
    %v1268 = vadd.f32 %v717, %v1218
    %v1269 = vadd.f32 %v722, %v1218
    %v1270 = vadd.f32 %v725, %v1218
    %v1271 = vadd.f32 %v730, %v1218
    %v1272 = vadd.f32 %v733, %v1218
    %v1273 = vadd.f32 %v738, %v1218
    %v1274 = vadd.f32 %v741, %v1218
    %v1275 = vadd.f32 %v746, %v1218
    %v1276 = vadd.f32 %v749, %v1218
    %v1277 = vadd.f32 %v754, %v1218
    %v1278 = vadd.f32 %v757, %v1218
    %v1279 = vadd.f32 %v762, %v1218
    %v1280 = vadd.f32 %v765, %v1218
    %v1281 = vadd.f32 %v770, %v1218
    %v1282 = vadd.f32 %v773, %v1218
    %v1283 = vadd.f32 %v778, %v1222
    %v1284 = vadd.f32 %v781, %v1222
    %v1285 = vadd.f32 %v786, %v1222
    %v1286 = vadd.f32 %v789, %v1222
    %v1287 = vadd.f32 %v794, %v1222
    %v1288 = vadd.f32 %v797, %v1222
    %v1289 = vadd.f32 %v802, %v1222
    %v1290 = vadd.f32 %v805, %v1222
    %v1291 = vadd.f32 %v810, %v1222
    %v1292 = vadd.f32 %v813, %v1222
    %v1293 = vadd.f32 %v818, %v1222
    %v1294 = vadd.f32 %v821, %v1222
    %v1295 = vadd.f32 %v826, %v1222
    %v1296 = vadd.f32 %v829, %v1222
    %v1297 = vadd.f32 %v834, %v1222
    %v1298 = vadd.f32 %v837, %v1222
    %v1299 = vadd.f32 %v842, %v1226
    %v1300 = vadd.f32 %v845, %v1226
    %v1301 = vadd.f32 %v850, %v1226
    %v1302 = vadd.f32 %v853, %v1226
    %v1303 = vadd.f32 %v858, %v1226
    %v1304 = vadd.f32 %v861, %v1226
    %v1305 = vadd.f32 %v866, %v1226
    %v1306 = vadd.f32 %v869, %v1226
    %v1307 = vadd.f32 %v874, %v1226
    %v1308 = vadd.f32 %v877, %v1226
    %v1309 = vadd.f32 %v882, %v1226
    %v1310 = vadd.f32 %v885, %v1226
    %v1311 = vadd.f32 %v890, %v1226
    %v1312 = vadd.f32 %v893, %v1226
    %v1313 = vadd.f32 %v898, %v1226
    %v1314 = vadd.f32 %v901, %v1226
    %v1315 = vadd.f32 %v906, %v1230
    %v1316 = vadd.f32 %v909, %v1230
    %v1317 = vadd.f32 %v914, %v1230
    %v1318 = vadd.f32 %v917, %v1230
    %v1319 = vadd.f32 %v922, %v1230
    %v1320 = vadd.f32 %v925, %v1230
    %v1321 = vadd.f32 %v930, %v1230
    %v1322 = vadd.f32 %v933, %v1230
    %v1323 = vadd.f32 %v938, %v1230
    %v1324 = vadd.f32 %v941, %v1230
    %v1325 = vadd.f32 %v946, %v1230
    %v1326 = vadd.f32 %v949, %v1230
    %v1327 = vadd.f32 %v954, %v1230
    %v1328 = vadd.f32 %v957, %v1230
    %v1329 = vadd.f32 %v962, %v1230
    %v1330 = vadd.f32 %v965, %v1230
    %v1331 = vadd.f32 %v970, %v1234
    %v1332 = vadd.f32 %v973, %v1234
    %v1333 = vadd.f32 %v978, %v1234
    %v1334 = vadd.f32 %v981, %v1234
    %v1335 = vadd.f32 %v986, %v1234
    %v1336 = vadd.f32 %v989, %v1234
    %v1337 = vadd.f32 %v994, %v1234
    %v1338 = vadd.f32 %v997, %v1234
    %v1339 = vadd.f32 %v1002, %v1234
    %v1340 = vadd.f32 %v1005, %v1234
    %v1341 = vadd.f32 %v1010, %v1234
    %v1342 = vadd.f32 %v1013, %v1234
    %v1343 = vadd.f32 %v1018, %v1234
    %v1344 = vadd.f32 %v1021, %v1234
    %v1345 = vadd.f32 %v1026, %v1234
    %v1346 = vadd.f32 %v1029, %v1234
    %v1347 = vadd.f32 %v1034, %v1238
    %v1348 = vadd.f32 %v1037, %v1238
    %v1349 = vadd.f32 %v1042, %v1238
    %v1350 = vadd.f32 %v1045, %v1238
    %v1351 = vadd.f32 %v1050, %v1238
    %v1352 = vadd.f32 %v1053, %v1238
    %v1353 = vadd.f32 %v1058, %v1238
    %v1354 = vadd.f32 %v1061, %v1238
    %v1355 = vadd.f32 %v1066, %v1238
    %v1356 = vadd.f32 %v1069, %v1238
    %v1357 = vadd.f32 %v1074, %v1238
    %v1358 = vadd.f32 %v1077, %v1238
    %v1359 = vadd.f32 %v1082, %v1238
    %v1360 = vadd.f32 %v1085, %v1238
    %v1361 = vadd.f32 %v1090, %v1238
    %v1362 = vadd.f32 %v1093, %v1238
    %v1363 = vadd.f32 %v1098, %v1242
    %v1364 = vadd.f32 %v1101, %v1242
    %v1365 = vadd.f32 %v1106, %v1242
    %v1366 = vadd.f32 %v1109, %v1242
    %v1367 = vadd.f32 %v1114, %v1242
    %v1368 = vadd.f32 %v1117, %v1242
    %v1369 = vadd.f32 %v1122, %v1242
    %v1370 = vadd.f32 %v1125, %v1242
    %v1371 = vadd.f32 %v1130, %v1242
    %v1372 = vadd.f32 %v1133, %v1242
    %v1373 = vadd.f32 %v1138, %v1242
    %v1374 = vadd.f32 %v1141, %v1242
    %v1375 = vadd.f32 %v1146, %v1242
    %v1376 = vadd.f32 %v1149, %v1242
    %v1377 = vadd.f32 %v1154, %v1242
    %v1378 = vadd.f32 %v1157, %v1242
    %v1379 = vpack.c.bf16 %v1252, %v1251
    %v1380 = vpack.c.bf16 %v1254, %v1253
    %v1381 = vpack.c.bf16 %v1256, %v1255
    %v1382 = vpack.c.bf16 %v1258, %v1257
    %v1383 = vpack.c.bf16 %v1260, %v1259
    %v1384 = vpack.c.bf16 %v1262, %v1261
    %v1385 = vpack.c.bf16 %v1264, %v1263
    %v1386 = vpack.c.bf16 %v1266, %v1265
    %v1387 = vpack.c.bf16 %v1268, %v1267
    %v1388 = vpack.c.bf16 %v1270, %v1269
    %v1389 = vpack.c.bf16 %v1272, %v1271
    %v1390 = vpack.c.bf16 %v1274, %v1273
    %v1391 = vpack.c.bf16 %v1276, %v1275
    %v1392 = vpack.c.bf16 %v1278, %v1277
    %v1393 = vpack.c.bf16 %v1280, %v1279
    %v1394 = vpack.c.bf16 %v1282, %v1281
    %v1395 = vpack.c.bf16 %v1284, %v1283
    %v1396 = vpack.c.bf16 %v1286, %v1285
    %v1397 = vpack.c.bf16 %v1288, %v1287
    %v1398 = vpack.c.bf16 %v1290, %v1289
    %v1399 = vpack.c.bf16 %v1292, %v1291
    %v1400 = vpack.c.bf16 %v1294, %v1293
    %v1401 = vpack.c.bf16 %v1296, %v1295
    %v1402 = vpack.c.bf16 %v1298, %v1297
    %v1403 = vpack.c.bf16 %v1300, %v1299
    %v1404 = vpack.c.bf16 %v1302, %v1301
    %v1405 = vpack.c.bf16 %v1304, %v1303
    %v1406 = vpack.c.bf16 %v1306, %v1305
    %v1407 = vpack.c.bf16 %v1308, %v1307
    %v1408 = vpack.c.bf16 %v1310, %v1309
    %v1409 = vpack.c.bf16 %v1312, %v1311
    %v1410 = vpack.c.bf16 %v1314, %v1313
    %v1411 = vpack.c.bf16 %v1316, %v1315
    %v1412 = vpack.c.bf16 %v1318, %v1317
    %v1413 = vpack.c.bf16 %v1320, %v1319
    %v1414 = vpack.c.bf16 %v1322, %v1321
    %v1415 = vpack.c.bf16 %v1324, %v1323
    %v1416 = vpack.c.bf16 %v1326, %v1325
    %v1417 = vpack.c.bf16 %v1328, %v1327
    %v1418 = vpack.c.bf16 %v1330, %v1329
    %v1419 = vpack.c.bf16 %v1332, %v1331
    %v1420 = vpack.c.bf16 %v1334, %v1333
    %v1421 = vpack.c.bf16 %v1336, %v1335
    %v1422 = vpack.c.bf16 %v1338, %v1337
    %v1423 = vpack.c.bf16 %v1340, %v1339
    %v1424 = vpack.c.bf16 %v1342, %v1341
    %v1425 = vpack.c.bf16 %v1344, %v1343
    %v1426 = vpack.c.bf16 %v1346, %v1345
    %v1427 = vpack.c.bf16 %v1348, %v1347
    %v1428 = vpack.c.bf16 %v1350, %v1349
    %v1429 = vpack.c.bf16 %v1352, %v1351
    %v1430 = vpack.c.bf16 %v1354, %v1353
    %v1431 = vpack.c.bf16 %v1356, %v1355
    %v1432 = vpack.c.bf16 %v1358, %v1357
    %v1433 = vpack.c.bf16 %v1360, %v1359
    %v1434 = vpack.c.bf16 %v1362, %v1361
    %v1435 = vpack.c.bf16 %v1364, %v1363
    %v1436 = vpack.c.bf16 %v1366, %v1365
    %v1437 = vpack.c.bf16 %v1368, %v1367
    %v1438 = vpack.c.bf16 %v1370, %v1369
    %v1439 = vpack.c.bf16 %v1372, %v1371
    %v1440 = vpack.c.bf16 %v1374, %v1373
    %v1441 = vpack.c.bf16 %v1376, %v1375
    %v1442 = vpack.c.bf16 %v1378, %v1377
    %v1443 = vtanh.bf16.pop %v1379
    %v1444 = vtanh.bf16.pop %v1380
    %v1445 = vtanh.bf16.pop %v1381
    %v1446 = vtanh.bf16.pop %v1382
    %v1447 = vtanh.bf16.pop %v1383
    %v1448 = vtanh.bf16.pop %v1384
    %v1449 = vtanh.bf16.pop %v1385
    %v1450 = vtanh.bf16.pop %v1386
    %v1451 = vtanh.bf16.pop %v1387
    %v1452 = vtanh.bf16.pop %v1388
    %v1453 = vtanh.bf16.pop %v1389
    %v1454 = vtanh.bf16.pop %v1390
    %v1455 = vtanh.bf16.pop %v1391
    %v1456 = vtanh.bf16.pop %v1392
    %v1457 = vtanh.bf16.pop %v1393
    %v1458 = vtanh.bf16.pop %v1394
    %v1459 = vtanh.bf16.pop %v1395
    %v1460 = vtanh.bf16.pop %v1396
    %v1461 = vtanh.bf16.pop %v1397
    %v1462 = vtanh.bf16.pop %v1398
    %v1463 = vtanh.bf16.pop %v1399
    %v1464 = vtanh.bf16.pop %v1400
    %v1465 = vtanh.bf16.pop %v1401
    %v1466 = vtanh.bf16.pop %v1402
    %v1467 = vtanh.bf16.pop %v1403
    %v1468 = vtanh.bf16.pop %v1404
    %v1469 = vtanh.bf16.pop %v1405
    %v1470 = vtanh.bf16.pop %v1406
    %v1471 = vtanh.bf16.pop %v1407
    %v1472 = vtanh.bf16.pop %v1408
    %v1473 = vtanh.bf16.pop %v1409
    %v1474 = vtanh.bf16.pop %v1410
    %v1475 = vtanh.bf16.pop %v1411
    %v1476 = vtanh.bf16.pop %v1412
    %v1477 = vtanh.bf16.pop %v1413
    %v1478 = vtanh.bf16.pop %v1414
    %v1479 = vtanh.bf16.pop %v1415
    %v1480 = vtanh.bf16.pop %v1416
    %v1481 = vtanh.bf16.pop %v1417
    %v1482 = vtanh.bf16.pop %v1418
    %v1483 = vtanh.bf16.pop %v1419
    %v1484 = vtanh.bf16.pop %v1420
    %v1485 = vtanh.bf16.pop %v1421
    %v1486 = vtanh.bf16.pop %v1422
    %v1487 = vtanh.bf16.pop %v1423
    %v1488 = vtanh.bf16.pop %v1424
    %v1489 = vtanh.bf16.pop %v1425
    %v1490 = vtanh.bf16.pop %v1426
    %v1491 = vtanh.bf16.pop %v1427
    %v1492 = vtanh.bf16.pop %v1428
    %v1493 = vtanh.bf16.pop %v1429
    %v1494 = vtanh.bf16.pop %v1430
    %v1495 = vtanh.bf16.pop %v1431
    %v1496 = vtanh.bf16.pop %v1432
    %v1497 = vtanh.bf16.pop %v1433
    %v1498 = vtanh.bf16.pop %v1434
    %v1499 = vtanh.bf16.pop %v1435
    %v1500 = vtanh.bf16.pop %v1436
    %v1501 = vtanh.bf16.pop %v1437
    %v1502 = vtanh.bf16.pop %v1438
    %v1503 = vtanh.bf16.pop %v1439
    %v1504 = vtanh.bf16.pop %v1440
    %v1505 = vtanh.bf16.pop %v1441
    %v1506 = vtanh.bf16.pop %v1442
    %v1507 = vld [vmem:[%s4] sm:$0x1]
    %v1509 = vpack.i.b16 %v1507, %v1507
    %v1511 = vlaneseq
    %v1512 = vshrl.u32 %v1511, 7
    %v1513 = vsub.s32 0, %v1512
    %v1514 = vrot.slane %v1509, %v1513
    %v1515 = vmul.bf16 %v1443, %v1514
    %v1516 = vmul.bf16 %v1444, %v1514
    %v1517 = vmul.bf16 %v1445, %v1514
    %v1518 = vmul.bf16 %v1446, %v1514
    %v1519 = vmul.bf16 %v1447, %v1514
    %v1520 = vmul.bf16 %v1448, %v1514
    %v1521 = vmul.bf16 %v1449, %v1514
    %v1522 = vmul.bf16 %v1450, %v1514
    %v1523 = vmul.bf16 %v1451, %v1514
    %v1524 = vmul.bf16 %v1452, %v1514
    %v1525 = vmul.bf16 %v1453, %v1514
    %v1526 = vmul.bf16 %v1454, %v1514
    %v1527 = vmul.bf16 %v1455, %v1514
    %v1528 = vmul.bf16 %v1456, %v1514
    %v1529 = vmul.bf16 %v1457, %v1514
    %v1530 = vmul.bf16 %v1458, %v1514
    %v1531 = vmul.bf16 %v1459, %v1514
    %v1532 = vmul.bf16 %v1460, %v1514
    %v1533 = vmul.bf16 %v1461, %v1514
    %v1534 = vmul.bf16 %v1462, %v1514
    %v1535 = vmul.bf16 %v1463, %v1514
    %v1536 = vmul.bf16 %v1464, %v1514
    %v1537 = vmul.bf16 %v1465, %v1514
    %v1538 = vmul.bf16 %v1466, %v1514
    %v1539 = vmul.bf16 %v1467, %v1514
    %v1540 = vmul.bf16 %v1468, %v1514
    %v1541 = vmul.bf16 %v1469, %v1514
    %v1542 = vmul.bf16 %v1470, %v1514
    %v1543 = vmul.bf16 %v1471, %v1514
    %v1544 = vmul.bf16 %v1472, %v1514
    %v1545 = vmul.bf16 %v1473, %v1514
    %v1546 = vmul.bf16 %v1474, %v1514
    %v1547 = vmul.bf16 %v1475, %v1514
    %v1548 = vmul.bf16 %v1476, %v1514
    %v1549 = vmul.bf16 %v1477, %v1514
    %v1550 = vmul.bf16 %v1478, %v1514
    %v1551 = vmul.bf16 %v1479, %v1514
    %v1552 = vmul.bf16 %v1480, %v1514
    %v1553 = vmul.bf16 %v1481, %v1514
    %v1554 = vmul.bf16 %v1482, %v1514
    %v1555 = vmul.bf16 %v1483, %v1514
    %v1556 = vmul.bf16 %v1484, %v1514
    %v1557 = vmul.bf16 %v1485, %v1514
    %v1558 = vmul.bf16 %v1486, %v1514
    %v1559 = vmul.bf16 %v1487, %v1514
    %v1560 = vmul.bf16 %v1488, %v1514
    %v1561 = vmul.bf16 %v1489, %v1514
    %v1562 = vmul.bf16 %v1490, %v1514
    %v1563 = vmul.bf16 %v1491, %v1514
    %v1564 = vmul.bf16 %v1492, %v1514
    %v1565 = vmul.bf16 %v1493, %v1514
    %v1566 = vmul.bf16 %v1494, %v1514
    %v1567 = vmul.bf16 %v1495, %v1514
    %v1568 = vmul.bf16 %v1496, %v1514
    %v1569 = vmul.bf16 %v1497, %v1514
    %v1570 = vmul.bf16 %v1498, %v1514
    %v1571 = vmul.bf16 %v1499, %v1514
    %v1572 = vmul.bf16 %v1500, %v1514
    %v1573 = vmul.bf16 %v1501, %v1514
    %v1574 = vmul.bf16 %v1502, %v1514
    %v1575 = vmul.bf16 %v1503, %v1514
    %v1576 = vmul.bf16 %v1504, %v1514
    %v1577 = vmul.bf16 %v1505, %v1514
    %v1578 = vmul.bf16 %v1506, %v1514
    %v1579 = vunpack.c.l.bf16 %v1515
    %v1580 = vunpack.c.h.bf16 %v1515
    %v1581 = vunpack.c.l.bf16 %v1516
    %v1582 = vunpack.c.h.bf16 %v1516
    %v1583 = vunpack.c.l.bf16 %v1517
    %v1584 = vunpack.c.h.bf16 %v1517
    %v1585 = vunpack.c.l.bf16 %v1518
    %v1586 = vunpack.c.h.bf16 %v1518
    %v1587 = vunpack.c.l.bf16 %v1519
    %v1588 = vunpack.c.h.bf16 %v1519
    %v1589 = vunpack.c.l.bf16 %v1520
    %v1590 = vunpack.c.h.bf16 %v1520
    %v1591 = vunpack.c.l.bf16 %v1521
    %v1592 = vunpack.c.h.bf16 %v1521
    %v1593 = vunpack.c.l.bf16 %v1522
    %v1594 = vunpack.c.h.bf16 %v1522
    %v1595 = vunpack.c.l.bf16 %v1523
    %v1596 = vunpack.c.h.bf16 %v1523
    %v1597 = vunpack.c.l.bf16 %v1524
    %v1598 = vunpack.c.h.bf16 %v1524
    %v1599 = vunpack.c.l.bf16 %v1525
    %v1600 = vunpack.c.h.bf16 %v1525
    %v1601 = vunpack.c.l.bf16 %v1526
    %v1602 = vunpack.c.h.bf16 %v1526
    %v1603 = vunpack.c.l.bf16 %v1527
    %v1604 = vunpack.c.h.bf16 %v1527
    %v1605 = vunpack.c.l.bf16 %v1528
    %v1606 = vunpack.c.h.bf16 %v1528
    %v1607 = vunpack.c.l.bf16 %v1529
    %v1608 = vunpack.c.h.bf16 %v1529
    %v1609 = vunpack.c.l.bf16 %v1530
    %v1610 = vunpack.c.h.bf16 %v1530
    %v1611 = vunpack.c.l.bf16 %v1531
    %v1612 = vunpack.c.h.bf16 %v1531
    %v1613 = vunpack.c.l.bf16 %v1532
    %v1614 = vunpack.c.h.bf16 %v1532
    %v1615 = vunpack.c.l.bf16 %v1533
    %v1616 = vunpack.c.h.bf16 %v1533
    %v1617 = vunpack.c.l.bf16 %v1534
    %v1618 = vunpack.c.h.bf16 %v1534
    %v1619 = vunpack.c.l.bf16 %v1535
    %v1620 = vunpack.c.h.bf16 %v1535
    %v1621 = vunpack.c.l.bf16 %v1536
    %v1622 = vunpack.c.h.bf16 %v1536
    %v1623 = vunpack.c.l.bf16 %v1537
    %v1624 = vunpack.c.h.bf16 %v1537
    %v1625 = vunpack.c.l.bf16 %v1538
    %v1626 = vunpack.c.h.bf16 %v1538
    %v1627 = vunpack.c.l.bf16 %v1539
    %v1628 = vunpack.c.h.bf16 %v1539
    %v1629 = vunpack.c.l.bf16 %v1540
    %v1630 = vunpack.c.h.bf16 %v1540
    %v1631 = vunpack.c.l.bf16 %v1541
    %v1632 = vunpack.c.h.bf16 %v1541
    %v1633 = vunpack.c.l.bf16 %v1542
    %v1634 = vunpack.c.h.bf16 %v1542
    %v1635 = vunpack.c.l.bf16 %v1543
    %v1636 = vunpack.c.h.bf16 %v1543
    %v1637 = vunpack.c.l.bf16 %v1544
    %v1638 = vunpack.c.h.bf16 %v1544
    %v1639 = vunpack.c.l.bf16 %v1545
    %v1640 = vunpack.c.h.bf16 %v1545
    %v1641 = vunpack.c.l.bf16 %v1546
    %v1642 = vunpack.c.h.bf16 %v1546
    %v1643 = vunpack.c.l.bf16 %v1547
    %v1644 = vunpack.c.h.bf16 %v1547
    %v1645 = vunpack.c.l.bf16 %v1548
    %v1646 = vunpack.c.h.bf16 %v1548
    %v1647 = vunpack.c.l.bf16 %v1549
    %v1648 = vunpack.c.h.bf16 %v1549
    %v1649 = vunpack.c.l.bf16 %v1550
    %v1650 = vunpack.c.h.bf16 %v1550
    %v1651 = vunpack.c.l.bf16 %v1551
    %v1652 = vunpack.c.h.bf16 %v1551
    %v1653 = vunpack.c.l.bf16 %v1552
    %v1654 = vunpack.c.h.bf16 %v1552
    %v1655 = vunpack.c.l.bf16 %v1553
    %v1656 = vunpack.c.h.bf16 %v1553
    %v1657 = vunpack.c.l.bf16 %v1554
    %v1658 = vunpack.c.h.bf16 %v1554
    %v1659 = vunpack.c.l.bf16 %v1555
    %v1660 = vunpack.c.h.bf16 %v1555
    %v1661 = vunpack.c.l.bf16 %v1556
    %v1662 = vunpack.c.h.bf16 %v1556
    %v1663 = vunpack.c.l.bf16 %v1557
    %v1664 = vunpack.c.h.bf16 %v1557
    %v1665 = vunpack.c.l.bf16 %v1558
    %v1666 = vunpack.c.h.bf16 %v1558
    %v1667 = vunpack.c.l.bf16 %v1559
    %v1668 = vunpack.c.h.bf16 %v1559
    %v1669 = vunpack.c.l.bf16 %v1560
    %v1670 = vunpack.c.h.bf16 %v1560
    %v1671 = vunpack.c.l.bf16 %v1561
    %v1672 = vunpack.c.h.bf16 %v1561
    %v1673 = vunpack.c.l.bf16 %v1562
    %v1674 = vunpack.c.h.bf16 %v1562
    %v1675 = vunpack.c.l.bf16 %v1563
    %v1676 = vunpack.c.h.bf16 %v1563
    %v1677 = vunpack.c.l.bf16 %v1564
    %v1678 = vunpack.c.h.bf16 %v1564
    %v1679 = vunpack.c.l.bf16 %v1565
    %v1680 = vunpack.c.h.bf16 %v1565
    %v1681 = vunpack.c.l.bf16 %v1566
    %v1682 = vunpack.c.h.bf16 %v1566
    %v1683 = vunpack.c.l.bf16 %v1567
    %v1684 = vunpack.c.h.bf16 %v1567
    %v1685 = vunpack.c.l.bf16 %v1568
    %v1686 = vunpack.c.h.bf16 %v1568
    %v1687 = vunpack.c.l.bf16 %v1569
    %v1688 = vunpack.c.h.bf16 %v1569
    %v1689 = vunpack.c.l.bf16 %v1570
    %v1690 = vunpack.c.h.bf16 %v1570
    %v1691 = vunpack.c.l.bf16 %v1571
    %v1692 = vunpack.c.h.bf16 %v1571
    %v1693 = vunpack.c.l.bf16 %v1572
    %v1694 = vunpack.c.h.bf16 %v1572
    %v1695 = vunpack.c.l.bf16 %v1573
    %v1696 = vunpack.c.h.bf16 %v1573
    %v1697 = vunpack.c.l.bf16 %v1574
    %v1698 = vunpack.c.h.bf16 %v1574
    %v1699 = vunpack.c.l.bf16 %v1575
    %v1700 = vunpack.c.h.bf16 %v1575
    %v1701 = vunpack.c.l.bf16 %v1576
    %v1702 = vunpack.c.h.bf16 %v1576
    %v1703 = vunpack.c.l.bf16 %v1577
    %v1704 = vunpack.c.h.bf16 %v1577
    %v1705 = vunpack.c.l.bf16 %v1578
    %v1706 = vunpack.c.h.bf16 %v1578
    %vm1707 = vcmask 261120
    %v1708 = vsel %vm1707, %v1579, 0.0
    %1709 = vadd.xlane.f32.xlu0 %v1708
    %v1710 = vpop.xlane.xlu0 %1709
    %v1711 = vsel %vm1707, %v1580, 0.0
    %1712 = vadd.xlane.f32.xlu0 %v1711
    %v1713 = vpop.xlane.xlu0 %1712
    %v1714 = vsel %vm1707, %v1581, 0.0
    %1715 = vadd.xlane.f32.xlu0 %v1714
    %v1716 = vpop.xlane.xlu0 %1715
    %v1717 = vsel %vm1707, %v1582, 0.0
    %1718 = vadd.xlane.f32.xlu0 %v1717
    %v1719 = vpop.xlane.xlu0 %1718
    %v1720 = vsel %vm1707, %v1583, 0.0
    %1721 = vadd.xlane.f32.xlu0 %v1720
    %v1722 = vpop.xlane.xlu0 %1721
    %v1723 = vsel %vm1707, %v1584, 0.0
    %1724 = vadd.xlane.f32.xlu0 %v1723
    %v1725 = vpop.xlane.xlu0 %1724
    %v1726 = vsel %vm1707, %v1585, 0.0
    %1727 = vadd.xlane.f32.xlu0 %v1726
    %v1728 = vpop.xlane.xlu0 %1727
    %v1729 = vsel %vm1707, %v1586, 0.0
    %1730 = vadd.xlane.f32.xlu0 %v1729
    %v1731 = vpop.xlane.xlu0 %1730
    %v1732 = vsel %vm1707, %v1587, 0.0
    %1733 = vadd.xlane.f32.xlu0 %v1732
    %v1734 = vpop.xlane.xlu0 %1733
    %v1735 = vsel %vm1707, %v1588, 0.0
    %1736 = vadd.xlane.f32.xlu0 %v1735
    %v1737 = vpop.xlane.xlu0 %1736
    %v1738 = vsel %vm1707, %v1589, 0.0
    %1739 = vadd.xlane.f32.xlu0 %v1738
    %v1740 = vpop.xlane.xlu0 %1739
    %v1741 = vsel %vm1707, %v1590, 0.0
    %1742 = vadd.xlane.f32.xlu0 %v1741
    %v1743 = vpop.xlane.xlu0 %1742
    %v1744 = vsel %vm1707, %v1591, 0.0
    %1745 = vadd.xlane.f32.xlu0 %v1744
    %v1746 = vpop.xlane.xlu0 %1745
    %v1747 = vsel %vm1707, %v1592, 0.0
    %1748 = vadd.xlane.f32.xlu0 %v1747
    %v1749 = vpop.xlane.xlu0 %1748
    %v1750 = vsel %vm1707, %v1593, 0.0
    %1751 = vadd.xlane.f32.xlu0 %v1750
    %v1752 = vpop.xlane.xlu0 %1751
    %v1753 = vsel %vm1707, %v1594, 0.0
    %1754 = vadd.xlane.f32.xlu0 %v1753
    %v1755 = vpop.xlane.xlu0 %1754
    %v1756 = vsel %vm1707, %v1595, 0.0
    %1757 = vadd.xlane.f32.xlu0 %v1756
    %v1758 = vpop.xlane.xlu0 %1757
    %v1759 = vsel %vm1707, %v1596, 0.0
    %1760 = vadd.xlane.f32.xlu0 %v1759
    %v1761 = vpop.xlane.xlu0 %1760
    %v1762 = vsel %vm1707, %v1597, 0.0
    %1763 = vadd.xlane.f32.xlu0 %v1762
    %v1764 = vpop.xlane.xlu0 %1763
    %v1765 = vsel %vm1707, %v1598, 0.0
    %1766 = vadd.xlane.f32.xlu0 %v1765
    %v1767 = vpop.xlane.xlu0 %1766
    %v1768 = vsel %vm1707, %v1599, 0.0
    %1769 = vadd.xlane.f32.xlu0 %v1768
    %v1770 = vpop.xlane.xlu0 %1769
    %v1771 = vsel %vm1707, %v1600, 0.0
    %1772 = vadd.xlane.f32.xlu0 %v1771
    %v1773 = vpop.xlane.xlu0 %1772
    %v1774 = vsel %vm1707, %v1601, 0.0
    %1775 = vadd.xlane.f32.xlu0 %v1774
    %v1776 = vpop.xlane.xlu0 %1775
    %v1777 = vsel %vm1707, %v1602, 0.0
    %1778 = vadd.xlane.f32.xlu0 %v1777
    %v1779 = vpop.xlane.xlu0 %1778
    %v1780 = vsel %vm1707, %v1603, 0.0
    %1781 = vadd.xlane.f32.xlu0 %v1780
    %v1782 = vpop.xlane.xlu0 %1781
    %v1783 = vsel %vm1707, %v1604, 0.0
    %1784 = vadd.xlane.f32.xlu0 %v1783
    %v1785 = vpop.xlane.xlu0 %1784
    %v1786 = vsel %vm1707, %v1605, 0.0
    %1787 = vadd.xlane.f32.xlu0 %v1786
    %v1788 = vpop.xlane.xlu0 %1787
    %v1789 = vsel %vm1707, %v1606, 0.0
    %1790 = vadd.xlane.f32.xlu0 %v1789
    %v1791 = vpop.xlane.xlu0 %1790
    %v1792 = vsel %vm1707, %v1607, 0.0
    %1793 = vadd.xlane.f32.xlu0 %v1792
    %v1794 = vpop.xlane.xlu0 %1793
    %v1795 = vsel %vm1707, %v1608, 0.0
    %1796 = vadd.xlane.f32.xlu0 %v1795
    %v1797 = vpop.xlane.xlu0 %1796
    %v1798 = vsel %vm1707, %v1609, 0.0
    %1799 = vadd.xlane.f32.xlu0 %v1798
    %v1800 = vpop.xlane.xlu0 %1799
    %v1801 = vsel %vm1707, %v1610, 0.0
    %1802 = vadd.xlane.f32.xlu0 %v1801
    %v1803 = vpop.xlane.xlu0 %1802
    %v1804 = vsel %vm1707, %v1611, 0.0
    %1805 = vadd.xlane.f32.xlu0 %v1804
    %v1806 = vpop.xlane.xlu0 %1805
    %v1807 = vsel %vm1707, %v1612, 0.0
    %1808 = vadd.xlane.f32.xlu0 %v1807
    %v1809 = vpop.xlane.xlu0 %1808
    %v1810 = vsel %vm1707, %v1613, 0.0
    %1811 = vadd.xlane.f32.xlu0 %v1810
    %v1812 = vpop.xlane.xlu0 %1811
    %v1813 = vsel %vm1707, %v1614, 0.0
    %1814 = vadd.xlane.f32.xlu0 %v1813
    %v1815 = vpop.xlane.xlu0 %1814
    %v1816 = vsel %vm1707, %v1615, 0.0
    %1817 = vadd.xlane.f32.xlu0 %v1816
    %v1818 = vpop.xlane.xlu0 %1817
    %v1819 = vsel %vm1707, %v1616, 0.0
    %1820 = vadd.xlane.f32.xlu0 %v1819
    %v1821 = vpop.xlane.xlu0 %1820
    %v1822 = vsel %vm1707, %v1617, 0.0
    %1823 = vadd.xlane.f32.xlu0 %v1822
    %v1824 = vpop.xlane.xlu0 %1823
    %v1825 = vsel %vm1707, %v1618, 0.0
    %1826 = vadd.xlane.f32.xlu0 %v1825
    %v1827 = vpop.xlane.xlu0 %1826
    %v1828 = vsel %vm1707, %v1619, 0.0
    %1829 = vadd.xlane.f32.xlu0 %v1828
    %v1830 = vpop.xlane.xlu0 %1829
    %v1831 = vsel %vm1707, %v1620, 0.0
    %1832 = vadd.xlane.f32.xlu0 %v1831
    %v1833 = vpop.xlane.xlu0 %1832
    %v1834 = vsel %vm1707, %v1621, 0.0
    %1835 = vadd.xlane.f32.xlu0 %v1834
    %v1836 = vpop.xlane.xlu0 %1835
    %v1837 = vsel %vm1707, %v1622, 0.0
    %1838 = vadd.xlane.f32.xlu0 %v1837
    %v1839 = vpop.xlane.xlu0 %1838
    %v1840 = vsel %vm1707, %v1623, 0.0
    %1841 = vadd.xlane.f32.xlu0 %v1840
    %v1842 = vpop.xlane.xlu0 %1841
    %v1843 = vsel %vm1707, %v1624, 0.0
    %1844 = vadd.xlane.f32.xlu0 %v1843
    %v1845 = vpop.xlane.xlu0 %1844
    %v1846 = vsel %vm1707, %v1625, 0.0
    %1847 = vadd.xlane.f32.xlu0 %v1846
    %v1848 = vpop.xlane.xlu0 %1847
    %v1849 = vsel %vm1707, %v1626, 0.0
    %1850 = vadd.xlane.f32.xlu0 %v1849
    %v1851 = vpop.xlane.xlu0 %1850
    %v1852 = vsel %vm1707, %v1627, 0.0
    %1853 = vadd.xlane.f32.xlu0 %v1852
    %v1854 = vpop.xlane.xlu0 %1853
    %v1855 = vsel %vm1707, %v1628, 0.0
    %1856 = vadd.xlane.f32.xlu0 %v1855
    %v1857 = vpop.xlane.xlu0 %1856
    %v1858 = vsel %vm1707, %v1629, 0.0
    %1859 = vadd.xlane.f32.xlu0 %v1858
    %v1860 = vpop.xlane.xlu0 %1859
    %v1861 = vsel %vm1707, %v1630, 0.0
    %1862 = vadd.xlane.f32.xlu0 %v1861
    %v1863 = vpop.xlane.xlu0 %1862
    %v1864 = vsel %vm1707, %v1631, 0.0
    %1865 = vadd.xlane.f32.xlu0 %v1864
    %v1866 = vpop.xlane.xlu0 %1865
    %v1867 = vsel %vm1707, %v1632, 0.0
    %1868 = vadd.xlane.f32.xlu0 %v1867
    %v1869 = vpop.xlane.xlu0 %1868
    %v1870 = vsel %vm1707, %v1633, 0.0
    %1871 = vadd.xlane.f32.xlu0 %v1870
    %v1872 = vpop.xlane.xlu0 %1871
    %v1873 = vsel %vm1707, %v1634, 0.0
    %1874 = vadd.xlane.f32.xlu0 %v1873
    %v1875 = vpop.xlane.xlu0 %1874
    %v1876 = vsel %vm1707, %v1635, 0.0
    %1877 = vadd.xlane.f32.xlu0 %v1876
    %v1878 = vpop.xlane.xlu0 %1877
    %v1879 = vsel %vm1707, %v1636, 0.0
    %1880 = vadd.xlane.f32.xlu0 %v1879
    %v1881 = vpop.xlane.xlu0 %1880
    %v1882 = vsel %vm1707, %v1637, 0.0
    %1883 = vadd.xlane.f32.xlu0 %v1882
    %v1884 = vpop.xlane.xlu0 %1883
    %v1885 = vsel %vm1707, %v1638, 0.0
    %1886 = vadd.xlane.f32.xlu0 %v1885
    %v1887 = vpop.xlane.xlu0 %1886
    %v1888 = vsel %vm1707, %v1639, 0.0
    %1889 = vadd.xlane.f32.xlu0 %v1888
    %v1890 = vpop.xlane.xlu0 %1889
    %v1891 = vsel %vm1707, %v1640, 0.0
    %1892 = vadd.xlane.f32.xlu0 %v1891
    %v1893 = vpop.xlane.xlu0 %1892
    %v1894 = vsel %vm1707, %v1641, 0.0
    %1895 = vadd.xlane.f32.xlu0 %v1894
    %v1896 = vpop.xlane.xlu0 %1895
    %v1897 = vsel %vm1707, %v1642, 0.0
    %1898 = vadd.xlane.f32.xlu0 %v1897
    %v1899 = vpop.xlane.xlu0 %1898
    %v1900 = vsel %vm1707, %v1643, 0.0
    %1901 = vadd.xlane.f32.xlu0 %v1900
    %v1902 = vpop.xlane.xlu0 %1901
    %v1903 = vsel %vm1707, %v1644, 0.0
    %1904 = vadd.xlane.f32.xlu0 %v1903
    %v1905 = vpop.xlane.xlu0 %1904
    %v1906 = vsel %vm1707, %v1645, 0.0
    %1907 = vadd.xlane.f32.xlu0 %v1906
    %v1908 = vpop.xlane.xlu0 %1907
    %v1909 = vsel %vm1707, %v1646, 0.0
    %1910 = vadd.xlane.f32.xlu0 %v1909
    %v1911 = vpop.xlane.xlu0 %1910
    %v1912 = vsel %vm1707, %v1647, 0.0
    %1913 = vadd.xlane.f32.xlu0 %v1912
    %v1914 = vpop.xlane.xlu0 %1913
    %v1915 = vsel %vm1707, %v1648, 0.0
    %1916 = vadd.xlane.f32.xlu0 %v1915
    %v1917 = vpop.xlane.xlu0 %1916
    %v1918 = vsel %vm1707, %v1649, 0.0
    %1919 = vadd.xlane.f32.xlu0 %v1918
    %v1920 = vpop.xlane.xlu0 %1919
    %v1921 = vsel %vm1707, %v1650, 0.0
    %1922 = vadd.xlane.f32.xlu0 %v1921
    %v1923 = vpop.xlane.xlu0 %1922
    %v1924 = vsel %vm1707, %v1651, 0.0
    %1925 = vadd.xlane.f32.xlu0 %v1924
    %v1926 = vpop.xlane.xlu0 %1925
    %v1927 = vsel %vm1707, %v1652, 0.0
    %1928 = vadd.xlane.f32.xlu0 %v1927
    %v1929 = vpop.xlane.xlu0 %1928
    %v1930 = vsel %vm1707, %v1653, 0.0
    %1931 = vadd.xlane.f32.xlu0 %v1930
    %v1932 = vpop.xlane.xlu0 %1931
    %v1933 = vsel %vm1707, %v1654, 0.0
    %1934 = vadd.xlane.f32.xlu0 %v1933
    %v1935 = vpop.xlane.xlu0 %1934
    %v1936 = vsel %vm1707, %v1655, 0.0
    %1937 = vadd.xlane.f32.xlu0 %v1936
    %v1938 = vpop.xlane.xlu0 %1937
    %v1939 = vsel %vm1707, %v1656, 0.0
    %1940 = vadd.xlane.f32.xlu0 %v1939
    %v1941 = vpop.xlane.xlu0 %1940
    %v1942 = vsel %vm1707, %v1657, 0.0
    %1943 = vadd.xlane.f32.xlu0 %v1942
    %v1944 = vpop.xlane.xlu0 %1943
    %v1945 = vsel %vm1707, %v1658, 0.0
    %1946 = vadd.xlane.f32.xlu0 %v1945
    %v1947 = vpop.xlane.xlu0 %1946
    %v1948 = vsel %vm1707, %v1659, 0.0
    %1949 = vadd.xlane.f32.xlu0 %v1948
    %v1950 = vpop.xlane.xlu0 %1949
    %v1951 = vsel %vm1707, %v1660, 0.0
    %1952 = vadd.xlane.f32.xlu0 %v1951
    %v1953 = vpop.xlane.xlu0 %1952
    %v1954 = vsel %vm1707, %v1661, 0.0
    %1955 = vadd.xlane.f32.xlu0 %v1954
    %v1956 = vpop.xlane.xlu0 %1955
    %v1957 = vsel %vm1707, %v1662, 0.0
    %1958 = vadd.xlane.f32.xlu0 %v1957
    %v1959 = vpop.xlane.xlu0 %1958
    %v1960 = vsel %vm1707, %v1663, 0.0
    %1961 = vadd.xlane.f32.xlu0 %v1960
    %v1962 = vpop.xlane.xlu0 %1961
    %v1963 = vsel %vm1707, %v1664, 0.0
    %1964 = vadd.xlane.f32.xlu0 %v1963
    %v1965 = vpop.xlane.xlu0 %1964
    %v1966 = vsel %vm1707, %v1665, 0.0
    %1967 = vadd.xlane.f32.xlu0 %v1966
    %v1968 = vpop.xlane.xlu0 %1967
    %v1969 = vsel %vm1707, %v1666, 0.0
    %1970 = vadd.xlane.f32.xlu0 %v1969
    %v1971 = vpop.xlane.xlu0 %1970
    %v1972 = vsel %vm1707, %v1667, 0.0
    %1973 = vadd.xlane.f32.xlu0 %v1972
    %v1974 = vpop.xlane.xlu0 %1973
    %v1975 = vsel %vm1707, %v1668, 0.0
    %1976 = vadd.xlane.f32.xlu0 %v1975
    %v1977 = vpop.xlane.xlu0 %1976
    %v1978 = vsel %vm1707, %v1669, 0.0
    %1979 = vadd.xlane.f32.xlu0 %v1978
    %v1980 = vpop.xlane.xlu0 %1979
    %v1981 = vsel %vm1707, %v1670, 0.0
    %1982 = vadd.xlane.f32.xlu0 %v1981
    %v1983 = vpop.xlane.xlu0 %1982
    %v1984 = vsel %vm1707, %v1671, 0.0
    %1985 = vadd.xlane.f32.xlu0 %v1984
    %v1986 = vpop.xlane.xlu0 %1985
    %v1987 = vsel %vm1707, %v1672, 0.0
    %1988 = vadd.xlane.f32.xlu0 %v1987
    %v1989 = vpop.xlane.xlu0 %1988
    %v1990 = vsel %vm1707, %v1673, 0.0
    %1991 = vadd.xlane.f32.xlu0 %v1990
    %v1992 = vpop.xlane.xlu0 %1991
    %v1993 = vsel %vm1707, %v1674, 0.0
    %1994 = vadd.xlane.f32.xlu0 %v1993
    %v1995 = vpop.xlane.xlu0 %1994
    %v1996 = vsel %vm1707, %v1675, 0.0
    %1997 = vadd.xlane.f32.xlu0 %v1996
    %v1998 = vpop.xlane.xlu0 %1997
    %v1999 = vsel %vm1707, %v1676, 0.0
    %2000 = vadd.xlane.f32.xlu0 %v1999
    %v2001 = vpop.xlane.xlu0 %2000
    %v2002 = vsel %vm1707, %v1677, 0.0
    %2003 = vadd.xlane.f32.xlu0 %v2002
    %v2004 = vpop.xlane.xlu0 %2003
    %v2005 = vsel %vm1707, %v1678, 0.0
    %2006 = vadd.xlane.f32.xlu0 %v2005
    %v2007 = vpop.xlane.xlu0 %2006
    %v2008 = vsel %vm1707, %v1679, 0.0
    %2009 = vadd.xlane.f32.xlu0 %v2008
    %v2010 = vpop.xlane.xlu0 %2009
    %v2011 = vsel %vm1707, %v1680, 0.0
    %2012 = vadd.xlane.f32.xlu0 %v2011
    %v2013 = vpop.xlane.xlu0 %2012
    %v2014 = vsel %vm1707, %v1681, 0.0
    %2015 = vadd.xlane.f32.xlu0 %v2014
    %v2016 = vpop.xlane.xlu0 %2015
    %v2017 = vsel %vm1707, %v1682, 0.0
    %2018 = vadd.xlane.f32.xlu0 %v2017
    %v2019 = vpop.xlane.xlu0 %2018
    %v2020 = vsel %vm1707, %v1683, 0.0
    %2021 = vadd.xlane.f32.xlu0 %v2020
    %v2022 = vpop.xlane.xlu0 %2021
    %v2023 = vsel %vm1707, %v1684, 0.0
    %2024 = vadd.xlane.f32.xlu0 %v2023
    %v2025 = vpop.xlane.xlu0 %2024
    %v2026 = vsel %vm1707, %v1685, 0.0
    %2027 = vadd.xlane.f32.xlu0 %v2026
    %v2028 = vpop.xlane.xlu0 %2027
    %v2029 = vsel %vm1707, %v1686, 0.0
    %2030 = vadd.xlane.f32.xlu0 %v2029
    %v2031 = vpop.xlane.xlu0 %2030
    %v2032 = vsel %vm1707, %v1687, 0.0
    %2033 = vadd.xlane.f32.xlu0 %v2032
    %v2034 = vpop.xlane.xlu0 %2033
    %v2035 = vsel %vm1707, %v1688, 0.0
    %2036 = vadd.xlane.f32.xlu0 %v2035
    %v2037 = vpop.xlane.xlu0 %2036
    %v2038 = vsel %vm1707, %v1689, 0.0
    %2039 = vadd.xlane.f32.xlu0 %v2038
    %v2040 = vpop.xlane.xlu0 %2039
    %v2041 = vsel %vm1707, %v1690, 0.0
    %2042 = vadd.xlane.f32.xlu0 %v2041
    %v2043 = vpop.xlane.xlu0 %2042
    %v2044 = vsel %vm1707, %v1691, 0.0
    %2045 = vadd.xlane.f32.xlu0 %v2044
    %v2046 = vpop.xlane.xlu0 %2045
    %v2047 = vsel %vm1707, %v1692, 0.0
    %2048 = vadd.xlane.f32.xlu0 %v2047
    %v2049 = vpop.xlane.xlu0 %2048
    %v2050 = vsel %vm1707, %v1693, 0.0
    %2051 = vadd.xlane.f32.xlu0 %v2050
    %v2052 = vpop.xlane.xlu0 %2051
    %v2053 = vsel %vm1707, %v1694, 0.0
    %2054 = vadd.xlane.f32.xlu0 %v2053
    %v2055 = vpop.xlane.xlu0 %2054
    %v2056 = vsel %vm1707, %v1695, 0.0
    %2057 = vadd.xlane.f32.xlu0 %v2056
    %v2058 = vpop.xlane.xlu0 %2057
    %v2059 = vsel %vm1707, %v1696, 0.0
    %2060 = vadd.xlane.f32.xlu0 %v2059
    %v2061 = vpop.xlane.xlu0 %2060
    %v2062 = vsel %vm1707, %v1697, 0.0
    %2063 = vadd.xlane.f32.xlu0 %v2062
    %v2064 = vpop.xlane.xlu0 %2063
    %v2065 = vsel %vm1707, %v1698, 0.0
    %2066 = vadd.xlane.f32.xlu0 %v2065
    %v2067 = vpop.xlane.xlu0 %2066
    %v2068 = vsel %vm1707, %v1699, 0.0
    %2069 = vadd.xlane.f32.xlu0 %v2068
    %v2070 = vpop.xlane.xlu0 %2069
    %v2071 = vsel %vm1707, %v1700, 0.0
    %2072 = vadd.xlane.f32.xlu0 %v2071
    %v2073 = vpop.xlane.xlu0 %2072
    %v2074 = vsel %vm1707, %v1701, 0.0
    %2075 = vadd.xlane.f32.xlu0 %v2074
    %v2076 = vpop.xlane.xlu0 %2075
    %v2077 = vsel %vm1707, %v1702, 0.0
    %2078 = vadd.xlane.f32.xlu0 %v2077
    %v2079 = vpop.xlane.xlu0 %2078
    %v2080 = vsel %vm1707, %v1703, 0.0
    %2081 = vadd.xlane.f32.xlu0 %v2080
    %v2082 = vpop.xlane.xlu0 %2081
    %v2083 = vsel %vm1707, %v1704, 0.0
    %2084 = vadd.xlane.f32.xlu0 %v2083
    %v2085 = vpop.xlane.xlu0 %2084
    %v2086 = vsel %vm1707, %v1705, 0.0
    %2087 = vadd.xlane.f32.xlu0 %v2086
    %v2088 = vpop.xlane.xlu0 %2087
    %v2089 = vsel %vm1707, %v1706, 0.0
    %2090 = vadd.xlane.f32.xlu0 %v2089
    %v2091 = vpop.xlane.xlu0 %2090
    %v2092 = vld [vmem:[%s2] sm:$0xff]
    %v2094 = vlaneseq
    %v2095 = vshrl.u32 %v2094, 7
    %v2096 = vsub.s32 0, %v2095
    %v2097 = vrot.slane %v2092, %v2096
    %2099 = vbcast.lane.b32.xlu0 %v2097, 256
    %v2100 = vpop.permute.xlu0 %2099
    %s2102 = sor.u32 256, 8
    %2103 = vbcast.lane.b32.xlu0 %v2097, %s2102
    %v2104 = vpop.permute.xlu0 %2103
    %s2106 = sor.u32 256, 16
    %2107 = vbcast.lane.b32.xlu0 %v2097, %s2106
    %v2108 = vpop.permute.xlu0 %2107
    %s2110 = sor.u32 256, 24
    %2111 = vbcast.lane.b32.xlu0 %v2097, %s2110
    %v2112 = vpop.permute.xlu0 %2111
    %s2114 = sor.u32 256, 32
    %2115 = vbcast.lane.b32.xlu0 %v2097, %s2114
    %v2116 = vpop.permute.xlu0 %2115
    %s2118 = sor.u32 256, 40
    %2119 = vbcast.lane.b32.xlu0 %v2097, %s2118
    %v2120 = vpop.permute.xlu0 %2119
    %s2122 = sor.u32 256, 48
    %2123 = vbcast.lane.b32.xlu0 %v2097, %s2122
    %v2124 = vpop.permute.xlu0 %2123
    %s2126 = sor.u32 256, 56
    %2127 = vbcast.lane.b32.xlu0 %v2097, %s2126
    %v2128 = vpop.permute.xlu0 %2127
    %s2130 = sor.u32 256, 64
    %2131 = vbcast.lane.b32.xlu0 %v2097, %s2130
    %v2132 = vpop.permute.xlu0 %2131
    %s2134 = sor.u32 256, 72
    %2135 = vbcast.lane.b32.xlu0 %v2097, %s2134
    %v2136 = vpop.permute.xlu0 %2135
    %s2138 = sor.u32 256, 80
    %2139 = vbcast.lane.b32.xlu0 %v2097, %s2138
    %v2140 = vpop.permute.xlu0 %2139
    %s2142 = sor.u32 256, 88
    %2143 = vbcast.lane.b32.xlu0 %v2097, %s2142
    %v2144 = vpop.permute.xlu0 %2143
    %s2146 = sor.u32 256, 96
    %2147 = vbcast.lane.b32.xlu0 %v2097, %s2146
    %v2148 = vpop.permute.xlu0 %2147
    %s2150 = sor.u32 256, 104
    %2151 = vbcast.lane.b32.xlu0 %v2097, %s2150
    %v2152 = vpop.permute.xlu0 %2151
    %s2154 = sor.u32 256, 112
    %2155 = vbcast.lane.b32.xlu0 %v2097, %s2154
    %v2156 = vpop.permute.xlu0 %2155
    %s2158 = sor.u32 256, 120
    %2159 = vbcast.lane.b32.xlu0 %v2097, %s2158
    %v2160 = vpop.permute.xlu0 %2159
    %v2161 = vlaneseq
    %v2162 = vshrl.u32 %v2161, 7
    %v2163 = vsub.s32 1, %v2162
    %v2164 = vrot.slane %v2092, %v2163
    %2166 = vbcast.lane.b32.xlu0 %v2164, 256
    %v2167 = vpop.permute.xlu0 %2166
    %s2169 = sor.u32 256, 8
    %2170 = vbcast.lane.b32.xlu0 %v2164, %s2169
    %v2171 = vpop.permute.xlu0 %2170
    %s2173 = sor.u32 256, 16
    %2174 = vbcast.lane.b32.xlu0 %v2164, %s2173
    %v2175 = vpop.permute.xlu0 %2174
    %s2177 = sor.u32 256, 24
    %2178 = vbcast.lane.b32.xlu0 %v2164, %s2177
    %v2179 = vpop.permute.xlu0 %2178
    %s2181 = sor.u32 256, 32
    %2182 = vbcast.lane.b32.xlu0 %v2164, %s2181
    %v2183 = vpop.permute.xlu0 %2182
    %s2185 = sor.u32 256, 40
    %2186 = vbcast.lane.b32.xlu0 %v2164, %s2185
    %v2187 = vpop.permute.xlu0 %2186
    %s2189 = sor.u32 256, 48
    %2190 = vbcast.lane.b32.xlu0 %v2164, %s2189
    %v2191 = vpop.permute.xlu0 %2190
    %s2193 = sor.u32 256, 56
    %2194 = vbcast.lane.b32.xlu0 %v2164, %s2193
    %v2195 = vpop.permute.xlu0 %2194
    %s2197 = sor.u32 256, 64
    %2198 = vbcast.lane.b32.xlu0 %v2164, %s2197
    %v2199 = vpop.permute.xlu0 %2198
    %s2201 = sor.u32 256, 72
    %2202 = vbcast.lane.b32.xlu0 %v2164, %s2201
    %v2203 = vpop.permute.xlu0 %2202
    %s2205 = sor.u32 256, 80
    %2206 = vbcast.lane.b32.xlu0 %v2164, %s2205
    %v2207 = vpop.permute.xlu0 %2206
    %s2209 = sor.u32 256, 88
    %2210 = vbcast.lane.b32.xlu0 %v2164, %s2209
    %v2211 = vpop.permute.xlu0 %2210
    %s2213 = sor.u32 256, 96
    %2214 = vbcast.lane.b32.xlu0 %v2164, %s2213
    %v2215 = vpop.permute.xlu0 %2214
    %s2217 = sor.u32 256, 104
    %2218 = vbcast.lane.b32.xlu0 %v2164, %s2217
    %v2219 = vpop.permute.xlu0 %2218
    %s2221 = sor.u32 256, 112
    %2222 = vbcast.lane.b32.xlu0 %v2164, %s2221
    %v2223 = vpop.permute.xlu0 %2222
    %s2225 = sor.u32 256, 120
    %2226 = vbcast.lane.b32.xlu0 %v2164, %s2225
    %v2227 = vpop.permute.xlu0 %2226
    %v2228 = vlaneseq
    %v2229 = vshrl.u32 %v2228, 7
    %v2230 = vsub.s32 2, %v2229
    %v2231 = vrot.slane %v2092, %v2230
    %2233 = vbcast.lane.b32.xlu0 %v2231, 256
    %v2234 = vpop.permute.xlu0 %2233
    %s2236 = sor.u32 256, 8
    %2237 = vbcast.lane.b32.xlu0 %v2231, %s2236
    %v2238 = vpop.permute.xlu0 %2237
    %s2240 = sor.u32 256, 16
    %2241 = vbcast.lane.b32.xlu0 %v2231, %s2240
    %v2242 = vpop.permute.xlu0 %2241
    %s2244 = sor.u32 256, 24
    %2245 = vbcast.lane.b32.xlu0 %v2231, %s2244
    %v2246 = vpop.permute.xlu0 %2245
    %s2248 = sor.u32 256, 32
    %2249 = vbcast.lane.b32.xlu0 %v2231, %s2248
    %v2250 = vpop.permute.xlu0 %2249
    %s2252 = sor.u32 256, 40
    %2253 = vbcast.lane.b32.xlu0 %v2231, %s2252
    %v2254 = vpop.permute.xlu0 %2253
    %s2256 = sor.u32 256, 48
    %2257 = vbcast.lane.b32.xlu0 %v2231, %s2256
    %v2258 = vpop.permute.xlu0 %2257
    %s2260 = sor.u32 256, 56
    %2261 = vbcast.lane.b32.xlu0 %v2231, %s2260
    %v2262 = vpop.permute.xlu0 %2261
    %s2264 = sor.u32 256, 64
    %2265 = vbcast.lane.b32.xlu0 %v2231, %s2264
    %v2266 = vpop.permute.xlu0 %2265
    %s2268 = sor.u32 256, 72
    %2269 = vbcast.lane.b32.xlu0 %v2231, %s2268
    %v2270 = vpop.permute.xlu0 %2269
    %s2272 = sor.u32 256, 80
    %2273 = vbcast.lane.b32.xlu0 %v2231, %s2272
    %v2274 = vpop.permute.xlu0 %2273
    %s2276 = sor.u32 256, 88
    %2277 = vbcast.lane.b32.xlu0 %v2231, %s2276
    %v2278 = vpop.permute.xlu0 %2277
    %s2280 = sor.u32 256, 96
    %2281 = vbcast.lane.b32.xlu0 %v2231, %s2280
    %v2282 = vpop.permute.xlu0 %2281
    %s2284 = sor.u32 256, 104
    %2285 = vbcast.lane.b32.xlu0 %v2231, %s2284
    %v2286 = vpop.permute.xlu0 %2285
    %s2288 = sor.u32 256, 112
    %2289 = vbcast.lane.b32.xlu0 %v2231, %s2288
    %v2290 = vpop.permute.xlu0 %2289
    %s2292 = sor.u32 256, 120
    %2293 = vbcast.lane.b32.xlu0 %v2231, %s2292
    %v2294 = vpop.permute.xlu0 %2293
    %v2295 = vlaneseq
    %v2296 = vshrl.u32 %v2295, 7
    %v2297 = vsub.s32 3, %v2296
    %v2298 = vrot.slane %v2092, %v2297
    %2300 = vbcast.lane.b32.xlu0 %v2298, 256
    %v2301 = vpop.permute.xlu0 %2300
    %s2303 = sor.u32 256, 8
    %2304 = vbcast.lane.b32.xlu0 %v2298, %s2303
    %v2305 = vpop.permute.xlu0 %2304
    %s2307 = sor.u32 256, 16
    %2308 = vbcast.lane.b32.xlu0 %v2298, %s2307
    %v2309 = vpop.permute.xlu0 %2308
    %s2311 = sor.u32 256, 24
    %2312 = vbcast.lane.b32.xlu0 %v2298, %s2311
    %v2313 = vpop.permute.xlu0 %2312
    %s2315 = sor.u32 256, 32
    %2316 = vbcast.lane.b32.xlu0 %v2298, %s2315
    %v2317 = vpop.permute.xlu0 %2316
    %s2319 = sor.u32 256, 40
    %2320 = vbcast.lane.b32.xlu0 %v2298, %s2319
    %v2321 = vpop.permute.xlu0 %2320
    %s2323 = sor.u32 256, 48
    %2324 = vbcast.lane.b32.xlu0 %v2298, %s2323
    %v2325 = vpop.permute.xlu0 %2324
    %s2327 = sor.u32 256, 56
    %2328 = vbcast.lane.b32.xlu0 %v2298, %s2327
    %v2329 = vpop.permute.xlu0 %2328
    %s2331 = sor.u32 256, 64
    %2332 = vbcast.lane.b32.xlu0 %v2298, %s2331
    %v2333 = vpop.permute.xlu0 %2332
    %s2335 = sor.u32 256, 72
    %2336 = vbcast.lane.b32.xlu0 %v2298, %s2335
    %v2337 = vpop.permute.xlu0 %2336
    %s2339 = sor.u32 256, 80
    %2340 = vbcast.lane.b32.xlu0 %v2298, %s2339
    %v2341 = vpop.permute.xlu0 %2340
    %s2343 = sor.u32 256, 88
    %2344 = vbcast.lane.b32.xlu0 %v2298, %s2343
    %v2345 = vpop.permute.xlu0 %2344
    %s2347 = sor.u32 256, 96
    %2348 = vbcast.lane.b32.xlu0 %v2298, %s2347
    %v2349 = vpop.permute.xlu0 %2348
    %s2351 = sor.u32 256, 104
    %2352 = vbcast.lane.b32.xlu0 %v2298, %s2351
    %v2353 = vpop.permute.xlu0 %2352
    %s2355 = sor.u32 256, 112
    %2356 = vbcast.lane.b32.xlu0 %v2298, %s2355
    %v2357 = vpop.permute.xlu0 %2356
    %s2359 = sor.u32 256, 120
    %2360 = vbcast.lane.b32.xlu0 %v2298, %s2359
    %v2361 = vpop.permute.xlu0 %2360
    %v2362 = vlaneseq
    %v2363 = vshrl.u32 %v2362, 7
    %v2364 = vsub.s32 4, %v2363
    %v2365 = vrot.slane %v2092, %v2364
    %2367 = vbcast.lane.b32.xlu0 %v2365, 256
    %v2368 = vpop.permute.xlu0 %2367
    %s2370 = sor.u32 256, 8
    %2371 = vbcast.lane.b32.xlu0 %v2365, %s2370
    %v2372 = vpop.permute.xlu0 %2371
    %s2374 = sor.u32 256, 16
    %2375 = vbcast.lane.b32.xlu0 %v2365, %s2374
    %v2376 = vpop.permute.xlu0 %2375
    %s2378 = sor.u32 256, 24
    %2379 = vbcast.lane.b32.xlu0 %v2365, %s2378
    %v2380 = vpop.permute.xlu0 %2379
    %s2382 = sor.u32 256, 32
    %2383 = vbcast.lane.b32.xlu0 %v2365, %s2382
    %v2384 = vpop.permute.xlu0 %2383
    %s2386 = sor.u32 256, 40
    %2387 = vbcast.lane.b32.xlu0 %v2365, %s2386
    %v2388 = vpop.permute.xlu0 %2387
    %s2390 = sor.u32 256, 48
    %2391 = vbcast.lane.b32.xlu0 %v2365, %s2390
    %v2392 = vpop.permute.xlu0 %2391
    %s2394 = sor.u32 256, 56
    %2395 = vbcast.lane.b32.xlu0 %v2365, %s2394
    %v2396 = vpop.permute.xlu0 %2395
    %s2398 = sor.u32 256, 64
    %2399 = vbcast.lane.b32.xlu0 %v2365, %s2398
    %v2400 = vpop.permute.xlu0 %2399
    %s2402 = sor.u32 256, 72
    %2403 = vbcast.lane.b32.xlu0 %v2365, %s2402
    %v2404 = vpop.permute.xlu0 %2403
    %s2406 = sor.u32 256, 80
    %2407 = vbcast.lane.b32.xlu0 %v2365, %s2406
    %v2408 = vpop.permute.xlu0 %2407
    %s2410 = sor.u32 256, 88
    %2411 = vbcast.lane.b32.xlu0 %v2365, %s2410
    %v2412 = vpop.permute.xlu0 %2411
    %s2414 = sor.u32 256, 96
    %2415 = vbcast.lane.b32.xlu0 %v2365, %s2414
    %v2416 = vpop.permute.xlu0 %2415
    %s2418 = sor.u32 256, 104
    %2419 = vbcast.lane.b32.xlu0 %v2365, %s2418
    %v2420 = vpop.permute.xlu0 %2419
    %s2422 = sor.u32 256, 112
    %2423 = vbcast.lane.b32.xlu0 %v2365, %s2422
    %v2424 = vpop.permute.xlu0 %2423
    %s2426 = sor.u32 256, 120
    %2427 = vbcast.lane.b32.xlu0 %v2365, %s2426
    %v2428 = vpop.permute.xlu0 %2427
    %v2429 = vlaneseq
    %v2430 = vshrl.u32 %v2429, 7
    %v2431 = vsub.s32 5, %v2430
    %v2432 = vrot.slane %v2092, %v2431
    %2434 = vbcast.lane.b32.xlu0 %v2432, 256
    %v2435 = vpop.permute.xlu0 %2434
    %s2437 = sor.u32 256, 8
    %2438 = vbcast.lane.b32.xlu0 %v2432, %s2437
    %v2439 = vpop.permute.xlu0 %2438
    %s2441 = sor.u32 256, 16
    %2442 = vbcast.lane.b32.xlu0 %v2432, %s2441
    %v2443 = vpop.permute.xlu0 %2442
    %s2445 = sor.u32 256, 24
    %2446 = vbcast.lane.b32.xlu0 %v2432, %s2445
    %v2447 = vpop.permute.xlu0 %2446
    %s2449 = sor.u32 256, 32
    %2450 = vbcast.lane.b32.xlu0 %v2432, %s2449
    %v2451 = vpop.permute.xlu0 %2450
    %s2453 = sor.u32 256, 40
    %2454 = vbcast.lane.b32.xlu0 %v2432, %s2453
    %v2455 = vpop.permute.xlu0 %2454
    %s2457 = sor.u32 256, 48
    %2458 = vbcast.lane.b32.xlu0 %v2432, %s2457
    %v2459 = vpop.permute.xlu0 %2458
    %s2461 = sor.u32 256, 56
    %2462 = vbcast.lane.b32.xlu0 %v2432, %s2461
    %v2463 = vpop.permute.xlu0 %2462
    %s2465 = sor.u32 256, 64
    %2466 = vbcast.lane.b32.xlu0 %v2432, %s2465
    %v2467 = vpop.permute.xlu0 %2466
    %s2469 = sor.u32 256, 72
    %2470 = vbcast.lane.b32.xlu0 %v2432, %s2469
    %v2471 = vpop.permute.xlu0 %2470
    %s2473 = sor.u32 256, 80
    %2474 = vbcast.lane.b32.xlu0 %v2432, %s2473
    %v2475 = vpop.permute.xlu0 %2474
    %s2477 = sor.u32 256, 88
    %2478 = vbcast.lane.b32.xlu0 %v2432, %s2477
    %v2479 = vpop.permute.xlu0 %2478
    %s2481 = sor.u32 256, 96
    %2482 = vbcast.lane.b32.xlu0 %v2432, %s2481
    %v2483 = vpop.permute.xlu0 %2482
    %s2485 = sor.u32 256, 104
    %2486 = vbcast.lane.b32.xlu0 %v2432, %s2485
    %v2487 = vpop.permute.xlu0 %2486
    %s2489 = sor.u32 256, 112
    %2490 = vbcast.lane.b32.xlu0 %v2432, %s2489
    %v2491 = vpop.permute.xlu0 %2490
    %s2493 = sor.u32 256, 120
    %2494 = vbcast.lane.b32.xlu0 %v2432, %s2493
    %v2495 = vpop.permute.xlu0 %2494
    %v2496 = vlaneseq
    %v2497 = vshrl.u32 %v2496, 7
    %v2498 = vsub.s32 6, %v2497
    %v2499 = vrot.slane %v2092, %v2498
    %2501 = vbcast.lane.b32.xlu0 %v2499, 256
    %v2502 = vpop.permute.xlu0 %2501
    %s2504 = sor.u32 256, 8
    %2505 = vbcast.lane.b32.xlu0 %v2499, %s2504
    %v2506 = vpop.permute.xlu0 %2505
    %s2508 = sor.u32 256, 16
    %2509 = vbcast.lane.b32.xlu0 %v2499, %s2508
    %v2510 = vpop.permute.xlu0 %2509
    %s2512 = sor.u32 256, 24
    %2513 = vbcast.lane.b32.xlu0 %v2499, %s2512
    %v2514 = vpop.permute.xlu0 %2513
    %s2516 = sor.u32 256, 32
    %2517 = vbcast.lane.b32.xlu0 %v2499, %s2516
    %v2518 = vpop.permute.xlu0 %2517
    %s2520 = sor.u32 256, 40
    %2521 = vbcast.lane.b32.xlu0 %v2499, %s2520
    %v2522 = vpop.permute.xlu0 %2521
    %s2524 = sor.u32 256, 48
    %2525 = vbcast.lane.b32.xlu0 %v2499, %s2524
    %v2526 = vpop.permute.xlu0 %2525
    %s2528 = sor.u32 256, 56
    %2529 = vbcast.lane.b32.xlu0 %v2499, %s2528
    %v2530 = vpop.permute.xlu0 %2529
    %s2532 = sor.u32 256, 64
    %2533 = vbcast.lane.b32.xlu0 %v2499, %s2532
    %v2534 = vpop.permute.xlu0 %2533
    %s2536 = sor.u32 256, 72
    %2537 = vbcast.lane.b32.xlu0 %v2499, %s2536
    %v2538 = vpop.permute.xlu0 %2537
    %s2540 = sor.u32 256, 80
    %2541 = vbcast.lane.b32.xlu0 %v2499, %s2540
    %v2542 = vpop.permute.xlu0 %2541
    %s2544 = sor.u32 256, 88
    %2545 = vbcast.lane.b32.xlu0 %v2499, %s2544
    %v2546 = vpop.permute.xlu0 %2545
    %s2548 = sor.u32 256, 96
    %2549 = vbcast.lane.b32.xlu0 %v2499, %s2548
    %v2550 = vpop.permute.xlu0 %2549
    %s2552 = sor.u32 256, 104
    %2553 = vbcast.lane.b32.xlu0 %v2499, %s2552
    %v2554 = vpop.permute.xlu0 %2553
    %s2556 = sor.u32 256, 112
    %2557 = vbcast.lane.b32.xlu0 %v2499, %s2556
    %v2558 = vpop.permute.xlu0 %2557
    %s2560 = sor.u32 256, 120
    %2561 = vbcast.lane.b32.xlu0 %v2499, %s2560
    %v2562 = vpop.permute.xlu0 %2561
    %v2563 = vlaneseq
    %v2564 = vshrl.u32 %v2563, 7
    %v2565 = vsub.s32 7, %v2564
    %v2566 = vrot.slane %v2092, %v2565
    %2568 = vbcast.lane.b32.xlu0 %v2566, 256
    %v2569 = vpop.permute.xlu0 %2568
    %s2571 = sor.u32 256, 8
    %2572 = vbcast.lane.b32.xlu0 %v2566, %s2571
    %v2573 = vpop.permute.xlu0 %2572
    %s2575 = sor.u32 256, 16
    %2576 = vbcast.lane.b32.xlu0 %v2566, %s2575
    %v2577 = vpop.permute.xlu0 %2576
    %s2579 = sor.u32 256, 24
    %2580 = vbcast.lane.b32.xlu0 %v2566, %s2579
    %v2581 = vpop.permute.xlu0 %2580
    %s2583 = sor.u32 256, 32
    %2584 = vbcast.lane.b32.xlu0 %v2566, %s2583
    %v2585 = vpop.permute.xlu0 %2584
    %s2587 = sor.u32 256, 40
    %2588 = vbcast.lane.b32.xlu0 %v2566, %s2587
    %v2589 = vpop.permute.xlu0 %2588
    %s2591 = sor.u32 256, 48
    %2592 = vbcast.lane.b32.xlu0 %v2566, %s2591
    %v2593 = vpop.permute.xlu0 %2592
    %s2595 = sor.u32 256, 56
    %2596 = vbcast.lane.b32.xlu0 %v2566, %s2595
    %v2597 = vpop.permute.xlu0 %2596
    %s2599 = sor.u32 256, 64
    %2600 = vbcast.lane.b32.xlu0 %v2566, %s2599
    %v2601 = vpop.permute.xlu0 %2600
    %s2603 = sor.u32 256, 72
    %2604 = vbcast.lane.b32.xlu0 %v2566, %s2603
    %v2605 = vpop.permute.xlu0 %2604
    %s2607 = sor.u32 256, 80
    %2608 = vbcast.lane.b32.xlu0 %v2566, %s2607
    %v2609 = vpop.permute.xlu0 %2608
    %s2611 = sor.u32 256, 88
    %2612 = vbcast.lane.b32.xlu0 %v2566, %s2611
    %v2613 = vpop.permute.xlu0 %2612
    %s2615 = sor.u32 256, 96
    %2616 = vbcast.lane.b32.xlu0 %v2566, %s2615
    %v2617 = vpop.permute.xlu0 %2616
    %s2619 = sor.u32 256, 104
    %2620 = vbcast.lane.b32.xlu0 %v2566, %s2619
    %v2621 = vpop.permute.xlu0 %2620
    %s2623 = sor.u32 256, 112
    %2624 = vbcast.lane.b32.xlu0 %v2566, %s2623
    %v2625 = vpop.permute.xlu0 %2624
    %s2627 = sor.u32 256, 120
    %2628 = vbcast.lane.b32.xlu0 %v2566, %s2627
    %v2629 = vpop.permute.xlu0 %2628
    %v2758 = vadd.f32 %v1710, %v2100
    %v2759 = vadd.f32 %v1713, %v2104
    %v2760 = vadd.f32 %v1716, %v2108
    %v2761 = vadd.f32 %v1719, %v2112
    %v2762 = vadd.f32 %v1722, %v2116
    %v2763 = vadd.f32 %v1725, %v2120
    %v2764 = vadd.f32 %v1728, %v2124
    %v2765 = vadd.f32 %v1731, %v2128
    %v2766 = vadd.f32 %v1734, %v2132
    %v2767 = vadd.f32 %v1737, %v2136
    %v2768 = vadd.f32 %v1740, %v2140
    %v2769 = vadd.f32 %v1743, %v2144
    %v2770 = vadd.f32 %v1746, %v2148
    %v2771 = vadd.f32 %v1749, %v2152
    %v2772 = vadd.f32 %v1752, %v2156
    %v2773 = vadd.f32 %v1755, %v2160
    %v2774 = vadd.f32 %v1758, %v2167
    %v2775 = vadd.f32 %v1761, %v2171
    %v2776 = vadd.f32 %v1764, %v2175
    %v2777 = vadd.f32 %v1767, %v2179
    %v2778 = vadd.f32 %v1770, %v2183
    %v2779 = vadd.f32 %v1773, %v2187
    %v2780 = vadd.f32 %v1776, %v2191
    %v2781 = vadd.f32 %v1779, %v2195
    %v2782 = vadd.f32 %v1782, %v2199
    %v2783 = vadd.f32 %v1785, %v2203
    %v2784 = vadd.f32 %v1788, %v2207
    %v2785 = vadd.f32 %v1791, %v2211
    %v2786 = vadd.f32 %v1794, %v2215
    %v2787 = vadd.f32 %v1797, %v2219
    %v2788 = vadd.f32 %v1800, %v2223
    %v2789 = vadd.f32 %v1803, %v2227
    %v2790 = vadd.f32 %v1806, %v2234
    %v2791 = vadd.f32 %v1809, %v2238
    %v2792 = vadd.f32 %v1812, %v2242
    %v2793 = vadd.f32 %v1815, %v2246
    %v2794 = vadd.f32 %v1818, %v2250
    %v2795 = vadd.f32 %v1821, %v2254
    %v2796 = vadd.f32 %v1824, %v2258
    %v2797 = vadd.f32 %v1827, %v2262
    %v2798 = vadd.f32 %v1830, %v2266
    %v2799 = vadd.f32 %v1833, %v2270
    %v2800 = vadd.f32 %v1836, %v2274
    %v2801 = vadd.f32 %v1839, %v2278
    %v2802 = vadd.f32 %v1842, %v2282
    %v2803 = vadd.f32 %v1845, %v2286
    %v2804 = vadd.f32 %v1848, %v2290
    %v2805 = vadd.f32 %v1851, %v2294
    %v2806 = vadd.f32 %v1854, %v2301
    %v2807 = vadd.f32 %v1857, %v2305
    %v2808 = vadd.f32 %v1860, %v2309
    %v2809 = vadd.f32 %v1863, %v2313
    %v2810 = vadd.f32 %v1866, %v2317
    %v2811 = vadd.f32 %v1869, %v2321
    %v2812 = vadd.f32 %v1872, %v2325
    %v2813 = vadd.f32 %v1875, %v2329
    %v2814 = vadd.f32 %v1878, %v2333
    %v2815 = vadd.f32 %v1881, %v2337
    %v2816 = vadd.f32 %v1884, %v2341
    %v2817 = vadd.f32 %v1887, %v2345
    %v2818 = vadd.f32 %v1890, %v2349
    %v2819 = vadd.f32 %v1893, %v2353
    %v2820 = vadd.f32 %v1896, %v2357
    %v2821 = vadd.f32 %v1899, %v2361
    %v2822 = vadd.f32 %v1902, %v2368
    %v2823 = vadd.f32 %v1905, %v2372
    %v2824 = vadd.f32 %v1908, %v2376
    %v2825 = vadd.f32 %v1911, %v2380
    %v2826 = vadd.f32 %v1914, %v2384
    %v2827 = vadd.f32 %v1917, %v2388
    %v2828 = vadd.f32 %v1920, %v2392
    %v2829 = vadd.f32 %v1923, %v2396
    %v2830 = vadd.f32 %v1926, %v2400
    %v2831 = vadd.f32 %v1929, %v2404
    %v2832 = vadd.f32 %v1932, %v2408
    %v2833 = vadd.f32 %v1935, %v2412
    %v2834 = vadd.f32 %v1938, %v2416
    %v2835 = vadd.f32 %v1941, %v2420
    %v2836 = vadd.f32 %v1944, %v2424
    %v2837 = vadd.f32 %v1947, %v2428
    %v2838 = vadd.f32 %v1950, %v2435
    %v2839 = vadd.f32 %v1953, %v2439
    %v2840 = vadd.f32 %v1956, %v2443
    %v2841 = vadd.f32 %v1959, %v2447
    %v2842 = vadd.f32 %v1962, %v2451
    %v2843 = vadd.f32 %v1965, %v2455
    %v2844 = vadd.f32 %v1968, %v2459
    %v2845 = vadd.f32 %v1971, %v2463
    %v2846 = vadd.f32 %v1974, %v2467
    %v2847 = vadd.f32 %v1977, %v2471
    %v2848 = vadd.f32 %v1980, %v2475
    %v2849 = vadd.f32 %v1983, %v2479
    %v2850 = vadd.f32 %v1986, %v2483
    %v2851 = vadd.f32 %v1989, %v2487
    %v2852 = vadd.f32 %v1992, %v2491
    %v2853 = vadd.f32 %v1995, %v2495
    %v2854 = vadd.f32 %v1998, %v2502
    %v2855 = vadd.f32 %v2001, %v2506
    %v2856 = vadd.f32 %v2004, %v2510
    %v2857 = vadd.f32 %v2007, %v2514
    %v2858 = vadd.f32 %v2010, %v2518
    %v2859 = vadd.f32 %v2013, %v2522
    %v2860 = vadd.f32 %v2016, %v2526
    %v2861 = vadd.f32 %v2019, %v2530
    %v2862 = vadd.f32 %v2022, %v2534
    %v2863 = vadd.f32 %v2025, %v2538
    %v2864 = vadd.f32 %v2028, %v2542
    %v2865 = vadd.f32 %v2031, %v2546
    %v2866 = vadd.f32 %v2034, %v2550
    %v2867 = vadd.f32 %v2037, %v2554
    %v2868 = vadd.f32 %v2040, %v2558
    %v2869 = vadd.f32 %v2043, %v2562
    %v2870 = vadd.f32 %v2046, %v2569
    %v2871 = vadd.f32 %v2049, %v2573
    %v2872 = vadd.f32 %v2052, %v2577
    %v2873 = vadd.f32 %v2055, %v2581
    %v2874 = vadd.f32 %v2058, %v2585
    %v2875 = vadd.f32 %v2061, %v2589
    %v2876 = vadd.f32 %v2064, %v2593
    %v2877 = vadd.f32 %v2067, %v2597
    %v2878 = vadd.f32 %v2070, %v2601
    %v2879 = vadd.f32 %v2073, %v2605
    %v2880 = vadd.f32 %v2076, %v2609
    %v2881 = vadd.f32 %v2079, %v2613
    %v2882 = vadd.f32 %v2082, %v2617
    %v2883 = vadd.f32 %v2085, %v2621
    %v2884 = vadd.f32 %v2088, %v2625
    %v2885 = vadd.f32 %v2091, %v2629
    %3014 = vset.pattern.permute.xlu0 0
    %3015 = vperm.xlu0 %3014, %v2758
    %v3016 = vpop.permute.xlu0 %3015
    %3017 = vset.pattern.permute.xlu0 0
    %3018 = vperm.xlu0 %3017, %v2759
    %v3019 = vpop.permute.xlu0 %3018
    %3020 = vset.pattern.permute.xlu0 0
    %3021 = vperm.xlu0 %3020, %v2760
    %v3022 = vpop.permute.xlu0 %3021
    %3023 = vset.pattern.permute.xlu0 0
    %3024 = vperm.xlu0 %3023, %v2761
    %v3025 = vpop.permute.xlu0 %3024
    %3026 = vset.pattern.permute.xlu0 0
    %3027 = vperm.xlu0 %3026, %v2762
    %v3028 = vpop.permute.xlu0 %3027
    %3029 = vset.pattern.permute.xlu0 0
    %3030 = vperm.xlu0 %3029, %v2763
    %v3031 = vpop.permute.xlu0 %3030
    %3032 = vset.pattern.permute.xlu0 0
    %3033 = vperm.xlu0 %3032, %v2764
    %v3034 = vpop.permute.xlu0 %3033
    %3035 = vset.pattern.permute.xlu0 0
    %3036 = vperm.xlu0 %3035, %v2765
    %v3037 = vpop.permute.xlu0 %3036
    %3038 = vset.pattern.permute.xlu0 0
    %3039 = vperm.xlu0 %3038, %v2766
    %v3040 = vpop.permute.xlu0 %3039
    %3041 = vset.pattern.permute.xlu0 0
    %3042 = vperm.xlu0 %3041, %v2767
    %v3043 = vpop.permute.xlu0 %3042
    %3044 = vset.pattern.permute.xlu0 0
    %3045 = vperm.xlu0 %3044, %v2768
    %v3046 = vpop.permute.xlu0 %3045
    %3047 = vset.pattern.permute.xlu0 0
    %3048 = vperm.xlu0 %3047, %v2769
    %v3049 = vpop.permute.xlu0 %3048
    %3050 = vset.pattern.permute.xlu0 0
    %3051 = vperm.xlu0 %3050, %v2770
    %v3052 = vpop.permute.xlu0 %3051
    %3053 = vset.pattern.permute.xlu0 0
    %3054 = vperm.xlu0 %3053, %v2771
    %v3055 = vpop.permute.xlu0 %3054
    %3056 = vset.pattern.permute.xlu0 0
    %3057 = vperm.xlu0 %3056, %v2772
    %v3058 = vpop.permute.xlu0 %3057
    %3059 = vset.pattern.permute.xlu0 0
    %3060 = vperm.xlu0 %3059, %v2773
    %v3061 = vpop.permute.xlu0 %3060
    %3062 = vset.pattern.permute.xlu0 0
    %3063 = vperm.xlu0 %3062, %v2774
    %v3064 = vpop.permute.xlu0 %3063
    %3065 = vset.pattern.permute.xlu0 0
    %3066 = vperm.xlu0 %3065, %v2775
    %v3067 = vpop.permute.xlu0 %3066
    %3068 = vset.pattern.permute.xlu0 0
    %3069 = vperm.xlu0 %3068, %v2776
    %v3070 = vpop.permute.xlu0 %3069
    %3071 = vset.pattern.permute.xlu0 0
    %3072 = vperm.xlu0 %3071, %v2777
    %v3073 = vpop.permute.xlu0 %3072
    %3074 = vset.pattern.permute.xlu0 0
    %3075 = vperm.xlu0 %3074, %v2778
    %v3076 = vpop.permute.xlu0 %3075
    %3077 = vset.pattern.permute.xlu0 0
    %3078 = vperm.xlu0 %3077, %v2779
    %v3079 = vpop.permute.xlu0 %3078
    %3080 = vset.pattern.permute.xlu0 0
    %3081 = vperm.xlu0 %3080, %v2780
    %v3082 = vpop.permute.xlu0 %3081
    %3083 = vset.pattern.permute.xlu0 0
    %3084 = vperm.xlu0 %3083, %v2781
    %v3085 = vpop.permute.xlu0 %3084
    %3086 = vset.pattern.permute.xlu0 0
    %3087 = vperm.xlu0 %3086, %v2782
    %v3088 = vpop.permute.xlu0 %3087
    %3089 = vset.pattern.permute.xlu0 0
    %3090 = vperm.xlu0 %3089, %v2783
    %v3091 = vpop.permute.xlu0 %3090
    %3092 = vset.pattern.permute.xlu0 0
    %3093 = vperm.xlu0 %3092, %v2784
    %v3094 = vpop.permute.xlu0 %3093
    %3095 = vset.pattern.permute.xlu0 0
    %3096 = vperm.xlu0 %3095, %v2785
    %v3097 = vpop.permute.xlu0 %3096
    %3098 = vset.pattern.permute.xlu0 0
    %3099 = vperm.xlu0 %3098, %v2786
    %v3100 = vpop.permute.xlu0 %3099
    %3101 = vset.pattern.permute.xlu0 0
    %3102 = vperm.xlu0 %3101, %v2787
    %v3103 = vpop.permute.xlu0 %3102
    %3104 = vset.pattern.permute.xlu0 0
    %3105 = vperm.xlu0 %3104, %v2788
    %v3106 = vpop.permute.xlu0 %3105
    %3107 = vset.pattern.permute.xlu0 0
    %3108 = vperm.xlu0 %3107, %v2789
    %v3109 = vpop.permute.xlu0 %3108
    %3110 = vset.pattern.permute.xlu0 0
    %3111 = vperm.xlu0 %3110, %v2790
    %v3112 = vpop.permute.xlu0 %3111
    %3113 = vset.pattern.permute.xlu0 0
    %3114 = vperm.xlu0 %3113, %v2791
    %v3115 = vpop.permute.xlu0 %3114
    %3116 = vset.pattern.permute.xlu0 0
    %3117 = vperm.xlu0 %3116, %v2792
    %v3118 = vpop.permute.xlu0 %3117
    %3119 = vset.pattern.permute.xlu0 0
    %3120 = vperm.xlu0 %3119, %v2793
    %v3121 = vpop.permute.xlu0 %3120
    %3122 = vset.pattern.permute.xlu0 0
    %3123 = vperm.xlu0 %3122, %v2794
    %v3124 = vpop.permute.xlu0 %3123
    %3125 = vset.pattern.permute.xlu0 0
    %3126 = vperm.xlu0 %3125, %v2795
    %v3127 = vpop.permute.xlu0 %3126
    %3128 = vset.pattern.permute.xlu0 0
    %3129 = vperm.xlu0 %3128, %v2796
    %v3130 = vpop.permute.xlu0 %3129
    %3131 = vset.pattern.permute.xlu0 0
    %3132 = vperm.xlu0 %3131, %v2797
    %v3133 = vpop.permute.xlu0 %3132
    %3134 = vset.pattern.permute.xlu0 0
    %3135 = vperm.xlu0 %3134, %v2798
    %v3136 = vpop.permute.xlu0 %3135
    %3137 = vset.pattern.permute.xlu0 0
    %3138 = vperm.xlu0 %3137, %v2799
    %v3139 = vpop.permute.xlu0 %3138
    %3140 = vset.pattern.permute.xlu0 0
    %3141 = vperm.xlu0 %3140, %v2800
    %v3142 = vpop.permute.xlu0 %3141
    %3143 = vset.pattern.permute.xlu0 0
    %3144 = vperm.xlu0 %3143, %v2801
    %v3145 = vpop.permute.xlu0 %3144
    %3146 = vset.pattern.permute.xlu0 0
    %3147 = vperm.xlu0 %3146, %v2802
    %v3148 = vpop.permute.xlu0 %3147
    %3149 = vset.pattern.permute.xlu0 0
    %3150 = vperm.xlu0 %3149, %v2803
    %v3151 = vpop.permute.xlu0 %3150
    %3152 = vset.pattern.permute.xlu0 0
    %3153 = vperm.xlu0 %3152, %v2804
    %v3154 = vpop.permute.xlu0 %3153
    %3155 = vset.pattern.permute.xlu0 0
    %3156 = vperm.xlu0 %3155, %v2805
    %v3157 = vpop.permute.xlu0 %3156
    %3158 = vset.pattern.permute.xlu0 0
    %3159 = vperm.xlu0 %3158, %v2806
    %v3160 = vpop.permute.xlu0 %3159
    %3161 = vset.pattern.permute.xlu0 0
    %3162 = vperm.xlu0 %3161, %v2807
    %v3163 = vpop.permute.xlu0 %3162
    %3164 = vset.pattern.permute.xlu0 0
    %3165 = vperm.xlu0 %3164, %v2808
    %v3166 = vpop.permute.xlu0 %3165
    %3167 = vset.pattern.permute.xlu0 0
    %3168 = vperm.xlu0 %3167, %v2809
    %v3169 = vpop.permute.xlu0 %3168
    %3170 = vset.pattern.permute.xlu0 0
    %3171 = vperm.xlu0 %3170, %v2810
    %v3172 = vpop.permute.xlu0 %3171
    %3173 = vset.pattern.permute.xlu0 0
    %3174 = vperm.xlu0 %3173, %v2811
    %v3175 = vpop.permute.xlu0 %3174
    %3176 = vset.pattern.permute.xlu0 0
    %3177 = vperm.xlu0 %3176, %v2812
    %v3178 = vpop.permute.xlu0 %3177
    %3179 = vset.pattern.permute.xlu0 0
    %3180 = vperm.xlu0 %3179, %v2813
    %v3181 = vpop.permute.xlu0 %3180
    %3182 = vset.pattern.permute.xlu0 0
    %3183 = vperm.xlu0 %3182, %v2814
    %v3184 = vpop.permute.xlu0 %3183
    %3185 = vset.pattern.permute.xlu0 0
    %3186 = vperm.xlu0 %3185, %v2815
    %v3187 = vpop.permute.xlu0 %3186
    %3188 = vset.pattern.permute.xlu0 0
    %3189 = vperm.xlu0 %3188, %v2816
    %v3190 = vpop.permute.xlu0 %3189
    %3191 = vset.pattern.permute.xlu0 0
    %3192 = vperm.xlu0 %3191, %v2817
    %v3193 = vpop.permute.xlu0 %3192
    %3194 = vset.pattern.permute.xlu0 0
    %3195 = vperm.xlu0 %3194, %v2818
    %v3196 = vpop.permute.xlu0 %3195
    %3197 = vset.pattern.permute.xlu0 0
    %3198 = vperm.xlu0 %3197, %v2819
    %v3199 = vpop.permute.xlu0 %3198
    %3200 = vset.pattern.permute.xlu0 0
    %3201 = vperm.xlu0 %3200, %v2820
    %v3202 = vpop.permute.xlu0 %3201
    %3203 = vset.pattern.permute.xlu0 0
    %3204 = vperm.xlu0 %3203, %v2821
    %v3205 = vpop.permute.xlu0 %3204
    %3206 = vset.pattern.permute.xlu0 0
    %3207 = vperm.xlu0 %3206, %v2822
    %v3208 = vpop.permute.xlu0 %3207
    %3209 = vset.pattern.permute.xlu0 0
    %3210 = vperm.xlu0 %3209, %v2823
    %v3211 = vpop.permute.xlu0 %3210
    %3212 = vset.pattern.permute.xlu0 0
    %3213 = vperm.xlu0 %3212, %v2824
    %v3214 = vpop.permute.xlu0 %3213
    %3215 = vset.pattern.permute.xlu0 0
    %3216 = vperm.xlu0 %3215, %v2825
    %v3217 = vpop.permute.xlu0 %3216
    %3218 = vset.pattern.permute.xlu0 0
    %3219 = vperm.xlu0 %3218, %v2826
    %v3220 = vpop.permute.xlu0 %3219
    %3221 = vset.pattern.permute.xlu0 0
    %3222 = vperm.xlu0 %3221, %v2827
    %v3223 = vpop.permute.xlu0 %3222
    %3224 = vset.pattern.permute.xlu0 0
    %3225 = vperm.xlu0 %3224, %v2828
    %v3226 = vpop.permute.xlu0 %3225
    %3227 = vset.pattern.permute.xlu0 0
    %3228 = vperm.xlu0 %3227, %v2829
    %v3229 = vpop.permute.xlu0 %3228
    %3230 = vset.pattern.permute.xlu0 0
    %3231 = vperm.xlu0 %3230, %v2830
    %v3232 = vpop.permute.xlu0 %3231
    %3233 = vset.pattern.permute.xlu0 0
    %3234 = vperm.xlu0 %3233, %v2831
    %v3235 = vpop.permute.xlu0 %3234
    %3236 = vset.pattern.permute.xlu0 0
    %3237 = vperm.xlu0 %3236, %v2832
    %v3238 = vpop.permute.xlu0 %3237
    %3239 = vset.pattern.permute.xlu0 0
    %3240 = vperm.xlu0 %3239, %v2833
    %v3241 = vpop.permute.xlu0 %3240
    %3242 = vset.pattern.permute.xlu0 0
    %3243 = vperm.xlu0 %3242, %v2834
    %v3244 = vpop.permute.xlu0 %3243
    %3245 = vset.pattern.permute.xlu0 0
    %3246 = vperm.xlu0 %3245, %v2835
    %v3247 = vpop.permute.xlu0 %3246
    %3248 = vset.pattern.permute.xlu0 0
    %3249 = vperm.xlu0 %3248, %v2836
    %v3250 = vpop.permute.xlu0 %3249
    %3251 = vset.pattern.permute.xlu0 0
    %3252 = vperm.xlu0 %3251, %v2837
    %v3253 = vpop.permute.xlu0 %3252
    %3254 = vset.pattern.permute.xlu0 0
    %3255 = vperm.xlu0 %3254, %v2838
    %v3256 = vpop.permute.xlu0 %3255
    %3257 = vset.pattern.permute.xlu0 0
    %3258 = vperm.xlu0 %3257, %v2839
    %v3259 = vpop.permute.xlu0 %3258
    %3260 = vset.pattern.permute.xlu0 0
    %3261 = vperm.xlu0 %3260, %v2840
    %v3262 = vpop.permute.xlu0 %3261
    %3263 = vset.pattern.permute.xlu0 0
    %3264 = vperm.xlu0 %3263, %v2841
    %v3265 = vpop.permute.xlu0 %3264
    %3266 = vset.pattern.permute.xlu0 0
    %3267 = vperm.xlu0 %3266, %v2842
    %v3268 = vpop.permute.xlu0 %3267
    %3269 = vset.pattern.permute.xlu0 0
    %3270 = vperm.xlu0 %3269, %v2843
    %v3271 = vpop.permute.xlu0 %3270
    %3272 = vset.pattern.permute.xlu0 0
    %3273 = vperm.xlu0 %3272, %v2844
    %v3274 = vpop.permute.xlu0 %3273
    %3275 = vset.pattern.permute.xlu0 0
    %3276 = vperm.xlu0 %3275, %v2845
    %v3277 = vpop.permute.xlu0 %3276
    %3278 = vset.pattern.permute.xlu0 0
    %3279 = vperm.xlu0 %3278, %v2846
    %v3280 = vpop.permute.xlu0 %3279
    %3281 = vset.pattern.permute.xlu0 0
    %3282 = vperm.xlu0 %3281, %v2847
    %v3283 = vpop.permute.xlu0 %3282
    %3284 = vset.pattern.permute.xlu0 0
    %3285 = vperm.xlu0 %3284, %v2848
    %v3286 = vpop.permute.xlu0 %3285
    %3287 = vset.pattern.permute.xlu0 0
    %3288 = vperm.xlu0 %3287, %v2849
    %v3289 = vpop.permute.xlu0 %3288
    %3290 = vset.pattern.permute.xlu0 0
    %3291 = vperm.xlu0 %3290, %v2850
    %v3292 = vpop.permute.xlu0 %3291
    %3293 = vset.pattern.permute.xlu0 0
    %3294 = vperm.xlu0 %3293, %v2851
    %v3295 = vpop.permute.xlu0 %3294
    %3296 = vset.pattern.permute.xlu0 0
    %3297 = vperm.xlu0 %3296, %v2852
    %v3298 = vpop.permute.xlu0 %3297
    %3299 = vset.pattern.permute.xlu0 0
    %3300 = vperm.xlu0 %3299, %v2853
    %v3301 = vpop.permute.xlu0 %3300
    %3302 = vset.pattern.permute.xlu0 0
    %3303 = vperm.xlu0 %3302, %v2854
    %v3304 = vpop.permute.xlu0 %3303
    %3305 = vset.pattern.permute.xlu0 0
    %3306 = vperm.xlu0 %3305, %v2855
    %v3307 = vpop.permute.xlu0 %3306
    %3308 = vset.pattern.permute.xlu0 0
    %3309 = vperm.xlu0 %3308, %v2856
    %v3310 = vpop.permute.xlu0 %3309
    %3311 = vset.pattern.permute.xlu0 0
    %3312 = vperm.xlu0 %3311, %v2857
    %v3313 = vpop.permute.xlu0 %3312
    %3314 = vset.pattern.permute.xlu0 0
    %3315 = vperm.xlu0 %3314, %v2858
    %v3316 = vpop.permute.xlu0 %3315
    %3317 = vset.pattern.permute.xlu0 0
    %3318 = vperm.xlu0 %3317, %v2859
    %v3319 = vpop.permute.xlu0 %3318
    %3320 = vset.pattern.permute.xlu0 0
    %3321 = vperm.xlu0 %3320, %v2860
    %v3322 = vpop.permute.xlu0 %3321
    %3323 = vset.pattern.permute.xlu0 0
    %3324 = vperm.xlu0 %3323, %v2861
    %v3325 = vpop.permute.xlu0 %3324
    %3326 = vset.pattern.permute.xlu0 0
    %3327 = vperm.xlu0 %3326, %v2862
    %v3328 = vpop.permute.xlu0 %3327
    %3329 = vset.pattern.permute.xlu0 0
    %3330 = vperm.xlu0 %3329, %v2863
    %v3331 = vpop.permute.xlu0 %3330
    %3332 = vset.pattern.permute.xlu0 0
    %3333 = vperm.xlu0 %3332, %v2864
    %v3334 = vpop.permute.xlu0 %3333
    %3335 = vset.pattern.permute.xlu0 0
    %3336 = vperm.xlu0 %3335, %v2865
    %v3337 = vpop.permute.xlu0 %3336
    %3338 = vset.pattern.permute.xlu0 0
    %3339 = vperm.xlu0 %3338, %v2866
    %v3340 = vpop.permute.xlu0 %3339
    %3341 = vset.pattern.permute.xlu0 0
    %3342 = vperm.xlu0 %3341, %v2867
    %v3343 = vpop.permute.xlu0 %3342
    %3344 = vset.pattern.permute.xlu0 0
    %3345 = vperm.xlu0 %3344, %v2868
    %v3346 = vpop.permute.xlu0 %3345
    %3347 = vset.pattern.permute.xlu0 0
    %3348 = vperm.xlu0 %3347, %v2869
    %v3349 = vpop.permute.xlu0 %3348
    %3350 = vset.pattern.permute.xlu0 0
    %3351 = vperm.xlu0 %3350, %v2870
    %v3352 = vpop.permute.xlu0 %3351
    %3353 = vset.pattern.permute.xlu0 0
    %3354 = vperm.xlu0 %3353, %v2871
    %v3355 = vpop.permute.xlu0 %3354
    %3356 = vset.pattern.permute.xlu0 0
    %3357 = vperm.xlu0 %3356, %v2872
    %v3358 = vpop.permute.xlu0 %3357
    %3359 = vset.pattern.permute.xlu0 0
    %3360 = vperm.xlu0 %3359, %v2873
    %v3361 = vpop.permute.xlu0 %3360
    %3362 = vset.pattern.permute.xlu0 0
    %3363 = vperm.xlu0 %3362, %v2874
    %v3364 = vpop.permute.xlu0 %3363
    %3365 = vset.pattern.permute.xlu0 0
    %3366 = vperm.xlu0 %3365, %v2875
    %v3367 = vpop.permute.xlu0 %3366
    %3368 = vset.pattern.permute.xlu0 0
    %3369 = vperm.xlu0 %3368, %v2876
    %v3370 = vpop.permute.xlu0 %3369
    %3371 = vset.pattern.permute.xlu0 0
    %3372 = vperm.xlu0 %3371, %v2877
    %v3373 = vpop.permute.xlu0 %3372
    %3374 = vset.pattern.permute.xlu0 0
    %3375 = vperm.xlu0 %3374, %v2878
    %v3376 = vpop.permute.xlu0 %3375
    %3377 = vset.pattern.permute.xlu0 0
    %3378 = vperm.xlu0 %3377, %v2879
    %v3379 = vpop.permute.xlu0 %3378
    %3380 = vset.pattern.permute.xlu0 0
    %3381 = vperm.xlu0 %3380, %v2880
    %v3382 = vpop.permute.xlu0 %3381
    %3383 = vset.pattern.permute.xlu0 0
    %3384 = vperm.xlu0 %3383, %v2881
    %v3385 = vpop.permute.xlu0 %3384
    %3386 = vset.pattern.permute.xlu0 0
    %3387 = vperm.xlu0 %3386, %v2882
    %v3388 = vpop.permute.xlu0 %3387
    %3389 = vset.pattern.permute.xlu0 0
    %3390 = vperm.xlu0 %3389, %v2883
    %v3391 = vpop.permute.xlu0 %3390
    %3392 = vset.pattern.permute.xlu0 0
    %3393 = vperm.xlu0 %3392, %v2884
    %v3394 = vpop.permute.xlu0 %3393
    %3395 = vset.pattern.permute.xlu0 0
    %3396 = vperm.xlu0 %3395, %v2885
    %v3397 = vpop.permute.xlu0 %3396
    %v3398 = vlaneseq
    %v3399 = vand.u32 %v3398, 127
    %v3400 = vlaneseq
    %v3401 = vshrl.u32 %v3400, 7
    %v3402 = vsub.s32 %v3399, %v3401
    %v3403 = vrot.slane %v3016, %v3402
    %v3404 = vadd.s32 %v3399, 4294967288
    %v3405 = vlaneseq
    %v3406 = vshrl.u32 %v3405, 7
    %v3407 = vsub.s32 %v3404, %v3406
    %v3408 = vrot.slane %v3019, %v3407
    %vm3409 = vcmask 130112
    %v3410 = vsel %vm3409, %v3408, %v3403
    %v3411 = vadd.s32 %v3399, 4294967280
    %v3412 = vlaneseq
    %v3413 = vshrl.u32 %v3412, 7
    %v3414 = vsub.s32 %v3411, %v3413
    %v3415 = vrot.slane %v3022, %v3414
    %vm3416 = vcmask 195712
    %v3417 = vsel %vm3416, %v3415, %v3410
    %v3418 = vadd.s32 %v3399, 4294967272
    %v3419 = vlaneseq
    %v3420 = vshrl.u32 %v3419, 7
    %v3421 = vsub.s32 %v3418, %v3420
    %v3422 = vrot.slane %v3025, %v3421
    %vm3423 = vcmask 261312
    %v3424 = vsel %vm3423, %v3422, %v3417
    %v3425 = vadd.s32 %v3399, 4294967264
    %v3426 = vlaneseq
    %v3427 = vshrl.u32 %v3426, 7
    %v3428 = vsub.s32 %v3425, %v3427
    %v3429 = vrot.slane %v3028, %v3428
    %vm3430 = vcmask 326912
    %v3431 = vsel %vm3430, %v3429, %v3424
    %v3432 = vadd.s32 %v3399, 4294967256
    %v3433 = vlaneseq
    %v3434 = vshrl.u32 %v3433, 7
    %v3435 = vsub.s32 %v3432, %v3434
    %v3436 = vrot.slane %v3031, %v3435
    %vm3437 = vcmask 392512
    %v3438 = vsel %vm3437, %v3436, %v3431
    %v3439 = vadd.s32 %v3399, 4294967248
    %v3440 = vlaneseq
    %v3441 = vshrl.u32 %v3440, 7
    %v3442 = vsub.s32 %v3439, %v3441
    %v3443 = vrot.slane %v3034, %v3442
    %vm3444 = vcmask 458112
    %v3445 = vsel %vm3444, %v3443, %v3438
    %v3446 = vadd.s32 %v3399, 4294967240
    %v3447 = vlaneseq
    %v3448 = vshrl.u32 %v3447, 7
    %v3449 = vsub.s32 %v3446, %v3448
    %v3450 = vrot.slane %v3037, %v3449
    %vm3451 = vcmask 523712
    %v3452 = vsel %vm3451, %v3450, %v3445
    %v3453 = vadd.s32 %v3399, 4294967232
    %v3454 = vlaneseq
    %v3455 = vshrl.u32 %v3454, 7
    %v3456 = vsub.s32 %v3453, %v3455
    %v3457 = vrot.slane %v3040, %v3456
    %vm3458 = vcmask 589312
    %v3459 = vsel %vm3458, %v3457, %v3452
    %v3460 = vadd.s32 %v3399, 4294967224
    %v3461 = vlaneseq
    %v3462 = vshrl.u32 %v3461, 7
    %v3463 = vsub.s32 %v3460, %v3462
    %v3464 = vrot.slane %v3043, %v3463
    %vm3465 = vcmask 654912
    %v3466 = vsel %vm3465, %v3464, %v3459
    %v3467 = vadd.s32 %v3399, 4294967216
    %v3468 = vlaneseq
    %v3469 = vshrl.u32 %v3468, 7
    %v3470 = vsub.s32 %v3467, %v3469
    %v3471 = vrot.slane %v3046, %v3470
    %vm3472 = vcmask 720512
    %v3473 = vsel %vm3472, %v3471, %v3466
    %v3474 = vadd.s32 %v3399, 4294967208
    %v3475 = vlaneseq
    %v3476 = vshrl.u32 %v3475, 7
    %v3477 = vsub.s32 %v3474, %v3476
    %v3478 = vrot.slane %v3049, %v3477
    %vm3479 = vcmask 786112
    %v3480 = vsel %vm3479, %v3478, %v3473
    %v3481 = vadd.s32 %v3399, 4294967200
    %v3482 = vlaneseq
    %v3483 = vshrl.u32 %v3482, 7
    %v3484 = vsub.s32 %v3481, %v3483
    %v3485 = vrot.slane %v3052, %v3484
    %vm3486 = vcmask 851712
    %v3487 = vsel %vm3486, %v3485, %v3480
    %v3488 = vadd.s32 %v3399, 4294967192
    %v3489 = vlaneseq
    %v3490 = vshrl.u32 %v3489, 7
    %v3491 = vsub.s32 %v3488, %v3490
    %v3492 = vrot.slane %v3055, %v3491
    %vm3493 = vcmask 917312
    %v3494 = vsel %vm3493, %v3492, %v3487
    %v3495 = vadd.s32 %v3399, 4294967184
    %v3496 = vlaneseq
    %v3497 = vshrl.u32 %v3496, 7
    %v3498 = vsub.s32 %v3495, %v3497
    %v3499 = vrot.slane %v3058, %v3498
    %vm3500 = vcmask 982912
    %v3501 = vsel %vm3500, %v3499, %v3494
    %v3502 = vadd.s32 %v3399, 4294967176
    %v3503 = vlaneseq
    %v3504 = vshrl.u32 %v3503, 7
    %v3505 = vsub.s32 %v3502, %v3504
    %v3506 = vrot.slane %v3061, %v3505
    %vm3507 = vcmask 1048512
    %v3508 = vsel %vm3507, %v3506, %v3501
    %v3509 = vlaneseq
    %v3510 = vshrl.u32 %v3509, 7
    %v3511 = vsub.s32 %v3399, %v3510
    %v3512 = vrot.slane %v3064, %v3511
    %v3513 = vlaneseq
    %v3514 = vshrl.u32 %v3513, 7
    %v3515 = vsub.s32 %v3404, %v3514
    %v3516 = vrot.slane %v3067, %v3515
    %v3517 = vsel %vm3409, %v3516, %v3512
    %v3518 = vlaneseq
    %v3519 = vshrl.u32 %v3518, 7
    %v3520 = vsub.s32 %v3411, %v3519
    %v3521 = vrot.slane %v3070, %v3520
    %v3522 = vsel %vm3416, %v3521, %v3517
    %v3523 = vlaneseq
    %v3524 = vshrl.u32 %v3523, 7
    %v3525 = vsub.s32 %v3418, %v3524
    %v3526 = vrot.slane %v3073, %v3525
    %v3527 = vsel %vm3423, %v3526, %v3522
    %v3528 = vlaneseq
    %v3529 = vshrl.u32 %v3528, 7
    %v3530 = vsub.s32 %v3425, %v3529
    %v3531 = vrot.slane %v3076, %v3530
    %v3532 = vsel %vm3430, %v3531, %v3527
    %v3533 = vlaneseq
    %v3534 = vshrl.u32 %v3533, 7
    %v3535 = vsub.s32 %v3432, %v3534
    %v3536 = vrot.slane %v3079, %v3535
    %v3537 = vsel %vm3437, %v3536, %v3532
    %v3538 = vlaneseq
    %v3539 = vshrl.u32 %v3538, 7
    %v3540 = vsub.s32 %v3439, %v3539
    %v3541 = vrot.slane %v3082, %v3540
    %v3542 = vsel %vm3444, %v3541, %v3537
    %v3543 = vlaneseq
    %v3544 = vshrl.u32 %v3543, 7
    %v3545 = vsub.s32 %v3446, %v3544
    %v3546 = vrot.slane %v3085, %v3545
    %v3547 = vsel %vm3451, %v3546, %v3542
    %v3548 = vlaneseq
    %v3549 = vshrl.u32 %v3548, 7
    %v3550 = vsub.s32 %v3453, %v3549
    %v3551 = vrot.slane %v3088, %v3550
    %v3552 = vsel %vm3458, %v3551, %v3547
    %v3553 = vlaneseq
    %v3554 = vshrl.u32 %v3553, 7
    %v3555 = vsub.s32 %v3460, %v3554
    %v3556 = vrot.slane %v3091, %v3555
    %v3557 = vsel %vm3465, %v3556, %v3552
    %v3558 = vlaneseq
    %v3559 = vshrl.u32 %v3558, 7
    %v3560 = vsub.s32 %v3467, %v3559
    %v3561 = vrot.slane %v3094, %v3560
    %v3562 = vsel %vm3472, %v3561, %v3557
    %v3563 = vlaneseq
    %v3564 = vshrl.u32 %v3563, 7
    %v3565 = vsub.s32 %v3474, %v3564
    %v3566 = vrot.slane %v3097, %v3565
    %v3567 = vsel %vm3479, %v3566, %v3562
    %v3568 = vlaneseq
    %v3569 = vshrl.u32 %v3568, 7
    %v3570 = vsub.s32 %v3481, %v3569
    %v3571 = vrot.slane %v3100, %v3570
    %v3572 = vsel %vm3486, %v3571, %v3567
    %v3573 = vlaneseq
    %v3574 = vshrl.u32 %v3573, 7
    %v3575 = vsub.s32 %v3488, %v3574
    %v3576 = vrot.slane %v3103, %v3575
    %v3577 = vsel %vm3493, %v3576, %v3572
    %v3578 = vlaneseq
    %v3579 = vshrl.u32 %v3578, 7
    %v3580 = vsub.s32 %v3495, %v3579
    %v3581 = vrot.slane %v3106, %v3580
    %v3582 = vsel %vm3500, %v3581, %v3577
    %v3583 = vlaneseq
    %v3584 = vshrl.u32 %v3583, 7
    %v3585 = vsub.s32 %v3502, %v3584
    %v3586 = vrot.slane %v3109, %v3585
    %v3587 = vsel %vm3507, %v3586, %v3582
    %v3588 = vlaneseq
    %v3589 = vshrl.u32 %v3588, 7
    %v3590 = vsub.s32 %v3399, %v3589
    %v3591 = vrot.slane %v3112, %v3590
    %v3592 = vlaneseq
    %v3593 = vshrl.u32 %v3592, 7
    %v3594 = vsub.s32 %v3404, %v3593
    %v3595 = vrot.slane %v3115, %v3594
    %v3596 = vsel %vm3409, %v3595, %v3591
    %v3597 = vlaneseq
    %v3598 = vshrl.u32 %v3597, 7
    %v3599 = vsub.s32 %v3411, %v3598
    %v3600 = vrot.slane %v3118, %v3599
    %v3601 = vsel %vm3416, %v3600, %v3596
    %v3602 = vlaneseq
    %v3603 = vshrl.u32 %v3602, 7
    %v3604 = vsub.s32 %v3418, %v3603
    %v3605 = vrot.slane %v3121, %v3604
    %v3606 = vsel %vm3423, %v3605, %v3601
    %v3607 = vlaneseq
    %v3608 = vshrl.u32 %v3607, 7
    %v3609 = vsub.s32 %v3425, %v3608
    %v3610 = vrot.slane %v3124, %v3609
    %v3611 = vsel %vm3430, %v3610, %v3606
    %v3612 = vlaneseq
    %v3613 = vshrl.u32 %v3612, 7
    %v3614 = vsub.s32 %v3432, %v3613
    %v3615 = vrot.slane %v3127, %v3614
    %v3616 = vsel %vm3437, %v3615, %v3611
    %v3617 = vlaneseq
    %v3618 = vshrl.u32 %v3617, 7
    %v3619 = vsub.s32 %v3439, %v3618
    %v3620 = vrot.slane %v3130, %v3619
    %v3621 = vsel %vm3444, %v3620, %v3616
    %v3622 = vlaneseq
    %v3623 = vshrl.u32 %v3622, 7
    %v3624 = vsub.s32 %v3446, %v3623
    %v3625 = vrot.slane %v3133, %v3624
    %v3626 = vsel %vm3451, %v3625, %v3621
    %v3627 = vlaneseq
    %v3628 = vshrl.u32 %v3627, 7
    %v3629 = vsub.s32 %v3453, %v3628
    %v3630 = vrot.slane %v3136, %v3629
    %v3631 = vsel %vm3458, %v3630, %v3626
    %v3632 = vlaneseq
    %v3633 = vshrl.u32 %v3632, 7
    %v3634 = vsub.s32 %v3460, %v3633
    %v3635 = vrot.slane %v3139, %v3634
    %v3636 = vsel %vm3465, %v3635, %v3631
    %v3637 = vlaneseq
    %v3638 = vshrl.u32 %v3637, 7
    %v3639 = vsub.s32 %v3467, %v3638
    %v3640 = vrot.slane %v3142, %v3639
    %v3641 = vsel %vm3472, %v3640, %v3636
    %v3642 = vlaneseq
    %v3643 = vshrl.u32 %v3642, 7
    %v3644 = vsub.s32 %v3474, %v3643
    %v3645 = vrot.slane %v3145, %v3644
    %v3646 = vsel %vm3479, %v3645, %v3641
    %v3647 = vlaneseq
    %v3648 = vshrl.u32 %v3647, 7
    %v3649 = vsub.s32 %v3481, %v3648
    %v3650 = vrot.slane %v3148, %v3649
    %v3651 = vsel %vm3486, %v3650, %v3646
    %v3652 = vlaneseq
    %v3653 = vshrl.u32 %v3652, 7
    %v3654 = vsub.s32 %v3488, %v3653
    %v3655 = vrot.slane %v3151, %v3654
    %v3656 = vsel %vm3493, %v3655, %v3651
    %v3657 = vlaneseq
    %v3658 = vshrl.u32 %v3657, 7
    %v3659 = vsub.s32 %v3495, %v3658
    %v3660 = vrot.slane %v3154, %v3659
    %v3661 = vsel %vm3500, %v3660, %v3656
    %v3662 = vlaneseq
    %v3663 = vshrl.u32 %v3662, 7
    %v3664 = vsub.s32 %v3502, %v3663
    %v3665 = vrot.slane %v3157, %v3664
    %v3666 = vsel %vm3507, %v3665, %v3661
    %v3667 = vlaneseq
    %v3668 = vshrl.u32 %v3667, 7
    %v3669 = vsub.s32 %v3399, %v3668
    %v3670 = vrot.slane %v3160, %v3669
    %v3671 = vlaneseq
    %v3672 = vshrl.u32 %v3671, 7
    %v3673 = vsub.s32 %v3404, %v3672
    %v3674 = vrot.slane %v3163, %v3673
    %v3675 = vsel %vm3409, %v3674, %v3670
    %v3676 = vlaneseq
    %v3677 = vshrl.u32 %v3676, 7
    %v3678 = vsub.s32 %v3411, %v3677
    %v3679 = vrot.slane %v3166, %v3678
    %v3680 = vsel %vm3416, %v3679, %v3675
    %v3681 = vlaneseq
    %v3682 = vshrl.u32 %v3681, 7
    %v3683 = vsub.s32 %v3418, %v3682
    %v3684 = vrot.slane %v3169, %v3683
    %v3685 = vsel %vm3423, %v3684, %v3680
    %v3686 = vlaneseq
    %v3687 = vshrl.u32 %v3686, 7
    %v3688 = vsub.s32 %v3425, %v3687
    %v3689 = vrot.slane %v3172, %v3688
    %v3690 = vsel %vm3430, %v3689, %v3685
    %v3691 = vlaneseq
    %v3692 = vshrl.u32 %v3691, 7
    %v3693 = vsub.s32 %v3432, %v3692
    %v3694 = vrot.slane %v3175, %v3693
    %v3695 = vsel %vm3437, %v3694, %v3690
    %v3696 = vlaneseq
    %v3697 = vshrl.u32 %v3696, 7
    %v3698 = vsub.s32 %v3439, %v3697
    %v3699 = vrot.slane %v3178, %v3698
    %v3700 = vsel %vm3444, %v3699, %v3695
    %v3701 = vlaneseq
    %v3702 = vshrl.u32 %v3701, 7
    %v3703 = vsub.s32 %v3446, %v3702
    %v3704 = vrot.slane %v3181, %v3703
    %v3705 = vsel %vm3451, %v3704, %v3700
    %v3706 = vlaneseq
    %v3707 = vshrl.u32 %v3706, 7
    %v3708 = vsub.s32 %v3453, %v3707
    %v3709 = vrot.slane %v3184, %v3708
    %v3710 = vsel %vm3458, %v3709, %v3705
    %v3711 = vlaneseq
    %v3712 = vshrl.u32 %v3711, 7
    %v3713 = vsub.s32 %v3460, %v3712
    %v3714 = vrot.slane %v3187, %v3713
    %v3715 = vsel %vm3465, %v3714, %v3710
    %v3716 = vlaneseq
    %v3717 = vshrl.u32 %v3716, 7
    %v3718 = vsub.s32 %v3467, %v3717
    %v3719 = vrot.slane %v3190, %v3718
    %v3720 = vsel %vm3472, %v3719, %v3715
    %v3721 = vlaneseq
    %v3722 = vshrl.u32 %v3721, 7
    %v3723 = vsub.s32 %v3474, %v3722
    %v3724 = vrot.slane %v3193, %v3723
    %v3725 = vsel %vm3479, %v3724, %v3720
    %v3726 = vlaneseq
    %v3727 = vshrl.u32 %v3726, 7
    %v3728 = vsub.s32 %v3481, %v3727
    %v3729 = vrot.slane %v3196, %v3728
    %v3730 = vsel %vm3486, %v3729, %v3725
    %v3731 = vlaneseq
    %v3732 = vshrl.u32 %v3731, 7
    %v3733 = vsub.s32 %v3488, %v3732
    %v3734 = vrot.slane %v3199, %v3733
    %v3735 = vsel %vm3493, %v3734, %v3730
    %v3736 = vlaneseq
    %v3737 = vshrl.u32 %v3736, 7
    %v3738 = vsub.s32 %v3495, %v3737
    %v3739 = vrot.slane %v3202, %v3738
    %v3740 = vsel %vm3500, %v3739, %v3735
    %v3741 = vlaneseq
    %v3742 = vshrl.u32 %v3741, 7
    %v3743 = vsub.s32 %v3502, %v3742
    %v3744 = vrot.slane %v3205, %v3743
    %v3745 = vsel %vm3507, %v3744, %v3740
    %v3746 = vlaneseq
    %v3747 = vshrl.u32 %v3746, 7
    %v3748 = vsub.s32 %v3399, %v3747
    %v3749 = vrot.slane %v3208, %v3748
    %v3750 = vlaneseq
    %v3751 = vshrl.u32 %v3750, 7
    %v3752 = vsub.s32 %v3404, %v3751
    %v3753 = vrot.slane %v3211, %v3752
    %v3754 = vsel %vm3409, %v3753, %v3749
    %v3755 = vlaneseq
    %v3756 = vshrl.u32 %v3755, 7
    %v3757 = vsub.s32 %v3411, %v3756
    %v3758 = vrot.slane %v3214, %v3757
    %v3759 = vsel %vm3416, %v3758, %v3754
    %v3760 = vlaneseq
    %v3761 = vshrl.u32 %v3760, 7
    %v3762 = vsub.s32 %v3418, %v3761
    %v3763 = vrot.slane %v3217, %v3762
    %v3764 = vsel %vm3423, %v3763, %v3759
    %v3765 = vlaneseq
    %v3766 = vshrl.u32 %v3765, 7
    %v3767 = vsub.s32 %v3425, %v3766
    %v3768 = vrot.slane %v3220, %v3767
    %v3769 = vsel %vm3430, %v3768, %v3764
    %v3770 = vlaneseq
    %v3771 = vshrl.u32 %v3770, 7
    %v3772 = vsub.s32 %v3432, %v3771
    %v3773 = vrot.slane %v3223, %v3772
    %v3774 = vsel %vm3437, %v3773, %v3769
    %v3775 = vlaneseq
    %v3776 = vshrl.u32 %v3775, 7
    %v3777 = vsub.s32 %v3439, %v3776
    %v3778 = vrot.slane %v3226, %v3777
    %v3779 = vsel %vm3444, %v3778, %v3774
    %v3780 = vlaneseq
    %v3781 = vshrl.u32 %v3780, 7
    %v3782 = vsub.s32 %v3446, %v3781
    %v3783 = vrot.slane %v3229, %v3782
    %v3784 = vsel %vm3451, %v3783, %v3779
    %v3785 = vlaneseq
    %v3786 = vshrl.u32 %v3785, 7
    %v3787 = vsub.s32 %v3453, %v3786
    %v3788 = vrot.slane %v3232, %v3787
    %v3789 = vsel %vm3458, %v3788, %v3784
    %v3790 = vlaneseq
    %v3791 = vshrl.u32 %v3790, 7
    %v3792 = vsub.s32 %v3460, %v3791
    %v3793 = vrot.slane %v3235, %v3792
    %v3794 = vsel %vm3465, %v3793, %v3789
    %v3795 = vlaneseq
    %v3796 = vshrl.u32 %v3795, 7
    %v3797 = vsub.s32 %v3467, %v3796
    %v3798 = vrot.slane %v3238, %v3797
    %v3799 = vsel %vm3472, %v3798, %v3794
    %v3800 = vlaneseq
    %v3801 = vshrl.u32 %v3800, 7
    %v3802 = vsub.s32 %v3474, %v3801
    %v3803 = vrot.slane %v3241, %v3802
    %v3804 = vsel %vm3479, %v3803, %v3799
    %v3805 = vlaneseq
    %v3806 = vshrl.u32 %v3805, 7
    %v3807 = vsub.s32 %v3481, %v3806
    %v3808 = vrot.slane %v3244, %v3807
    %v3809 = vsel %vm3486, %v3808, %v3804
    %v3810 = vlaneseq
    %v3811 = vshrl.u32 %v3810, 7
    %v3812 = vsub.s32 %v3488, %v3811
    %v3813 = vrot.slane %v3247, %v3812
    %v3814 = vsel %vm3493, %v3813, %v3809
    %v3815 = vlaneseq
    %v3816 = vshrl.u32 %v3815, 7
    %v3817 = vsub.s32 %v3495, %v3816
    %v3818 = vrot.slane %v3250, %v3817
    %v3819 = vsel %vm3500, %v3818, %v3814
    %v3820 = vlaneseq
    %v3821 = vshrl.u32 %v3820, 7
    %v3822 = vsub.s32 %v3502, %v3821
    %v3823 = vrot.slane %v3253, %v3822
    %v3824 = vsel %vm3507, %v3823, %v3819
    %v3825 = vlaneseq
    %v3826 = vshrl.u32 %v3825, 7
    %v3827 = vsub.s32 %v3399, %v3826
    %v3828 = vrot.slane %v3256, %v3827
    %v3829 = vlaneseq
    %v3830 = vshrl.u32 %v3829, 7
    %v3831 = vsub.s32 %v3404, %v3830
    %v3832 = vrot.slane %v3259, %v3831
    %v3833 = vsel %vm3409, %v3832, %v3828
    %v3834 = vlaneseq
    %v3835 = vshrl.u32 %v3834, 7
    %v3836 = vsub.s32 %v3411, %v3835
    %v3837 = vrot.slane %v3262, %v3836
    %v3838 = vsel %vm3416, %v3837, %v3833
    %v3839 = vlaneseq
    %v3840 = vshrl.u32 %v3839, 7
    %v3841 = vsub.s32 %v3418, %v3840
    %v3842 = vrot.slane %v3265, %v3841
    %v3843 = vsel %vm3423, %v3842, %v3838
    %v3844 = vlaneseq
    %v3845 = vshrl.u32 %v3844, 7
    %v3846 = vsub.s32 %v3425, %v3845
    %v3847 = vrot.slane %v3268, %v3846
    %v3848 = vsel %vm3430, %v3847, %v3843
    %v3849 = vlaneseq
    %v3850 = vshrl.u32 %v3849, 7
    %v3851 = vsub.s32 %v3432, %v3850
    %v3852 = vrot.slane %v3271, %v3851
    %v3853 = vsel %vm3437, %v3852, %v3848
    %v3854 = vlaneseq
    %v3855 = vshrl.u32 %v3854, 7
    %v3856 = vsub.s32 %v3439, %v3855
    %v3857 = vrot.slane %v3274, %v3856
    %v3858 = vsel %vm3444, %v3857, %v3853
    %v3859 = vlaneseq
    %v3860 = vshrl.u32 %v3859, 7
    %v3861 = vsub.s32 %v3446, %v3860
    %v3862 = vrot.slane %v3277, %v3861
    %v3863 = vsel %vm3451, %v3862, %v3858
    %v3864 = vlaneseq
    %v3865 = vshrl.u32 %v3864, 7
    %v3866 = vsub.s32 %v3453, %v3865
    %v3867 = vrot.slane %v3280, %v3866
    %v3868 = vsel %vm3458, %v3867, %v3863
    %v3869 = vlaneseq
    %v3870 = vshrl.u32 %v3869, 7
    %v3871 = vsub.s32 %v3460, %v3870
    %v3872 = vrot.slane %v3283, %v3871
    %v3873 = vsel %vm3465, %v3872, %v3868
    %v3874 = vlaneseq
    %v3875 = vshrl.u32 %v3874, 7
    %v3876 = vsub.s32 %v3467, %v3875
    %v3877 = vrot.slane %v3286, %v3876
    %v3878 = vsel %vm3472, %v3877, %v3873
    %v3879 = vlaneseq
    %v3880 = vshrl.u32 %v3879, 7
    %v3881 = vsub.s32 %v3474, %v3880
    %v3882 = vrot.slane %v3289, %v3881
    %v3883 = vsel %vm3479, %v3882, %v3878
    %v3884 = vlaneseq
    %v3885 = vshrl.u32 %v3884, 7
    %v3886 = vsub.s32 %v3481, %v3885
    %v3887 = vrot.slane %v3292, %v3886
    %v3888 = vsel %vm3486, %v3887, %v3883
    %v3889 = vlaneseq
    %v3890 = vshrl.u32 %v3889, 7
    %v3891 = vsub.s32 %v3488, %v3890
    %v3892 = vrot.slane %v3295, %v3891
    %v3893 = vsel %vm3493, %v3892, %v3888
    %v3894 = vlaneseq
    %v3895 = vshrl.u32 %v3894, 7
    %v3896 = vsub.s32 %v3495, %v3895
    %v3897 = vrot.slane %v3298, %v3896
    %v3898 = vsel %vm3500, %v3897, %v3893
    %v3899 = vlaneseq
    %v3900 = vshrl.u32 %v3899, 7
    %v3901 = vsub.s32 %v3502, %v3900
    %v3902 = vrot.slane %v3301, %v3901
    %v3903 = vsel %vm3507, %v3902, %v3898
    %v3904 = vlaneseq
    %v3905 = vshrl.u32 %v3904, 7
    %v3906 = vsub.s32 %v3399, %v3905
    %v3907 = vrot.slane %v3304, %v3906
    %v3908 = vlaneseq
    %v3909 = vshrl.u32 %v3908, 7
    %v3910 = vsub.s32 %v3404, %v3909
    %v3911 = vrot.slane %v3307, %v3910
    %v3912 = vsel %vm3409, %v3911, %v3907
    %v3913 = vlaneseq
    %v3914 = vshrl.u32 %v3913, 7
    %v3915 = vsub.s32 %v3411, %v3914
    %v3916 = vrot.slane %v3310, %v3915
    %v3917 = vsel %vm3416, %v3916, %v3912
    %v3918 = vlaneseq
    %v3919 = vshrl.u32 %v3918, 7
    %v3920 = vsub.s32 %v3418, %v3919
    %v3921 = vrot.slane %v3313, %v3920
    %v3922 = vsel %vm3423, %v3921, %v3917
    %v3923 = vlaneseq
    %v3924 = vshrl.u32 %v3923, 7
    %v3925 = vsub.s32 %v3425, %v3924
    %v3926 = vrot.slane %v3316, %v3925
    %v3927 = vsel %vm3430, %v3926, %v3922
    %v3928 = vlaneseq
    %v3929 = vshrl.u32 %v3928, 7
    %v3930 = vsub.s32 %v3432, %v3929
    %v3931 = vrot.slane %v3319, %v3930
    %v3932 = vsel %vm3437, %v3931, %v3927
    %v3933 = vlaneseq
    %v3934 = vshrl.u32 %v3933, 7
    %v3935 = vsub.s32 %v3439, %v3934
    %v3936 = vrot.slane %v3322, %v3935
    %v3937 = vsel %vm3444, %v3936, %v3932
    %v3938 = vlaneseq
    %v3939 = vshrl.u32 %v3938, 7
    %v3940 = vsub.s32 %v3446, %v3939
    %v3941 = vrot.slane %v3325, %v3940
    %v3942 = vsel %vm3451, %v3941, %v3937
    %v3943 = vlaneseq
    %v3944 = vshrl.u32 %v3943, 7
    %v3945 = vsub.s32 %v3453, %v3944
    %v3946 = vrot.slane %v3328, %v3945
    %v3947 = vsel %vm3458, %v3946, %v3942
    %v3948 = vlaneseq
    %v3949 = vshrl.u32 %v3948, 7
    %v3950 = vsub.s32 %v3460, %v3949
    %v3951 = vrot.slane %v3331, %v3950
    %v3952 = vsel %vm3465, %v3951, %v3947
    %v3953 = vlaneseq
    %v3954 = vshrl.u32 %v3953, 7
    %v3955 = vsub.s32 %v3467, %v3954
    %v3956 = vrot.slane %v3334, %v3955
    %v3957 = vsel %vm3472, %v3956, %v3952
    %v3958 = vlaneseq
    %v3959 = vshrl.u32 %v3958, 7
    %v3960 = vsub.s32 %v3474, %v3959
    %v3961 = vrot.slane %v3337, %v3960
    %v3962 = vsel %vm3479, %v3961, %v3957
    %v3963 = vlaneseq
    %v3964 = vshrl.u32 %v3963, 7
    %v3965 = vsub.s32 %v3481, %v3964
    %v3966 = vrot.slane %v3340, %v3965
    %v3967 = vsel %vm3486, %v3966, %v3962
    %v3968 = vlaneseq
    %v3969 = vshrl.u32 %v3968, 7
    %v3970 = vsub.s32 %v3488, %v3969
    %v3971 = vrot.slane %v3343, %v3970
    %v3972 = vsel %vm3493, %v3971, %v3967
    %v3973 = vlaneseq
    %v3974 = vshrl.u32 %v3973, 7
    %v3975 = vsub.s32 %v3495, %v3974
    %v3976 = vrot.slane %v3346, %v3975
    %v3977 = vsel %vm3500, %v3976, %v3972
    %v3978 = vlaneseq
    %v3979 = vshrl.u32 %v3978, 7
    %v3980 = vsub.s32 %v3502, %v3979
    %v3981 = vrot.slane %v3349, %v3980
    %v3982 = vsel %vm3507, %v3981, %v3977
    %v3983 = vlaneseq
    %v3984 = vshrl.u32 %v3983, 7
    %v3985 = vsub.s32 %v3399, %v3984
    %v3986 = vrot.slane %v3352, %v3985
    %v3987 = vlaneseq
    %v3988 = vshrl.u32 %v3987, 7
    %v3989 = vsub.s32 %v3404, %v3988
    %v3990 = vrot.slane %v3355, %v3989
    %v3991 = vsel %vm3409, %v3990, %v3986
    %v3992 = vlaneseq
    %v3993 = vshrl.u32 %v3992, 7
    %v3994 = vsub.s32 %v3411, %v3993
    %v3995 = vrot.slane %v3358, %v3994
    %v3996 = vsel %vm3416, %v3995, %v3991
    %v3997 = vlaneseq
    %v3998 = vshrl.u32 %v3997, 7
    %v3999 = vsub.s32 %v3418, %v3998
    %v4000 = vrot.slane %v3361, %v3999
    %v4001 = vsel %vm3423, %v4000, %v3996
    %v4002 = vlaneseq
    %v4003 = vshrl.u32 %v4002, 7
    %v4004 = vsub.s32 %v3425, %v4003
    %v4005 = vrot.slane %v3364, %v4004
    %v4006 = vsel %vm3430, %v4005, %v4001
    %v4007 = vlaneseq
    %v4008 = vshrl.u32 %v4007, 7
    %v4009 = vsub.s32 %v3432, %v4008
    %v4010 = vrot.slane %v3367, %v4009
    %v4011 = vsel %vm3437, %v4010, %v4006
    %v4012 = vlaneseq
    %v4013 = vshrl.u32 %v4012, 7
    %v4014 = vsub.s32 %v3439, %v4013
    %v4015 = vrot.slane %v3370, %v4014
    %v4016 = vsel %vm3444, %v4015, %v4011
    %v4017 = vlaneseq
    %v4018 = vshrl.u32 %v4017, 7
    %v4019 = vsub.s32 %v3446, %v4018
    %v4020 = vrot.slane %v3373, %v4019
    %v4021 = vsel %vm3451, %v4020, %v4016
    %v4022 = vlaneseq
    %v4023 = vshrl.u32 %v4022, 7
    %v4024 = vsub.s32 %v3453, %v4023
    %v4025 = vrot.slane %v3376, %v4024
    %v4026 = vsel %vm3458, %v4025, %v4021
    %v4027 = vlaneseq
    %v4028 = vshrl.u32 %v4027, 7
    %v4029 = vsub.s32 %v3460, %v4028
    %v4030 = vrot.slane %v3379, %v4029
    %v4031 = vsel %vm3465, %v4030, %v4026
    %v4032 = vlaneseq
    %v4033 = vshrl.u32 %v4032, 7
    %v4034 = vsub.s32 %v3467, %v4033
    %v4035 = vrot.slane %v3382, %v4034
    %v4036 = vsel %vm3472, %v4035, %v4031
    %v4037 = vlaneseq
    %v4038 = vshrl.u32 %v4037, 7
    %v4039 = vsub.s32 %v3474, %v4038
    %v4040 = vrot.slane %v3385, %v4039
    %v4041 = vsel %vm3479, %v4040, %v4036
    %v4042 = vlaneseq
    %v4043 = vshrl.u32 %v4042, 7
    %v4044 = vsub.s32 %v3481, %v4043
    %v4045 = vrot.slane %v3388, %v4044
    %v4046 = vsel %vm3486, %v4045, %v4041
    %v4047 = vlaneseq
    %v4048 = vshrl.u32 %v4047, 7
    %v4049 = vsub.s32 %v3488, %v4048
    %v4050 = vrot.slane %v3391, %v4049
    %v4051 = vsel %vm3493, %v4050, %v4046
    %v4052 = vlaneseq
    %v4053 = vshrl.u32 %v4052, 7
    %v4054 = vsub.s32 %v3495, %v4053
    %v4055 = vrot.slane %v3394, %v4054
    %v4056 = vsel %vm3500, %v4055, %v4051
    %v4057 = vlaneseq
    %v4058 = vshrl.u32 %v4057, 7
    %v4059 = vsub.s32 %v3502, %v4058
    %v4060 = vrot.slane %v3397, %v4059
    %v4061 = vsel %vm3507, %v4060, %v4056
    %vm4062 = vcmask 1041409
    %v4063 = vsel %vm4062, %v3587, %v3508
    %vm4064 = vcmask 1042434
    %v4065 = vsel %vm4064, %v3666, %v4063
    %vm4066 = vcmask 1043459
    %v4067 = vsel %vm4066, %v3745, %v4065
    %vm4068 = vcmask 1044484
    %v4069 = vsel %vm4068, %v3824, %v4067
    %vm4070 = vcmask 1045509
    %v4071 = vsel %vm4070, %v3903, %v4069
    %vm4072 = vcmask 1046534
    %v4073 = vsel %vm4072, %v3982, %v4071
    %vm4074 = vcmask 1047559
    %v4075 = vsel %vm4074, %v4061, %v4073
    %4077 = vmax.xlane.f32.xlu0 %v4075
    %v4078 = vpop.xlane.xlu0 %4077
    %v4080 = vlaneseq
    %v4081 = vshrl.u32 %v4080, 7
    %v4082 = vsub.s32 0, %v4081
    %v4083 = vrot.slane %v4078, %v4082
    %v4084 = vlaneseq
    %v4085 = vshrl.u32 %v4084, 7
    %v4086 = vsub.s32 1, %v4085
    %v4087 = vrot.slane %v4078, %v4086
    %v4088 = vlaneseq
    %v4089 = vshrl.u32 %v4088, 7
    %v4090 = vsub.s32 2, %v4089
    %v4091 = vrot.slane %v4078, %v4090
    %v4092 = vlaneseq
    %v4093 = vshrl.u32 %v4092, 7
    %v4094 = vsub.s32 3, %v4093
    %v4095 = vrot.slane %v4078, %v4094
    %v4096 = vlaneseq
    %v4097 = vshrl.u32 %v4096, 7
    %v4098 = vsub.s32 4, %v4097
    %v4099 = vrot.slane %v4078, %v4098
    %v4100 = vlaneseq
    %v4101 = vshrl.u32 %v4100, 7
    %v4102 = vsub.s32 5, %v4101
    %v4103 = vrot.slane %v4078, %v4102
    %v4104 = vlaneseq
    %v4105 = vshrl.u32 %v4104, 7
    %v4106 = vsub.s32 6, %v4105
    %v4107 = vrot.slane %v4078, %v4106
    %v4108 = vlaneseq
    %v4109 = vshrl.u32 %v4108, 7
    %v4110 = vsub.s32 7, %v4109
    %v4111 = vrot.slane %v4078, %v4110
    %v4120 = vsub.f32 %v2758, %v4083
    %v4121 = vsub.f32 %v2759, %v4083
    %v4122 = vsub.f32 %v2760, %v4083
    %v4123 = vsub.f32 %v2761, %v4083
    %v4124 = vsub.f32 %v2762, %v4083
    %v4125 = vsub.f32 %v2763, %v4083
    %v4126 = vsub.f32 %v2764, %v4083
    %v4127 = vsub.f32 %v2765, %v4083
    %v4128 = vsub.f32 %v2766, %v4083
    %v4129 = vsub.f32 %v2767, %v4083
    %v4130 = vsub.f32 %v2768, %v4083
    %v4131 = vsub.f32 %v2769, %v4083
    %v4132 = vsub.f32 %v2770, %v4083
    %v4133 = vsub.f32 %v2771, %v4083
    %v4134 = vsub.f32 %v2772, %v4083
    %v4135 = vsub.f32 %v2773, %v4083
    %v4136 = vsub.f32 %v2774, %v4087
    %v4137 = vsub.f32 %v2775, %v4087
    %v4138 = vsub.f32 %v2776, %v4087
    %v4139 = vsub.f32 %v2777, %v4087
    %v4140 = vsub.f32 %v2778, %v4087
    %v4141 = vsub.f32 %v2779, %v4087
    %v4142 = vsub.f32 %v2780, %v4087
    %v4143 = vsub.f32 %v2781, %v4087
    %v4144 = vsub.f32 %v2782, %v4087
    %v4145 = vsub.f32 %v2783, %v4087
    %v4146 = vsub.f32 %v2784, %v4087
    %v4147 = vsub.f32 %v2785, %v4087
    %v4148 = vsub.f32 %v2786, %v4087
    %v4149 = vsub.f32 %v2787, %v4087
    %v4150 = vsub.f32 %v2788, %v4087
    %v4151 = vsub.f32 %v2789, %v4087
    %v4152 = vsub.f32 %v2790, %v4091
    %v4153 = vsub.f32 %v2791, %v4091
    %v4154 = vsub.f32 %v2792, %v4091
    %v4155 = vsub.f32 %v2793, %v4091
    %v4156 = vsub.f32 %v2794, %v4091
    %v4157 = vsub.f32 %v2795, %v4091
    %v4158 = vsub.f32 %v2796, %v4091
    %v4159 = vsub.f32 %v2797, %v4091
    %v4160 = vsub.f32 %v2798, %v4091
    %v4161 = vsub.f32 %v2799, %v4091
    %v4162 = vsub.f32 %v2800, %v4091
    %v4163 = vsub.f32 %v2801, %v4091
    %v4164 = vsub.f32 %v2802, %v4091
    %v4165 = vsub.f32 %v2803, %v4091
    %v4166 = vsub.f32 %v2804, %v4091
    %v4167 = vsub.f32 %v2805, %v4091
    %v4168 = vsub.f32 %v2806, %v4095
    %v4169 = vsub.f32 %v2807, %v4095
    %v4170 = vsub.f32 %v2808, %v4095
    %v4171 = vsub.f32 %v2809, %v4095
    %v4172 = vsub.f32 %v2810, %v4095
    %v4173 = vsub.f32 %v2811, %v4095
    %v4174 = vsub.f32 %v2812, %v4095
    %v4175 = vsub.f32 %v2813, %v4095
    %v4176 = vsub.f32 %v2814, %v4095
    %v4177 = vsub.f32 %v2815, %v4095
    %v4178 = vsub.f32 %v2816, %v4095
    %v4179 = vsub.f32 %v2817, %v4095
    %v4180 = vsub.f32 %v2818, %v4095
    %v4181 = vsub.f32 %v2819, %v4095
    %v4182 = vsub.f32 %v2820, %v4095
    %v4183 = vsub.f32 %v2821, %v4095
    %v4184 = vsub.f32 %v2822, %v4099
    %v4185 = vsub.f32 %v2823, %v4099
    %v4186 = vsub.f32 %v2824, %v4099
    %v4187 = vsub.f32 %v2825, %v4099
    %v4188 = vsub.f32 %v2826, %v4099
    %v4189 = vsub.f32 %v2827, %v4099
    %v4190 = vsub.f32 %v2828, %v4099
    %v4191 = vsub.f32 %v2829, %v4099
    %v4192 = vsub.f32 %v2830, %v4099
    %v4193 = vsub.f32 %v2831, %v4099
    %v4194 = vsub.f32 %v2832, %v4099
    %v4195 = vsub.f32 %v2833, %v4099
    %v4196 = vsub.f32 %v2834, %v4099
    %v4197 = vsub.f32 %v2835, %v4099
    %v4198 = vsub.f32 %v2836, %v4099
    %v4199 = vsub.f32 %v2837, %v4099
    %v4200 = vsub.f32 %v2838, %v4103
    %v4201 = vsub.f32 %v2839, %v4103
    %v4202 = vsub.f32 %v2840, %v4103
    %v4203 = vsub.f32 %v2841, %v4103
    %v4204 = vsub.f32 %v2842, %v4103
    %v4205 = vsub.f32 %v2843, %v4103
    %v4206 = vsub.f32 %v2844, %v4103
    %v4207 = vsub.f32 %v2845, %v4103
    %v4208 = vsub.f32 %v2846, %v4103
    %v4209 = vsub.f32 %v2847, %v4103
    %v4210 = vsub.f32 %v2848, %v4103
    %v4211 = vsub.f32 %v2849, %v4103
    %v4212 = vsub.f32 %v2850, %v4103
    %v4213 = vsub.f32 %v2851, %v4103
    %v4214 = vsub.f32 %v2852, %v4103
    %v4215 = vsub.f32 %v2853, %v4103
    %v4216 = vsub.f32 %v2854, %v4107
    %v4217 = vsub.f32 %v2855, %v4107
    %v4218 = vsub.f32 %v2856, %v4107
    %v4219 = vsub.f32 %v2857, %v4107
    %v4220 = vsub.f32 %v2858, %v4107
    %v4221 = vsub.f32 %v2859, %v4107
    %v4222 = vsub.f32 %v2860, %v4107
    %v4223 = vsub.f32 %v2861, %v4107
    %v4224 = vsub.f32 %v2862, %v4107
    %v4225 = vsub.f32 %v2863, %v4107
    %v4226 = vsub.f32 %v2864, %v4107
    %v4227 = vsub.f32 %v2865, %v4107
    %v4228 = vsub.f32 %v2866, %v4107
    %v4229 = vsub.f32 %v2867, %v4107
    %v4230 = vsub.f32 %v2868, %v4107
    %v4231 = vsub.f32 %v2869, %v4107
    %v4232 = vsub.f32 %v2870, %v4111
    %v4233 = vsub.f32 %v2871, %v4111
    %v4234 = vsub.f32 %v2872, %v4111
    %v4235 = vsub.f32 %v2873, %v4111
    %v4236 = vsub.f32 %v2874, %v4111
    %v4237 = vsub.f32 %v2875, %v4111
    %v4238 = vsub.f32 %v2876, %v4111
    %v4239 = vsub.f32 %v2877, %v4111
    %v4240 = vsub.f32 %v2878, %v4111
    %v4241 = vsub.f32 %v2879, %v4111
    %v4242 = vsub.f32 %v2880, %v4111
    %v4243 = vsub.f32 %v2881, %v4111
    %v4244 = vsub.f32 %v2882, %v4111
    %v4245 = vsub.f32 %v2883, %v4111
    %v4246 = vsub.f32 %v2884, %v4111
    %v4247 = vsub.f32 %v2885, %v4111
    %v4248 = vmul.f32 %v4120, 1.442695
    %v4249 = vpow.pop %v4248
    %v4250 = vmul.f32 %v4121, 1.442695
    %v4251 = vpow.pop %v4250
    %v4252 = vmul.f32 %v4122, 1.442695
    %v4253 = vpow.pop %v4252
    %v4254 = vmul.f32 %v4123, 1.442695
    %v4255 = vpow.pop %v4254
    %v4256 = vmul.f32 %v4124, 1.442695
    %v4257 = vpow.pop %v4256
    %v4258 = vmul.f32 %v4125, 1.442695
    %v4259 = vpow.pop %v4258
    %v4260 = vmul.f32 %v4126, 1.442695
    %v4261 = vpow.pop %v4260
    %v4262 = vmul.f32 %v4127, 1.442695
    %v4263 = vpow.pop %v4262
    %v4264 = vmul.f32 %v4128, 1.442695
    %v4265 = vpow.pop %v4264
    %v4266 = vmul.f32 %v4129, 1.442695
    %v4267 = vpow.pop %v4266
    %v4268 = vmul.f32 %v4130, 1.442695
    %v4269 = vpow.pop %v4268
    %v4270 = vmul.f32 %v4131, 1.442695
    %v4271 = vpow.pop %v4270
    %v4272 = vmul.f32 %v4132, 1.442695
    %v4273 = vpow.pop %v4272
    %v4274 = vmul.f32 %v4133, 1.442695
    %v4275 = vpow.pop %v4274
    %v4276 = vmul.f32 %v4134, 1.442695
    %v4277 = vpow.pop %v4276
    %v4278 = vmul.f32 %v4135, 1.442695
    %v4279 = vpow.pop %v4278
    %v4280 = vmul.f32 %v4136, 1.442695
    %v4281 = vpow.pop %v4280
    %v4282 = vmul.f32 %v4137, 1.442695
    %v4283 = vpow.pop %v4282
    %v4284 = vmul.f32 %v4138, 1.442695
    %v4285 = vpow.pop %v4284
    %v4286 = vmul.f32 %v4139, 1.442695
    %v4287 = vpow.pop %v4286
    %v4288 = vmul.f32 %v4140, 1.442695
    %v4289 = vpow.pop %v4288
    %v4290 = vmul.f32 %v4141, 1.442695
    %v4291 = vpow.pop %v4290
    %v4292 = vmul.f32 %v4142, 1.442695
    %v4293 = vpow.pop %v4292
    %v4294 = vmul.f32 %v4143, 1.442695
    %v4295 = vpow.pop %v4294
    %v4296 = vmul.f32 %v4144, 1.442695
    %v4297 = vpow.pop %v4296
    %v4298 = vmul.f32 %v4145, 1.442695
    %v4299 = vpow.pop %v4298
    %v4300 = vmul.f32 %v4146, 1.442695
    %v4301 = vpow.pop %v4300
    %v4302 = vmul.f32 %v4147, 1.442695
    %v4303 = vpow.pop %v4302
    %v4304 = vmul.f32 %v4148, 1.442695
    %v4305 = vpow.pop %v4304
    %v4306 = vmul.f32 %v4149, 1.442695
    %v4307 = vpow.pop %v4306
    %v4308 = vmul.f32 %v4150, 1.442695
    %v4309 = vpow.pop %v4308
    %v4310 = vmul.f32 %v4151, 1.442695
    %v4311 = vpow.pop %v4310
    %v4312 = vmul.f32 %v4152, 1.442695
    %v4313 = vpow.pop %v4312
    %v4314 = vmul.f32 %v4153, 1.442695
    %v4315 = vpow.pop %v4314
    %v4316 = vmul.f32 %v4154, 1.442695
    %v4317 = vpow.pop %v4316
    %v4318 = vmul.f32 %v4155, 1.442695
    %v4319 = vpow.pop %v4318
    %v4320 = vmul.f32 %v4156, 1.442695
    %v4321 = vpow.pop %v4320
    %v4322 = vmul.f32 %v4157, 1.442695
    %v4323 = vpow.pop %v4322
    %v4324 = vmul.f32 %v4158, 1.442695
    %v4325 = vpow.pop %v4324
    %v4326 = vmul.f32 %v4159, 1.442695
    %v4327 = vpow.pop %v4326
    %v4328 = vmul.f32 %v4160, 1.442695
    %v4329 = vpow.pop %v4328
    %v4330 = vmul.f32 %v4161, 1.442695
    %v4331 = vpow.pop %v4330
    %v4332 = vmul.f32 %v4162, 1.442695
    %v4333 = vpow.pop %v4332
    %v4334 = vmul.f32 %v4163, 1.442695
    %v4335 = vpow.pop %v4334
    %v4336 = vmul.f32 %v4164, 1.442695
    %v4337 = vpow.pop %v4336
    %v4338 = vmul.f32 %v4165, 1.442695
    %v4339 = vpow.pop %v4338
    %v4340 = vmul.f32 %v4166, 1.442695
    %v4341 = vpow.pop %v4340
    %v4342 = vmul.f32 %v4167, 1.442695
    %v4343 = vpow.pop %v4342
    %v4344 = vmul.f32 %v4168, 1.442695
    %v4345 = vpow.pop %v4344
    %v4346 = vmul.f32 %v4169, 1.442695
    %v4347 = vpow.pop %v4346
    %v4348 = vmul.f32 %v4170, 1.442695
    %v4349 = vpow.pop %v4348
    %v4350 = vmul.f32 %v4171, 1.442695
    %v4351 = vpow.pop %v4350
    %v4352 = vmul.f32 %v4172, 1.442695
    %v4353 = vpow.pop %v4352
    %v4354 = vmul.f32 %v4173, 1.442695
    %v4355 = vpow.pop %v4354
    %v4356 = vmul.f32 %v4174, 1.442695
    %v4357 = vpow.pop %v4356
    %v4358 = vmul.f32 %v4175, 1.442695
    %v4359 = vpow.pop %v4358
    %v4360 = vmul.f32 %v4176, 1.442695
    %v4361 = vpow.pop %v4360
    %v4362 = vmul.f32 %v4177, 1.442695
    %v4363 = vpow.pop %v4362
    %v4364 = vmul.f32 %v4178, 1.442695
    %v4365 = vpow.pop %v4364
    %v4366 = vmul.f32 %v4179, 1.442695
    %v4367 = vpow.pop %v4366
    %v4368 = vmul.f32 %v4180, 1.442695
    %v4369 = vpow.pop %v4368
    %v4370 = vmul.f32 %v4181, 1.442695
    %v4371 = vpow.pop %v4370
    %v4372 = vmul.f32 %v4182, 1.442695
    %v4373 = vpow.pop %v4372
    %v4374 = vmul.f32 %v4183, 1.442695
    %v4375 = vpow.pop %v4374
    %v4376 = vmul.f32 %v4184, 1.442695
    %v4377 = vpow.pop %v4376
    %v4378 = vmul.f32 %v4185, 1.442695
    %v4379 = vpow.pop %v4378
    %v4380 = vmul.f32 %v4186, 1.442695
    %v4381 = vpow.pop %v4380
    %v4382 = vmul.f32 %v4187, 1.442695
    %v4383 = vpow.pop %v4382
    %v4384 = vmul.f32 %v4188, 1.442695
    %v4385 = vpow.pop %v4384
    %v4386 = vmul.f32 %v4189, 1.442695
    %v4387 = vpow.pop %v4386
    %v4388 = vmul.f32 %v4190, 1.442695
    %v4389 = vpow.pop %v4388
    %v4390 = vmul.f32 %v4191, 1.442695
    %v4391 = vpow.pop %v4390
    %v4392 = vmul.f32 %v4192, 1.442695
    %v4393 = vpow.pop %v4392
    %v4394 = vmul.f32 %v4193, 1.442695
    %v4395 = vpow.pop %v4394
    %v4396 = vmul.f32 %v4194, 1.442695
    %v4397 = vpow.pop %v4396
    %v4398 = vmul.f32 %v4195, 1.442695
    %v4399 = vpow.pop %v4398
    %v4400 = vmul.f32 %v4196, 1.442695
    %v4401 = vpow.pop %v4400
    %v4402 = vmul.f32 %v4197, 1.442695
    %v4403 = vpow.pop %v4402
    %v4404 = vmul.f32 %v4198, 1.442695
    %v4405 = vpow.pop %v4404
    %v4406 = vmul.f32 %v4199, 1.442695
    %v4407 = vpow.pop %v4406
    %v4408 = vmul.f32 %v4200, 1.442695
    %v4409 = vpow.pop %v4408
    %v4410 = vmul.f32 %v4201, 1.442695
    %v4411 = vpow.pop %v4410
    %v4412 = vmul.f32 %v4202, 1.442695
    %v4413 = vpow.pop %v4412
    %v4414 = vmul.f32 %v4203, 1.442695
    %v4415 = vpow.pop %v4414
    %v4416 = vmul.f32 %v4204, 1.442695
    %v4417 = vpow.pop %v4416
    %v4418 = vmul.f32 %v4205, 1.442695
    %v4419 = vpow.pop %v4418
    %v4420 = vmul.f32 %v4206, 1.442695
    %v4421 = vpow.pop %v4420
    %v4422 = vmul.f32 %v4207, 1.442695
    %v4423 = vpow.pop %v4422
    %v4424 = vmul.f32 %v4208, 1.442695
    %v4425 = vpow.pop %v4424
    %v4426 = vmul.f32 %v4209, 1.442695
    %v4427 = vpow.pop %v4426
    %v4428 = vmul.f32 %v4210, 1.442695
    %v4429 = vpow.pop %v4428
    %v4430 = vmul.f32 %v4211, 1.442695
    %v4431 = vpow.pop %v4430
    %v4432 = vmul.f32 %v4212, 1.442695
    %v4433 = vpow.pop %v4432
    %v4434 = vmul.f32 %v4213, 1.442695
    %v4435 = vpow.pop %v4434
    %v4436 = vmul.f32 %v4214, 1.442695
    %v4437 = vpow.pop %v4436
    %v4438 = vmul.f32 %v4215, 1.442695
    %v4439 = vpow.pop %v4438
    %v4440 = vmul.f32 %v4216, 1.442695
    %v4441 = vpow.pop %v4440
    %v4442 = vmul.f32 %v4217, 1.442695
    %v4443 = vpow.pop %v4442
    %v4444 = vmul.f32 %v4218, 1.442695
    %v4445 = vpow.pop %v4444
    %v4446 = vmul.f32 %v4219, 1.442695
    %v4447 = vpow.pop %v4446
    %v4448 = vmul.f32 %v4220, 1.442695
    %v4449 = vpow.pop %v4448
    %v4450 = vmul.f32 %v4221, 1.442695
    %v4451 = vpow.pop %v4450
    %v4452 = vmul.f32 %v4222, 1.442695
    %v4453 = vpow.pop %v4452
    %v4454 = vmul.f32 %v4223, 1.442695
    %v4455 = vpow.pop %v4454
    %v4456 = vmul.f32 %v4224, 1.442695
    %v4457 = vpow.pop %v4456
    %v4458 = vmul.f32 %v4225, 1.442695
    %v4459 = vpow.pop %v4458
    %v4460 = vmul.f32 %v4226, 1.442695
    %v4461 = vpow.pop %v4460
    %v4462 = vmul.f32 %v4227, 1.442695
    %v4463 = vpow.pop %v4462
    %v4464 = vmul.f32 %v4228, 1.442695
    %v4465 = vpow.pop %v4464
    %v4466 = vmul.f32 %v4229, 1.442695
    %v4467 = vpow.pop %v4466
    %v4468 = vmul.f32 %v4230, 1.442695
    %v4469 = vpow.pop %v4468
    %v4470 = vmul.f32 %v4231, 1.442695
    %v4471 = vpow.pop %v4470
    %v4472 = vmul.f32 %v4232, 1.442695
    %v4473 = vpow.pop %v4472
    %v4474 = vmul.f32 %v4233, 1.442695
    %v4475 = vpow.pop %v4474
    %v4476 = vmul.f32 %v4234, 1.442695
    %v4477 = vpow.pop %v4476
    %v4478 = vmul.f32 %v4235, 1.442695
    %v4479 = vpow.pop %v4478
    %v4480 = vmul.f32 %v4236, 1.442695
    %v4481 = vpow.pop %v4480
    %v4482 = vmul.f32 %v4237, 1.442695
    %v4483 = vpow.pop %v4482
    %v4484 = vmul.f32 %v4238, 1.442695
    %v4485 = vpow.pop %v4484
    %v4486 = vmul.f32 %v4239, 1.442695
    %v4487 = vpow.pop %v4486
    %v4488 = vmul.f32 %v4240, 1.442695
    %v4489 = vpow.pop %v4488
    %v4490 = vmul.f32 %v4241, 1.442695
    %v4491 = vpow.pop %v4490
    %v4492 = vmul.f32 %v4242, 1.442695
    %v4493 = vpow.pop %v4492
    %v4494 = vmul.f32 %v4243, 1.442695
    %v4495 = vpow.pop %v4494
    %v4496 = vmul.f32 %v4244, 1.442695
    %v4497 = vpow.pop %v4496
    %v4498 = vmul.f32 %v4245, 1.442695
    %v4499 = vpow.pop %v4498
    %v4500 = vmul.f32 %v4246, 1.442695
    %v4501 = vpow.pop %v4500
    %v4502 = vmul.f32 %v4247, 1.442695
    %v4503 = vpow.pop %v4502
    %4632 = vset.pattern.permute.xlu0 0
    %4633 = vperm.xlu0 %4632, %v4249
    %v4634 = vpop.permute.xlu0 %4633
    %4635 = vset.pattern.permute.xlu0 0
    %4636 = vperm.xlu0 %4635, %v4251
    %v4637 = vpop.permute.xlu0 %4636
    %4638 = vset.pattern.permute.xlu0 0
    %4639 = vperm.xlu0 %4638, %v4253
    %v4640 = vpop.permute.xlu0 %4639
    %4641 = vset.pattern.permute.xlu0 0
    %4642 = vperm.xlu0 %4641, %v4255
    %v4643 = vpop.permute.xlu0 %4642
    %4644 = vset.pattern.permute.xlu0 0
    %4645 = vperm.xlu0 %4644, %v4257
    %v4646 = vpop.permute.xlu0 %4645
    %4647 = vset.pattern.permute.xlu0 0
    %4648 = vperm.xlu0 %4647, %v4259
    %v4649 = vpop.permute.xlu0 %4648
    %4650 = vset.pattern.permute.xlu0 0
    %4651 = vperm.xlu0 %4650, %v4261
    %v4652 = vpop.permute.xlu0 %4651
    %4653 = vset.pattern.permute.xlu0 0
    %4654 = vperm.xlu0 %4653, %v4263
    %v4655 = vpop.permute.xlu0 %4654
    %4656 = vset.pattern.permute.xlu0 0
    %4657 = vperm.xlu0 %4656, %v4265
    %v4658 = vpop.permute.xlu0 %4657
    %4659 = vset.pattern.permute.xlu0 0
    %4660 = vperm.xlu0 %4659, %v4267
    %v4661 = vpop.permute.xlu0 %4660
    %4662 = vset.pattern.permute.xlu0 0
    %4663 = vperm.xlu0 %4662, %v4269
    %v4664 = vpop.permute.xlu0 %4663
    %4665 = vset.pattern.permute.xlu0 0
    %4666 = vperm.xlu0 %4665, %v4271
    %v4667 = vpop.permute.xlu0 %4666
    %4668 = vset.pattern.permute.xlu0 0
    %4669 = vperm.xlu0 %4668, %v4273
    %v4670 = vpop.permute.xlu0 %4669
    %4671 = vset.pattern.permute.xlu0 0
    %4672 = vperm.xlu0 %4671, %v4275
    %v4673 = vpop.permute.xlu0 %4672
    %4674 = vset.pattern.permute.xlu0 0
    %4675 = vperm.xlu0 %4674, %v4277
    %v4676 = vpop.permute.xlu0 %4675
    %4677 = vset.pattern.permute.xlu0 0
    %4678 = vperm.xlu0 %4677, %v4279
    %v4679 = vpop.permute.xlu0 %4678
    %4680 = vset.pattern.permute.xlu0 0
    %4681 = vperm.xlu0 %4680, %v4281
    %v4682 = vpop.permute.xlu0 %4681
    %4683 = vset.pattern.permute.xlu0 0
    %4684 = vperm.xlu0 %4683, %v4283
    %v4685 = vpop.permute.xlu0 %4684
    %4686 = vset.pattern.permute.xlu0 0
    %4687 = vperm.xlu0 %4686, %v4285
    %v4688 = vpop.permute.xlu0 %4687
    %4689 = vset.pattern.permute.xlu0 0
    %4690 = vperm.xlu0 %4689, %v4287
    %v4691 = vpop.permute.xlu0 %4690
    %4692 = vset.pattern.permute.xlu0 0
    %4693 = vperm.xlu0 %4692, %v4289
    %v4694 = vpop.permute.xlu0 %4693
    %4695 = vset.pattern.permute.xlu0 0
    %4696 = vperm.xlu0 %4695, %v4291
    %v4697 = vpop.permute.xlu0 %4696
    %4698 = vset.pattern.permute.xlu0 0
    %4699 = vperm.xlu0 %4698, %v4293
    %v4700 = vpop.permute.xlu0 %4699
    %4701 = vset.pattern.permute.xlu0 0
    %4702 = vperm.xlu0 %4701, %v4295
    %v4703 = vpop.permute.xlu0 %4702
    %4704 = vset.pattern.permute.xlu0 0
    %4705 = vperm.xlu0 %4704, %v4297
    %v4706 = vpop.permute.xlu0 %4705
    %4707 = vset.pattern.permute.xlu0 0
    %4708 = vperm.xlu0 %4707, %v4299
    %v4709 = vpop.permute.xlu0 %4708
    %4710 = vset.pattern.permute.xlu0 0
    %4711 = vperm.xlu0 %4710, %v4301
    %v4712 = vpop.permute.xlu0 %4711
    %4713 = vset.pattern.permute.xlu0 0
    %4714 = vperm.xlu0 %4713, %v4303
    %v4715 = vpop.permute.xlu0 %4714
    %4716 = vset.pattern.permute.xlu0 0
    %4717 = vperm.xlu0 %4716, %v4305
    %v4718 = vpop.permute.xlu0 %4717
    %4719 = vset.pattern.permute.xlu0 0
    %4720 = vperm.xlu0 %4719, %v4307
    %v4721 = vpop.permute.xlu0 %4720
    %4722 = vset.pattern.permute.xlu0 0
    %4723 = vperm.xlu0 %4722, %v4309
    %v4724 = vpop.permute.xlu0 %4723
    %4725 = vset.pattern.permute.xlu0 0
    %4726 = vperm.xlu0 %4725, %v4311
    %v4727 = vpop.permute.xlu0 %4726
    %4728 = vset.pattern.permute.xlu0 0
    %4729 = vperm.xlu0 %4728, %v4313
    %v4730 = vpop.permute.xlu0 %4729
    %4731 = vset.pattern.permute.xlu0 0
    %4732 = vperm.xlu0 %4731, %v4315
    %v4733 = vpop.permute.xlu0 %4732
    %4734 = vset.pattern.permute.xlu0 0
    %4735 = vperm.xlu0 %4734, %v4317
    %v4736 = vpop.permute.xlu0 %4735
    %4737 = vset.pattern.permute.xlu0 0
    %4738 = vperm.xlu0 %4737, %v4319
    %v4739 = vpop.permute.xlu0 %4738
    %4740 = vset.pattern.permute.xlu0 0
    %4741 = vperm.xlu0 %4740, %v4321
    %v4742 = vpop.permute.xlu0 %4741
    %4743 = vset.pattern.permute.xlu0 0
    %4744 = vperm.xlu0 %4743, %v4323
    %v4745 = vpop.permute.xlu0 %4744
    %4746 = vset.pattern.permute.xlu0 0
    %4747 = vperm.xlu0 %4746, %v4325
    %v4748 = vpop.permute.xlu0 %4747
    %4749 = vset.pattern.permute.xlu0 0
    %4750 = vperm.xlu0 %4749, %v4327
    %v4751 = vpop.permute.xlu0 %4750
    %4752 = vset.pattern.permute.xlu0 0
    %4753 = vperm.xlu0 %4752, %v4329
    %v4754 = vpop.permute.xlu0 %4753
    %4755 = vset.pattern.permute.xlu0 0
    %4756 = vperm.xlu0 %4755, %v4331
    %v4757 = vpop.permute.xlu0 %4756
    %4758 = vset.pattern.permute.xlu0 0
    %4759 = vperm.xlu0 %4758, %v4333
    %v4760 = vpop.permute.xlu0 %4759
    %4761 = vset.pattern.permute.xlu0 0
    %4762 = vperm.xlu0 %4761, %v4335
    %v4763 = vpop.permute.xlu0 %4762
    %4764 = vset.pattern.permute.xlu0 0
    %4765 = vperm.xlu0 %4764, %v4337
    %v4766 = vpop.permute.xlu0 %4765
    %4767 = vset.pattern.permute.xlu0 0
    %4768 = vperm.xlu0 %4767, %v4339
    %v4769 = vpop.permute.xlu0 %4768
    %4770 = vset.pattern.permute.xlu0 0
    %4771 = vperm.xlu0 %4770, %v4341
    %v4772 = vpop.permute.xlu0 %4771
    %4773 = vset.pattern.permute.xlu0 0
    %4774 = vperm.xlu0 %4773, %v4343
    %v4775 = vpop.permute.xlu0 %4774
    %4776 = vset.pattern.permute.xlu0 0
    %4777 = vperm.xlu0 %4776, %v4345
    %v4778 = vpop.permute.xlu0 %4777
    %4779 = vset.pattern.permute.xlu0 0
    %4780 = vperm.xlu0 %4779, %v4347
    %v4781 = vpop.permute.xlu0 %4780
    %4782 = vset.pattern.permute.xlu0 0
    %4783 = vperm.xlu0 %4782, %v4349
    %v4784 = vpop.permute.xlu0 %4783
    %4785 = vset.pattern.permute.xlu0 0
    %4786 = vperm.xlu0 %4785, %v4351
    %v4787 = vpop.permute.xlu0 %4786
    %4788 = vset.pattern.permute.xlu0 0
    %4789 = vperm.xlu0 %4788, %v4353
    %v4790 = vpop.permute.xlu0 %4789
    %4791 = vset.pattern.permute.xlu0 0
    %4792 = vperm.xlu0 %4791, %v4355
    %v4793 = vpop.permute.xlu0 %4792
    %4794 = vset.pattern.permute.xlu0 0
    %4795 = vperm.xlu0 %4794, %v4357
    %v4796 = vpop.permute.xlu0 %4795
    %4797 = vset.pattern.permute.xlu0 0
    %4798 = vperm.xlu0 %4797, %v4359
    %v4799 = vpop.permute.xlu0 %4798
    %4800 = vset.pattern.permute.xlu0 0
    %4801 = vperm.xlu0 %4800, %v4361
    %v4802 = vpop.permute.xlu0 %4801
    %4803 = vset.pattern.permute.xlu0 0
    %4804 = vperm.xlu0 %4803, %v4363
    %v4805 = vpop.permute.xlu0 %4804
    %4806 = vset.pattern.permute.xlu0 0
    %4807 = vperm.xlu0 %4806, %v4365
    %v4808 = vpop.permute.xlu0 %4807
    %4809 = vset.pattern.permute.xlu0 0
    %4810 = vperm.xlu0 %4809, %v4367
    %v4811 = vpop.permute.xlu0 %4810
    %4812 = vset.pattern.permute.xlu0 0
    %4813 = vperm.xlu0 %4812, %v4369
    %v4814 = vpop.permute.xlu0 %4813
    %4815 = vset.pattern.permute.xlu0 0
    %4816 = vperm.xlu0 %4815, %v4371
    %v4817 = vpop.permute.xlu0 %4816
    %4818 = vset.pattern.permute.xlu0 0
    %4819 = vperm.xlu0 %4818, %v4373
    %v4820 = vpop.permute.xlu0 %4819
    %4821 = vset.pattern.permute.xlu0 0
    %4822 = vperm.xlu0 %4821, %v4375
    %v4823 = vpop.permute.xlu0 %4822
    %4824 = vset.pattern.permute.xlu0 0
    %4825 = vperm.xlu0 %4824, %v4377
    %v4826 = vpop.permute.xlu0 %4825
    %4827 = vset.pattern.permute.xlu0 0
    %4828 = vperm.xlu0 %4827, %v4379
    %v4829 = vpop.permute.xlu0 %4828
    %4830 = vset.pattern.permute.xlu0 0
    %4831 = vperm.xlu0 %4830, %v4381
    %v4832 = vpop.permute.xlu0 %4831
    %4833 = vset.pattern.permute.xlu0 0
    %4834 = vperm.xlu0 %4833, %v4383
    %v4835 = vpop.permute.xlu0 %4834
    %4836 = vset.pattern.permute.xlu0 0
    %4837 = vperm.xlu0 %4836, %v4385
    %v4838 = vpop.permute.xlu0 %4837
    %4839 = vset.pattern.permute.xlu0 0
    %4840 = vperm.xlu0 %4839, %v4387
    %v4841 = vpop.permute.xlu0 %4840
    %4842 = vset.pattern.permute.xlu0 0
    %4843 = vperm.xlu0 %4842, %v4389
    %v4844 = vpop.permute.xlu0 %4843
    %4845 = vset.pattern.permute.xlu0 0
    %4846 = vperm.xlu0 %4845, %v4391
    %v4847 = vpop.permute.xlu0 %4846
    %4848 = vset.pattern.permute.xlu0 0
    %4849 = vperm.xlu0 %4848, %v4393
    %v4850 = vpop.permute.xlu0 %4849
    %4851 = vset.pattern.permute.xlu0 0
    %4852 = vperm.xlu0 %4851, %v4395
    %v4853 = vpop.permute.xlu0 %4852
    %4854 = vset.pattern.permute.xlu0 0
    %4855 = vperm.xlu0 %4854, %v4397
    %v4856 = vpop.permute.xlu0 %4855
    %4857 = vset.pattern.permute.xlu0 0
    %4858 = vperm.xlu0 %4857, %v4399
    %v4859 = vpop.permute.xlu0 %4858
    %4860 = vset.pattern.permute.xlu0 0
    %4861 = vperm.xlu0 %4860, %v4401
    %v4862 = vpop.permute.xlu0 %4861
    %4863 = vset.pattern.permute.xlu0 0
    %4864 = vperm.xlu0 %4863, %v4403
    %v4865 = vpop.permute.xlu0 %4864
    %4866 = vset.pattern.permute.xlu0 0
    %4867 = vperm.xlu0 %4866, %v4405
    %v4868 = vpop.permute.xlu0 %4867
    %4869 = vset.pattern.permute.xlu0 0
    %4870 = vperm.xlu0 %4869, %v4407
    %v4871 = vpop.permute.xlu0 %4870
    %4872 = vset.pattern.permute.xlu0 0
    %4873 = vperm.xlu0 %4872, %v4409
    %v4874 = vpop.permute.xlu0 %4873
    %4875 = vset.pattern.permute.xlu0 0
    %4876 = vperm.xlu0 %4875, %v4411
    %v4877 = vpop.permute.xlu0 %4876
    %4878 = vset.pattern.permute.xlu0 0
    %4879 = vperm.xlu0 %4878, %v4413
    %v4880 = vpop.permute.xlu0 %4879
    %4881 = vset.pattern.permute.xlu0 0
    %4882 = vperm.xlu0 %4881, %v4415
    %v4883 = vpop.permute.xlu0 %4882
    %4884 = vset.pattern.permute.xlu0 0
    %4885 = vperm.xlu0 %4884, %v4417
    %v4886 = vpop.permute.xlu0 %4885
    %4887 = vset.pattern.permute.xlu0 0
    %4888 = vperm.xlu0 %4887, %v4419
    %v4889 = vpop.permute.xlu0 %4888
    %4890 = vset.pattern.permute.xlu0 0
    %4891 = vperm.xlu0 %4890, %v4421
    %v4892 = vpop.permute.xlu0 %4891
    %4893 = vset.pattern.permute.xlu0 0
    %4894 = vperm.xlu0 %4893, %v4423
    %v4895 = vpop.permute.xlu0 %4894
    %4896 = vset.pattern.permute.xlu0 0
    %4897 = vperm.xlu0 %4896, %v4425
    %v4898 = vpop.permute.xlu0 %4897
    %4899 = vset.pattern.permute.xlu0 0
    %4900 = vperm.xlu0 %4899, %v4427
    %v4901 = vpop.permute.xlu0 %4900
    %4902 = vset.pattern.permute.xlu0 0
    %4903 = vperm.xlu0 %4902, %v4429
    %v4904 = vpop.permute.xlu0 %4903
    %4905 = vset.pattern.permute.xlu0 0
    %4906 = vperm.xlu0 %4905, %v4431
    %v4907 = vpop.permute.xlu0 %4906
    %4908 = vset.pattern.permute.xlu0 0
    %4909 = vperm.xlu0 %4908, %v4433
    %v4910 = vpop.permute.xlu0 %4909
    %4911 = vset.pattern.permute.xlu0 0
    %4912 = vperm.xlu0 %4911, %v4435
    %v4913 = vpop.permute.xlu0 %4912
    %4914 = vset.pattern.permute.xlu0 0
    %4915 = vperm.xlu0 %4914, %v4437
    %v4916 = vpop.permute.xlu0 %4915
    %4917 = vset.pattern.permute.xlu0 0
    %4918 = vperm.xlu0 %4917, %v4439
    %v4919 = vpop.permute.xlu0 %4918
    %4920 = vset.pattern.permute.xlu0 0
    %4921 = vperm.xlu0 %4920, %v4441
    %v4922 = vpop.permute.xlu0 %4921
    %4923 = vset.pattern.permute.xlu0 0
    %4924 = vperm.xlu0 %4923, %v4443
    %v4925 = vpop.permute.xlu0 %4924
    %4926 = vset.pattern.permute.xlu0 0
    %4927 = vperm.xlu0 %4926, %v4445
    %v4928 = vpop.permute.xlu0 %4927
    %4929 = vset.pattern.permute.xlu0 0
    %4930 = vperm.xlu0 %4929, %v4447
    %v4931 = vpop.permute.xlu0 %4930
    %4932 = vset.pattern.permute.xlu0 0
    %4933 = vperm.xlu0 %4932, %v4449
    %v4934 = vpop.permute.xlu0 %4933
    %4935 = vset.pattern.permute.xlu0 0
    %4936 = vperm.xlu0 %4935, %v4451
    %v4937 = vpop.permute.xlu0 %4936
    %4938 = vset.pattern.permute.xlu0 0
    %4939 = vperm.xlu0 %4938, %v4453
    %v4940 = vpop.permute.xlu0 %4939
    %4941 = vset.pattern.permute.xlu0 0
    %4942 = vperm.xlu0 %4941, %v4455
    %v4943 = vpop.permute.xlu0 %4942
    %4944 = vset.pattern.permute.xlu0 0
    %4945 = vperm.xlu0 %4944, %v4457
    %v4946 = vpop.permute.xlu0 %4945
    %4947 = vset.pattern.permute.xlu0 0
    %4948 = vperm.xlu0 %4947, %v4459
    %v4949 = vpop.permute.xlu0 %4948
    %4950 = vset.pattern.permute.xlu0 0
    %4951 = vperm.xlu0 %4950, %v4461
    %v4952 = vpop.permute.xlu0 %4951
    %4953 = vset.pattern.permute.xlu0 0
    %4954 = vperm.xlu0 %4953, %v4463
    %v4955 = vpop.permute.xlu0 %4954
    %4956 = vset.pattern.permute.xlu0 0
    %4957 = vperm.xlu0 %4956, %v4465
    %v4958 = vpop.permute.xlu0 %4957
    %4959 = vset.pattern.permute.xlu0 0
    %4960 = vperm.xlu0 %4959, %v4467
    %v4961 = vpop.permute.xlu0 %4960
    %4962 = vset.pattern.permute.xlu0 0
    %4963 = vperm.xlu0 %4962, %v4469
    %v4964 = vpop.permute.xlu0 %4963
    %4965 = vset.pattern.permute.xlu0 0
    %4966 = vperm.xlu0 %4965, %v4471
    %v4967 = vpop.permute.xlu0 %4966
    %4968 = vset.pattern.permute.xlu0 0
    %4969 = vperm.xlu0 %4968, %v4473
    %v4970 = vpop.permute.xlu0 %4969
    %4971 = vset.pattern.permute.xlu0 0
    %4972 = vperm.xlu0 %4971, %v4475
    %v4973 = vpop.permute.xlu0 %4972
    %4974 = vset.pattern.permute.xlu0 0
    %4975 = vperm.xlu0 %4974, %v4477
    %v4976 = vpop.permute.xlu0 %4975
    %4977 = vset.pattern.permute.xlu0 0
    %4978 = vperm.xlu0 %4977, %v4479
    %v4979 = vpop.permute.xlu0 %4978
    %4980 = vset.pattern.permute.xlu0 0
    %4981 = vperm.xlu0 %4980, %v4481
    %v4982 = vpop.permute.xlu0 %4981
    %4983 = vset.pattern.permute.xlu0 0
    %4984 = vperm.xlu0 %4983, %v4483
    %v4985 = vpop.permute.xlu0 %4984
    %4986 = vset.pattern.permute.xlu0 0
    %4987 = vperm.xlu0 %4986, %v4485
    %v4988 = vpop.permute.xlu0 %4987
    %4989 = vset.pattern.permute.xlu0 0
    %4990 = vperm.xlu0 %4989, %v4487
    %v4991 = vpop.permute.xlu0 %4990
    %4992 = vset.pattern.permute.xlu0 0
    %4993 = vperm.xlu0 %4992, %v4489
    %v4994 = vpop.permute.xlu0 %4993
    %4995 = vset.pattern.permute.xlu0 0
    %4996 = vperm.xlu0 %4995, %v4491
    %v4997 = vpop.permute.xlu0 %4996
    %4998 = vset.pattern.permute.xlu0 0
    %4999 = vperm.xlu0 %4998, %v4493
    %v5000 = vpop.permute.xlu0 %4999
    %5001 = vset.pattern.permute.xlu0 0
    %5002 = vperm.xlu0 %5001, %v4495
    %v5003 = vpop.permute.xlu0 %5002
    %5004 = vset.pattern.permute.xlu0 0
    %5005 = vperm.xlu0 %5004, %v4497
    %v5006 = vpop.permute.xlu0 %5005
    %5007 = vset.pattern.permute.xlu0 0
    %5008 = vperm.xlu0 %5007, %v4499
    %v5009 = vpop.permute.xlu0 %5008
    %5010 = vset.pattern.permute.xlu0 0
    %5011 = vperm.xlu0 %5010, %v4501
    %v5012 = vpop.permute.xlu0 %5011
    %5013 = vset.pattern.permute.xlu0 0
    %5014 = vperm.xlu0 %5013, %v4503
    %v5015 = vpop.permute.xlu0 %5014
    %v5016 = vlaneseq
    %v5017 = vshrl.u32 %v5016, 7
    %v5018 = vsub.s32 %v3399, %v5017
    %v5019 = vrot.slane %v4634, %v5018
    %v5020 = vlaneseq
    %v5021 = vshrl.u32 %v5020, 7
    %v5022 = vsub.s32 %v3404, %v5021
    %v5023 = vrot.slane %v4637, %v5022
    %v5024 = vsel %vm3409, %v5023, %v5019
    %v5025 = vlaneseq
    %v5026 = vshrl.u32 %v5025, 7
    %v5027 = vsub.s32 %v3411, %v5026
    %v5028 = vrot.slane %v4640, %v5027
    %v5029 = vsel %vm3416, %v5028, %v5024
    %v5030 = vlaneseq
    %v5031 = vshrl.u32 %v5030, 7
    %v5032 = vsub.s32 %v3418, %v5031
    %v5033 = vrot.slane %v4643, %v5032
    %v5034 = vsel %vm3423, %v5033, %v5029
    %v5035 = vlaneseq
    %v5036 = vshrl.u32 %v5035, 7
    %v5037 = vsub.s32 %v3425, %v5036
    %v5038 = vrot.slane %v4646, %v5037
    %v5039 = vsel %vm3430, %v5038, %v5034
    %v5040 = vlaneseq
    %v5041 = vshrl.u32 %v5040, 7
    %v5042 = vsub.s32 %v3432, %v5041
    %v5043 = vrot.slane %v4649, %v5042
    %v5044 = vsel %vm3437, %v5043, %v5039
    %v5045 = vlaneseq
    %v5046 = vshrl.u32 %v5045, 7
    %v5047 = vsub.s32 %v3439, %v5046
    %v5048 = vrot.slane %v4652, %v5047
    %v5049 = vsel %vm3444, %v5048, %v5044
    %v5050 = vlaneseq
    %v5051 = vshrl.u32 %v5050, 7
    %v5052 = vsub.s32 %v3446, %v5051
    %v5053 = vrot.slane %v4655, %v5052
    %v5054 = vsel %vm3451, %v5053, %v5049
    %v5055 = vlaneseq
    %v5056 = vshrl.u32 %v5055, 7
    %v5057 = vsub.s32 %v3453, %v5056
    %v5058 = vrot.slane %v4658, %v5057
    %v5059 = vsel %vm3458, %v5058, %v5054
    %v5060 = vlaneseq
    %v5061 = vshrl.u32 %v5060, 7
    %v5062 = vsub.s32 %v3460, %v5061
    %v5063 = vrot.slane %v4661, %v5062
    %v5064 = vsel %vm3465, %v5063, %v5059
    %v5065 = vlaneseq
    %v5066 = vshrl.u32 %v5065, 7
    %v5067 = vsub.s32 %v3467, %v5066
    %v5068 = vrot.slane %v4664, %v5067
    %v5069 = vsel %vm3472, %v5068, %v5064
    %v5070 = vlaneseq
    %v5071 = vshrl.u32 %v5070, 7
    %v5072 = vsub.s32 %v3474, %v5071
    %v5073 = vrot.slane %v4667, %v5072
    %v5074 = vsel %vm3479, %v5073, %v5069
    %v5075 = vlaneseq
    %v5076 = vshrl.u32 %v5075, 7
    %v5077 = vsub.s32 %v3481, %v5076
    %v5078 = vrot.slane %v4670, %v5077
    %v5079 = vsel %vm3486, %v5078, %v5074
    %v5080 = vlaneseq
    %v5081 = vshrl.u32 %v5080, 7
    %v5082 = vsub.s32 %v3488, %v5081
    %v5083 = vrot.slane %v4673, %v5082
    %v5084 = vsel %vm3493, %v5083, %v5079
    %v5085 = vlaneseq
    %v5086 = vshrl.u32 %v5085, 7
    %v5087 = vsub.s32 %v3495, %v5086
    %v5088 = vrot.slane %v4676, %v5087
    %v5089 = vsel %vm3500, %v5088, %v5084
    %v5090 = vlaneseq
    %v5091 = vshrl.u32 %v5090, 7
    %v5092 = vsub.s32 %v3502, %v5091
    %v5093 = vrot.slane %v4679, %v5092
    %v5094 = vsel %vm3507, %v5093, %v5089
    %v5095 = vlaneseq
    %v5096 = vshrl.u32 %v5095, 7
    %v5097 = vsub.s32 %v3399, %v5096
    %v5098 = vrot.slane %v4682, %v5097
    %v5099 = vlaneseq
    %v5100 = vshrl.u32 %v5099, 7
    %v5101 = vsub.s32 %v3404, %v5100
    %v5102 = vrot.slane %v4685, %v5101
    %v5103 = vsel %vm3409, %v5102, %v5098
    %v5104 = vlaneseq
    %v5105 = vshrl.u32 %v5104, 7
    %v5106 = vsub.s32 %v3411, %v5105
    %v5107 = vrot.slane %v4688, %v5106
    %v5108 = vsel %vm3416, %v5107, %v5103
    %v5109 = vlaneseq
    %v5110 = vshrl.u32 %v5109, 7
    %v5111 = vsub.s32 %v3418, %v5110
    %v5112 = vrot.slane %v4691, %v5111
    %v5113 = vsel %vm3423, %v5112, %v5108
    %v5114 = vlaneseq
    %v5115 = vshrl.u32 %v5114, 7
    %v5116 = vsub.s32 %v3425, %v5115
    %v5117 = vrot.slane %v4694, %v5116
    %v5118 = vsel %vm3430, %v5117, %v5113
    %v5119 = vlaneseq
    %v5120 = vshrl.u32 %v5119, 7
    %v5121 = vsub.s32 %v3432, %v5120
    %v5122 = vrot.slane %v4697, %v5121
    %v5123 = vsel %vm3437, %v5122, %v5118
    %v5124 = vlaneseq
    %v5125 = vshrl.u32 %v5124, 7
    %v5126 = vsub.s32 %v3439, %v5125
    %v5127 = vrot.slane %v4700, %v5126
    %v5128 = vsel %vm3444, %v5127, %v5123
    %v5129 = vlaneseq
    %v5130 = vshrl.u32 %v5129, 7
    %v5131 = vsub.s32 %v3446, %v5130
    %v5132 = vrot.slane %v4703, %v5131
    %v5133 = vsel %vm3451, %v5132, %v5128
    %v5134 = vlaneseq
    %v5135 = vshrl.u32 %v5134, 7
    %v5136 = vsub.s32 %v3453, %v5135
    %v5137 = vrot.slane %v4706, %v5136
    %v5138 = vsel %vm3458, %v5137, %v5133
    %v5139 = vlaneseq
    %v5140 = vshrl.u32 %v5139, 7
    %v5141 = vsub.s32 %v3460, %v5140
    %v5142 = vrot.slane %v4709, %v5141
    %v5143 = vsel %vm3465, %v5142, %v5138
    %v5144 = vlaneseq
    %v5145 = vshrl.u32 %v5144, 7
    %v5146 = vsub.s32 %v3467, %v5145
    %v5147 = vrot.slane %v4712, %v5146
    %v5148 = vsel %vm3472, %v5147, %v5143
    %v5149 = vlaneseq
    %v5150 = vshrl.u32 %v5149, 7
    %v5151 = vsub.s32 %v3474, %v5150
    %v5152 = vrot.slane %v4715, %v5151
    %v5153 = vsel %vm3479, %v5152, %v5148
    %v5154 = vlaneseq
    %v5155 = vshrl.u32 %v5154, 7
    %v5156 = vsub.s32 %v3481, %v5155
    %v5157 = vrot.slane %v4718, %v5156
    %v5158 = vsel %vm3486, %v5157, %v5153
    %v5159 = vlaneseq
    %v5160 = vshrl.u32 %v5159, 7
    %v5161 = vsub.s32 %v3488, %v5160
    %v5162 = vrot.slane %v4721, %v5161
    %v5163 = vsel %vm3493, %v5162, %v5158
    %v5164 = vlaneseq
    %v5165 = vshrl.u32 %v5164, 7
    %v5166 = vsub.s32 %v3495, %v5165
    %v5167 = vrot.slane %v4724, %v5166
    %v5168 = vsel %vm3500, %v5167, %v5163
    %v5169 = vlaneseq
    %v5170 = vshrl.u32 %v5169, 7
    %v5171 = vsub.s32 %v3502, %v5170
    %v5172 = vrot.slane %v4727, %v5171
    %v5173 = vsel %vm3507, %v5172, %v5168
    %v5174 = vlaneseq
    %v5175 = vshrl.u32 %v5174, 7
    %v5176 = vsub.s32 %v3399, %v5175
    %v5177 = vrot.slane %v4730, %v5176
    %v5178 = vlaneseq
    %v5179 = vshrl.u32 %v5178, 7
    %v5180 = vsub.s32 %v3404, %v5179
    %v5181 = vrot.slane %v4733, %v5180
    %v5182 = vsel %vm3409, %v5181, %v5177
    %v5183 = vlaneseq
    %v5184 = vshrl.u32 %v5183, 7
    %v5185 = vsub.s32 %v3411, %v5184
    %v5186 = vrot.slane %v4736, %v5185
    %v5187 = vsel %vm3416, %v5186, %v5182
    %v5188 = vlaneseq
    %v5189 = vshrl.u32 %v5188, 7
    %v5190 = vsub.s32 %v3418, %v5189
    %v5191 = vrot.slane %v4739, %v5190
    %v5192 = vsel %vm3423, %v5191, %v5187
    %v5193 = vlaneseq
    %v5194 = vshrl.u32 %v5193, 7
    %v5195 = vsub.s32 %v3425, %v5194
    %v5196 = vrot.slane %v4742, %v5195
    %v5197 = vsel %vm3430, %v5196, %v5192
    %v5198 = vlaneseq
    %v5199 = vshrl.u32 %v5198, 7
    %v5200 = vsub.s32 %v3432, %v5199
    %v5201 = vrot.slane %v4745, %v5200
    %v5202 = vsel %vm3437, %v5201, %v5197
    %v5203 = vlaneseq
    %v5204 = vshrl.u32 %v5203, 7
    %v5205 = vsub.s32 %v3439, %v5204
    %v5206 = vrot.slane %v4748, %v5205
    %v5207 = vsel %vm3444, %v5206, %v5202
    %v5208 = vlaneseq
    %v5209 = vshrl.u32 %v5208, 7
    %v5210 = vsub.s32 %v3446, %v5209
    %v5211 = vrot.slane %v4751, %v5210
    %v5212 = vsel %vm3451, %v5211, %v5207
    %v5213 = vlaneseq
    %v5214 = vshrl.u32 %v5213, 7
    %v5215 = vsub.s32 %v3453, %v5214
    %v5216 = vrot.slane %v4754, %v5215
    %v5217 = vsel %vm3458, %v5216, %v5212
    %v5218 = vlaneseq
    %v5219 = vshrl.u32 %v5218, 7
    %v5220 = vsub.s32 %v3460, %v5219
    %v5221 = vrot.slane %v4757, %v5220
    %v5222 = vsel %vm3465, %v5221, %v5217
    %v5223 = vlaneseq
    %v5224 = vshrl.u32 %v5223, 7
    %v5225 = vsub.s32 %v3467, %v5224
    %v5226 = vrot.slane %v4760, %v5225
    %v5227 = vsel %vm3472, %v5226, %v5222
    %v5228 = vlaneseq
    %v5229 = vshrl.u32 %v5228, 7
    %v5230 = vsub.s32 %v3474, %v5229
    %v5231 = vrot.slane %v4763, %v5230
    %v5232 = vsel %vm3479, %v5231, %v5227
    %v5233 = vlaneseq
    %v5234 = vshrl.u32 %v5233, 7
    %v5235 = vsub.s32 %v3481, %v5234
    %v5236 = vrot.slane %v4766, %v5235
    %v5237 = vsel %vm3486, %v5236, %v5232
    %v5238 = vlaneseq
    %v5239 = vshrl.u32 %v5238, 7
    %v5240 = vsub.s32 %v3488, %v5239
    %v5241 = vrot.slane %v4769, %v5240
    %v5242 = vsel %vm3493, %v5241, %v5237
    %v5243 = vlaneseq
    %v5244 = vshrl.u32 %v5243, 7
    %v5245 = vsub.s32 %v3495, %v5244
    %v5246 = vrot.slane %v4772, %v5245
    %v5247 = vsel %vm3500, %v5246, %v5242
    %v5248 = vlaneseq
    %v5249 = vshrl.u32 %v5248, 7
    %v5250 = vsub.s32 %v3502, %v5249
    %v5251 = vrot.slane %v4775, %v5250
    %v5252 = vsel %vm3507, %v5251, %v5247
    %v5253 = vlaneseq
    %v5254 = vshrl.u32 %v5253, 7
    %v5255 = vsub.s32 %v3399, %v5254
    %v5256 = vrot.slane %v4778, %v5255
    %v5257 = vlaneseq
    %v5258 = vshrl.u32 %v5257, 7
    %v5259 = vsub.s32 %v3404, %v5258
    %v5260 = vrot.slane %v4781, %v5259
    %v5261 = vsel %vm3409, %v5260, %v5256
    %v5262 = vlaneseq
    %v5263 = vshrl.u32 %v5262, 7
    %v5264 = vsub.s32 %v3411, %v5263
    %v5265 = vrot.slane %v4784, %v5264
    %v5266 = vsel %vm3416, %v5265, %v5261
    %v5267 = vlaneseq
    %v5268 = vshrl.u32 %v5267, 7
    %v5269 = vsub.s32 %v3418, %v5268
    %v5270 = vrot.slane %v4787, %v5269
    %v5271 = vsel %vm3423, %v5270, %v5266
    %v5272 = vlaneseq
    %v5273 = vshrl.u32 %v5272, 7
    %v5274 = vsub.s32 %v3425, %v5273
    %v5275 = vrot.slane %v4790, %v5274
    %v5276 = vsel %vm3430, %v5275, %v5271
    %v5277 = vlaneseq
    %v5278 = vshrl.u32 %v5277, 7
    %v5279 = vsub.s32 %v3432, %v5278
    %v5280 = vrot.slane %v4793, %v5279
    %v5281 = vsel %vm3437, %v5280, %v5276
    %v5282 = vlaneseq
    %v5283 = vshrl.u32 %v5282, 7
    %v5284 = vsub.s32 %v3439, %v5283
    %v5285 = vrot.slane %v4796, %v5284
    %v5286 = vsel %vm3444, %v5285, %v5281
    %v5287 = vlaneseq
    %v5288 = vshrl.u32 %v5287, 7
    %v5289 = vsub.s32 %v3446, %v5288
    %v5290 = vrot.slane %v4799, %v5289
    %v5291 = vsel %vm3451, %v5290, %v5286
    %v5292 = vlaneseq
    %v5293 = vshrl.u32 %v5292, 7
    %v5294 = vsub.s32 %v3453, %v5293
    %v5295 = vrot.slane %v4802, %v5294
    %v5296 = vsel %vm3458, %v5295, %v5291
    %v5297 = vlaneseq
    %v5298 = vshrl.u32 %v5297, 7
    %v5299 = vsub.s32 %v3460, %v5298
    %v5300 = vrot.slane %v4805, %v5299
    %v5301 = vsel %vm3465, %v5300, %v5296
    %v5302 = vlaneseq
    %v5303 = vshrl.u32 %v5302, 7
    %v5304 = vsub.s32 %v3467, %v5303
    %v5305 = vrot.slane %v4808, %v5304
    %v5306 = vsel %vm3472, %v5305, %v5301
    %v5307 = vlaneseq
    %v5308 = vshrl.u32 %v5307, 7
    %v5309 = vsub.s32 %v3474, %v5308
    %v5310 = vrot.slane %v4811, %v5309
    %v5311 = vsel %vm3479, %v5310, %v5306
    %v5312 = vlaneseq
    %v5313 = vshrl.u32 %v5312, 7
    %v5314 = vsub.s32 %v3481, %v5313
    %v5315 = vrot.slane %v4814, %v5314
    %v5316 = vsel %vm3486, %v5315, %v5311
    %v5317 = vlaneseq
    %v5318 = vshrl.u32 %v5317, 7
    %v5319 = vsub.s32 %v3488, %v5318
    %v5320 = vrot.slane %v4817, %v5319
    %v5321 = vsel %vm3493, %v5320, %v5316
    %v5322 = vlaneseq
    %v5323 = vshrl.u32 %v5322, 7
    %v5324 = vsub.s32 %v3495, %v5323
    %v5325 = vrot.slane %v4820, %v5324
    %v5326 = vsel %vm3500, %v5325, %v5321
    %v5327 = vlaneseq
    %v5328 = vshrl.u32 %v5327, 7
    %v5329 = vsub.s32 %v3502, %v5328
    %v5330 = vrot.slane %v4823, %v5329
    %v5331 = vsel %vm3507, %v5330, %v5326
    %v5332 = vlaneseq
    %v5333 = vshrl.u32 %v5332, 7
    %v5334 = vsub.s32 %v3399, %v5333
    %v5335 = vrot.slane %v4826, %v5334
    %v5336 = vlaneseq
    %v5337 = vshrl.u32 %v5336, 7
    %v5338 = vsub.s32 %v3404, %v5337
    %v5339 = vrot.slane %v4829, %v5338
    %v5340 = vsel %vm3409, %v5339, %v5335
    %v5341 = vlaneseq
    %v5342 = vshrl.u32 %v5341, 7
    %v5343 = vsub.s32 %v3411, %v5342
    %v5344 = vrot.slane %v4832, %v5343
    %v5345 = vsel %vm3416, %v5344, %v5340
    %v5346 = vlaneseq
    %v5347 = vshrl.u32 %v5346, 7
    %v5348 = vsub.s32 %v3418, %v5347
    %v5349 = vrot.slane %v4835, %v5348
    %v5350 = vsel %vm3423, %v5349, %v5345
    %v5351 = vlaneseq
    %v5352 = vshrl.u32 %v5351, 7
    %v5353 = vsub.s32 %v3425, %v5352
    %v5354 = vrot.slane %v4838, %v5353
    %v5355 = vsel %vm3430, %v5354, %v5350
    %v5356 = vlaneseq
    %v5357 = vshrl.u32 %v5356, 7
    %v5358 = vsub.s32 %v3432, %v5357
    %v5359 = vrot.slane %v4841, %v5358
    %v5360 = vsel %vm3437, %v5359, %v5355
    %v5361 = vlaneseq
    %v5362 = vshrl.u32 %v5361, 7
    %v5363 = vsub.s32 %v3439, %v5362
    %v5364 = vrot.slane %v4844, %v5363
    %v5365 = vsel %vm3444, %v5364, %v5360
    %v5366 = vlaneseq
    %v5367 = vshrl.u32 %v5366, 7
    %v5368 = vsub.s32 %v3446, %v5367
    %v5369 = vrot.slane %v4847, %v5368
    %v5370 = vsel %vm3451, %v5369, %v5365
    %v5371 = vlaneseq
    %v5372 = vshrl.u32 %v5371, 7
    %v5373 = vsub.s32 %v3453, %v5372
    %v5374 = vrot.slane %v4850, %v5373
    %v5375 = vsel %vm3458, %v5374, %v5370
    %v5376 = vlaneseq
    %v5377 = vshrl.u32 %v5376, 7
    %v5378 = vsub.s32 %v3460, %v5377
    %v5379 = vrot.slane %v4853, %v5378
    %v5380 = vsel %vm3465, %v5379, %v5375
    %v5381 = vlaneseq
    %v5382 = vshrl.u32 %v5381, 7
    %v5383 = vsub.s32 %v3467, %v5382
    %v5384 = vrot.slane %v4856, %v5383
    %v5385 = vsel %vm3472, %v5384, %v5380
    %v5386 = vlaneseq
    %v5387 = vshrl.u32 %v5386, 7
    %v5388 = vsub.s32 %v3474, %v5387
    %v5389 = vrot.slane %v4859, %v5388
    %v5390 = vsel %vm3479, %v5389, %v5385
    %v5391 = vlaneseq
    %v5392 = vshrl.u32 %v5391, 7
    %v5393 = vsub.s32 %v3481, %v5392
    %v5394 = vrot.slane %v4862, %v5393
    %v5395 = vsel %vm3486, %v5394, %v5390
    %v5396 = vlaneseq
    %v5397 = vshrl.u32 %v5396, 7
    %v5398 = vsub.s32 %v3488, %v5397
    %v5399 = vrot.slane %v4865, %v5398
    %v5400 = vsel %vm3493, %v5399, %v5395
    %v5401 = vlaneseq
    %v5402 = vshrl.u32 %v5401, 7
    %v5403 = vsub.s32 %v3495, %v5402
    %v5404 = vrot.slane %v4868, %v5403
    %v5405 = vsel %vm3500, %v5404, %v5400
    %v5406 = vlaneseq
    %v5407 = vshrl.u32 %v5406, 7
    %v5408 = vsub.s32 %v3502, %v5407
    %v5409 = vrot.slane %v4871, %v5408
    %v5410 = vsel %vm3507, %v5409, %v5405
    %v5411 = vlaneseq
    %v5412 = vshrl.u32 %v5411, 7
    %v5413 = vsub.s32 %v3399, %v5412
    %v5414 = vrot.slane %v4874, %v5413
    %v5415 = vlaneseq
    %v5416 = vshrl.u32 %v5415, 7
    %v5417 = vsub.s32 %v3404, %v5416
    %v5418 = vrot.slane %v4877, %v5417
    %v5419 = vsel %vm3409, %v5418, %v5414
    %v5420 = vlaneseq
    %v5421 = vshrl.u32 %v5420, 7
    %v5422 = vsub.s32 %v3411, %v5421
    %v5423 = vrot.slane %v4880, %v5422
    %v5424 = vsel %vm3416, %v5423, %v5419
    %v5425 = vlaneseq
    %v5426 = vshrl.u32 %v5425, 7
    %v5427 = vsub.s32 %v3418, %v5426
    %v5428 = vrot.slane %v4883, %v5427
    %v5429 = vsel %vm3423, %v5428, %v5424
    %v5430 = vlaneseq
    %v5431 = vshrl.u32 %v5430, 7
    %v5432 = vsub.s32 %v3425, %v5431
    %v5433 = vrot.slane %v4886, %v5432
    %v5434 = vsel %vm3430, %v5433, %v5429
    %v5435 = vlaneseq
    %v5436 = vshrl.u32 %v5435, 7
    %v5437 = vsub.s32 %v3432, %v5436
    %v5438 = vrot.slane %v4889, %v5437
    %v5439 = vsel %vm3437, %v5438, %v5434
    %v5440 = vlaneseq
    %v5441 = vshrl.u32 %v5440, 7
    %v5442 = vsub.s32 %v3439, %v5441
    %v5443 = vrot.slane %v4892, %v5442
    %v5444 = vsel %vm3444, %v5443, %v5439
    %v5445 = vlaneseq
    %v5446 = vshrl.u32 %v5445, 7
    %v5447 = vsub.s32 %v3446, %v5446
    %v5448 = vrot.slane %v4895, %v5447
    %v5449 = vsel %vm3451, %v5448, %v5444
    %v5450 = vlaneseq
    %v5451 = vshrl.u32 %v5450, 7
    %v5452 = vsub.s32 %v3453, %v5451
    %v5453 = vrot.slane %v4898, %v5452
    %v5454 = vsel %vm3458, %v5453, %v5449
    %v5455 = vlaneseq
    %v5456 = vshrl.u32 %v5455, 7
    %v5457 = vsub.s32 %v3460, %v5456
    %v5458 = vrot.slane %v4901, %v5457
    %v5459 = vsel %vm3465, %v5458, %v5454
    %v5460 = vlaneseq
    %v5461 = vshrl.u32 %v5460, 7
    %v5462 = vsub.s32 %v3467, %v5461
    %v5463 = vrot.slane %v4904, %v5462
    %v5464 = vsel %vm3472, %v5463, %v5459
    %v5465 = vlaneseq
    %v5466 = vshrl.u32 %v5465, 7
    %v5467 = vsub.s32 %v3474, %v5466
    %v5468 = vrot.slane %v4907, %v5467
    %v5469 = vsel %vm3479, %v5468, %v5464
    %v5470 = vlaneseq
    %v5471 = vshrl.u32 %v5470, 7
    %v5472 = vsub.s32 %v3481, %v5471
    %v5473 = vrot.slane %v4910, %v5472
    %v5474 = vsel %vm3486, %v5473, %v5469
    %v5475 = vlaneseq
    %v5476 = vshrl.u32 %v5475, 7
    %v5477 = vsub.s32 %v3488, %v5476
    %v5478 = vrot.slane %v4913, %v5477
    %v5479 = vsel %vm3493, %v5478, %v5474
    %v5480 = vlaneseq
    %v5481 = vshrl.u32 %v5480, 7
    %v5482 = vsub.s32 %v3495, %v5481
    %v5483 = vrot.slane %v4916, %v5482
    %v5484 = vsel %vm3500, %v5483, %v5479
    %v5485 = vlaneseq
    %v5486 = vshrl.u32 %v5485, 7
    %v5487 = vsub.s32 %v3502, %v5486
    %v5488 = vrot.slane %v4919, %v5487
    %v5489 = vsel %vm3507, %v5488, %v5484
    %v5490 = vlaneseq
    %v5491 = vshrl.u32 %v5490, 7
    %v5492 = vsub.s32 %v3399, %v5491
    %v5493 = vrot.slane %v4922, %v5492
    %v5494 = vlaneseq
    %v5495 = vshrl.u32 %v5494, 7
    %v5496 = vsub.s32 %v3404, %v5495
    %v5497 = vrot.slane %v4925, %v5496
    %v5498 = vsel %vm3409, %v5497, %v5493
    %v5499 = vlaneseq
    %v5500 = vshrl.u32 %v5499, 7
    %v5501 = vsub.s32 %v3411, %v5500
    %v5502 = vrot.slane %v4928, %v5501
    %v5503 = vsel %vm3416, %v5502, %v5498
    %v5504 = vlaneseq
    %v5505 = vshrl.u32 %v5504, 7
    %v5506 = vsub.s32 %v3418, %v5505
    %v5507 = vrot.slane %v4931, %v5506
    %v5508 = vsel %vm3423, %v5507, %v5503
    %v5509 = vlaneseq
    %v5510 = vshrl.u32 %v5509, 7
    %v5511 = vsub.s32 %v3425, %v5510
    %v5512 = vrot.slane %v4934, %v5511
    %v5513 = vsel %vm3430, %v5512, %v5508
    %v5514 = vlaneseq
    %v5515 = vshrl.u32 %v5514, 7
    %v5516 = vsub.s32 %v3432, %v5515
    %v5517 = vrot.slane %v4937, %v5516
    %v5518 = vsel %vm3437, %v5517, %v5513
    %v5519 = vlaneseq
    %v5520 = vshrl.u32 %v5519, 7
    %v5521 = vsub.s32 %v3439, %v5520
    %v5522 = vrot.slane %v4940, %v5521
    %v5523 = vsel %vm3444, %v5522, %v5518
    %v5524 = vlaneseq
    %v5525 = vshrl.u32 %v5524, 7
    %v5526 = vsub.s32 %v3446, %v5525
    %v5527 = vrot.slane %v4943, %v5526
    %v5528 = vsel %vm3451, %v5527, %v5523
    %v5529 = vlaneseq
    %v5530 = vshrl.u32 %v5529, 7
    %v5531 = vsub.s32 %v3453, %v5530
    %v5532 = vrot.slane %v4946, %v5531
    %v5533 = vsel %vm3458, %v5532, %v5528
    %v5534 = vlaneseq
    %v5535 = vshrl.u32 %v5534, 7
    %v5536 = vsub.s32 %v3460, %v5535
    %v5537 = vrot.slane %v4949, %v5536
    %v5538 = vsel %vm3465, %v5537, %v5533
    %v5539 = vlaneseq
    %v5540 = vshrl.u32 %v5539, 7
    %v5541 = vsub.s32 %v3467, %v5540
    %v5542 = vrot.slane %v4952, %v5541
    %v5543 = vsel %vm3472, %v5542, %v5538
    %v5544 = vlaneseq
    %v5545 = vshrl.u32 %v5544, 7
    %v5546 = vsub.s32 %v3474, %v5545
    %v5547 = vrot.slane %v4955, %v5546
    %v5548 = vsel %vm3479, %v5547, %v5543
    %v5549 = vlaneseq
    %v5550 = vshrl.u32 %v5549, 7
    %v5551 = vsub.s32 %v3481, %v5550
    %v5552 = vrot.slane %v4958, %v5551
    %v5553 = vsel %vm3486, %v5552, %v5548
    %v5554 = vlaneseq
    %v5555 = vshrl.u32 %v5554, 7
    %v5556 = vsub.s32 %v3488, %v5555
    %v5557 = vrot.slane %v4961, %v5556
    %v5558 = vsel %vm3493, %v5557, %v5553
    %v5559 = vlaneseq
    %v5560 = vshrl.u32 %v5559, 7
    %v5561 = vsub.s32 %v3495, %v5560
    %v5562 = vrot.slane %v4964, %v5561
    %v5563 = vsel %vm3500, %v5562, %v5558
    %v5564 = vlaneseq
    %v5565 = vshrl.u32 %v5564, 7
    %v5566 = vsub.s32 %v3502, %v5565
    %v5567 = vrot.slane %v4967, %v5566
    %v5568 = vsel %vm3507, %v5567, %v5563
    %v5569 = vlaneseq
    %v5570 = vshrl.u32 %v5569, 7
    %v5571 = vsub.s32 %v3399, %v5570
    %v5572 = vrot.slane %v4970, %v5571
    %v5573 = vlaneseq
    %v5574 = vshrl.u32 %v5573, 7
    %v5575 = vsub.s32 %v3404, %v5574
    %v5576 = vrot.slane %v4973, %v5575
    %v5577 = vsel %vm3409, %v5576, %v5572
    %v5578 = vlaneseq
    %v5579 = vshrl.u32 %v5578, 7
    %v5580 = vsub.s32 %v3411, %v5579
    %v5581 = vrot.slane %v4976, %v5580
    %v5582 = vsel %vm3416, %v5581, %v5577
    %v5583 = vlaneseq
    %v5584 = vshrl.u32 %v5583, 7
    %v5585 = vsub.s32 %v3418, %v5584
    %v5586 = vrot.slane %v4979, %v5585
    %v5587 = vsel %vm3423, %v5586, %v5582
    %v5588 = vlaneseq
    %v5589 = vshrl.u32 %v5588, 7
    %v5590 = vsub.s32 %v3425, %v5589
    %v5591 = vrot.slane %v4982, %v5590
    %v5592 = vsel %vm3430, %v5591, %v5587
    %v5593 = vlaneseq
    %v5594 = vshrl.u32 %v5593, 7
    %v5595 = vsub.s32 %v3432, %v5594
    %v5596 = vrot.slane %v4985, %v5595
    %v5597 = vsel %vm3437, %v5596, %v5592
    %v5598 = vlaneseq
    %v5599 = vshrl.u32 %v5598, 7
    %v5600 = vsub.s32 %v3439, %v5599
    %v5601 = vrot.slane %v4988, %v5600
    %v5602 = vsel %vm3444, %v5601, %v5597
    %v5603 = vlaneseq
    %v5604 = vshrl.u32 %v5603, 7
    %v5605 = vsub.s32 %v3446, %v5604
    %v5606 = vrot.slane %v4991, %v5605
    %v5607 = vsel %vm3451, %v5606, %v5602
    %v5608 = vlaneseq
    %v5609 = vshrl.u32 %v5608, 7
    %v5610 = vsub.s32 %v3453, %v5609
    %v5611 = vrot.slane %v4994, %v5610
    %v5612 = vsel %vm3458, %v5611, %v5607
    %v5613 = vlaneseq
    %v5614 = vshrl.u32 %v5613, 7
    %v5615 = vsub.s32 %v3460, %v5614
    %v5616 = vrot.slane %v4997, %v5615
    %v5617 = vsel %vm3465, %v5616, %v5612
    %v5618 = vlaneseq
    %v5619 = vshrl.u32 %v5618, 7
    %v5620 = vsub.s32 %v3467, %v5619
    %v5621 = vrot.slane %v5000, %v5620
    %v5622 = vsel %vm3472, %v5621, %v5617
    %v5623 = vlaneseq
    %v5624 = vshrl.u32 %v5623, 7
    %v5625 = vsub.s32 %v3474, %v5624
    %v5626 = vrot.slane %v5003, %v5625
    %v5627 = vsel %vm3479, %v5626, %v5622
    %v5628 = vlaneseq
    %v5629 = vshrl.u32 %v5628, 7
    %v5630 = vsub.s32 %v3481, %v5629
    %v5631 = vrot.slane %v5006, %v5630
    %v5632 = vsel %vm3486, %v5631, %v5627
    %v5633 = vlaneseq
    %v5634 = vshrl.u32 %v5633, 7
    %v5635 = vsub.s32 %v3488, %v5634
    %v5636 = vrot.slane %v5009, %v5635
    %v5637 = vsel %vm3493, %v5636, %v5632
    %v5638 = vlaneseq
    %v5639 = vshrl.u32 %v5638, 7
    %v5640 = vsub.s32 %v3495, %v5639
    %v5641 = vrot.slane %v5012, %v5640
    %v5642 = vsel %vm3500, %v5641, %v5637
    %v5643 = vlaneseq
    %v5644 = vshrl.u32 %v5643, 7
    %v5645 = vsub.s32 %v3502, %v5644
    %v5646 = vrot.slane %v5015, %v5645
    %v5647 = vsel %vm3507, %v5646, %v5642
    %v5648 = vsel %vm4062, %v5173, %v5094
    %v5649 = vsel %vm4064, %v5252, %v5648
    %v5650 = vsel %vm4066, %v5331, %v5649
    %v5651 = vsel %vm4068, %v5410, %v5650
    %v5652 = vsel %vm4070, %v5489, %v5651
    %v5653 = vsel %vm4072, %v5568, %v5652
    %v5654 = vsel %vm4074, %v5647, %v5653
    %5656 = vadd.xlane.f32.xlu0 %v5654
    %v5657 = vpop.xlane.xlu0 %5656
    %v5658 = vrcp.pop %v5657
    %v5660 = vlaneseq
    %v5661 = vshrl.u32 %v5660, 7
    %v5662 = vsub.s32 0, %v5661
    %v5663 = vrot.slane %v5658, %v5662
    %v5664 = vlaneseq
    %v5665 = vshrl.u32 %v5664, 7
    %v5666 = vsub.s32 1, %v5665
    %v5667 = vrot.slane %v5658, %v5666
    %v5668 = vlaneseq
    %v5669 = vshrl.u32 %v5668, 7
    %v5670 = vsub.s32 2, %v5669
    %v5671 = vrot.slane %v5658, %v5670
    %v5672 = vlaneseq
    %v5673 = vshrl.u32 %v5672, 7
    %v5674 = vsub.s32 3, %v5673
    %v5675 = vrot.slane %v5658, %v5674
    %v5676 = vlaneseq
    %v5677 = vshrl.u32 %v5676, 7
    %v5678 = vsub.s32 4, %v5677
    %v5679 = vrot.slane %v5658, %v5678
    %v5680 = vlaneseq
    %v5681 = vshrl.u32 %v5680, 7
    %v5682 = vsub.s32 5, %v5681
    %v5683 = vrot.slane %v5658, %v5682
    %v5684 = vlaneseq
    %v5685 = vshrl.u32 %v5684, 7
    %v5686 = vsub.s32 6, %v5685
    %v5687 = vrot.slane %v5658, %v5686
    %v5688 = vlaneseq
    %v5689 = vshrl.u32 %v5688, 7
    %v5690 = vsub.s32 7, %v5689
    %v5691 = vrot.slane %v5658, %v5690
    %v5700 = vmul.f32 %v4249, %v5663
    %v5701 = vmul.f32 %v4251, %v5663
    %v5702 = vmul.f32 %v4253, %v5663
    %v5703 = vmul.f32 %v4255, %v5663
    %v5704 = vmul.f32 %v4257, %v5663
    %v5705 = vmul.f32 %v4259, %v5663
    %v5706 = vmul.f32 %v4261, %v5663
    %v5707 = vmul.f32 %v4263, %v5663
    %v5708 = vmul.f32 %v4265, %v5663
    %v5709 = vmul.f32 %v4267, %v5663
    %v5710 = vmul.f32 %v4269, %v5663
    %v5711 = vmul.f32 %v4271, %v5663
    %v5712 = vmul.f32 %v4273, %v5663
    %v5713 = vmul.f32 %v4275, %v5663
    %v5714 = vmul.f32 %v4277, %v5663
    %v5715 = vmul.f32 %v4279, %v5663
    %v5716 = vmul.f32 %v4281, %v5667
    %v5717 = vmul.f32 %v4283, %v5667
    %v5718 = vmul.f32 %v4285, %v5667
    %v5719 = vmul.f32 %v4287, %v5667
    %v5720 = vmul.f32 %v4289, %v5667
    %v5721 = vmul.f32 %v4291, %v5667
    %v5722 = vmul.f32 %v4293, %v5667
    %v5723 = vmul.f32 %v4295, %v5667
    %v5724 = vmul.f32 %v4297, %v5667
    %v5725 = vmul.f32 %v4299, %v5667
    %v5726 = vmul.f32 %v4301, %v5667
    %v5727 = vmul.f32 %v4303, %v5667
    %v5728 = vmul.f32 %v4305, %v5667
    %v5729 = vmul.f32 %v4307, %v5667
    %v5730 = vmul.f32 %v4309, %v5667
    %v5731 = vmul.f32 %v4311, %v5667
    %v5732 = vmul.f32 %v4313, %v5671
    %v5733 = vmul.f32 %v4315, %v5671
    %v5734 = vmul.f32 %v4317, %v5671
    %v5735 = vmul.f32 %v4319, %v5671
    %v5736 = vmul.f32 %v4321, %v5671
    %v5737 = vmul.f32 %v4323, %v5671
    %v5738 = vmul.f32 %v4325, %v5671
    %v5739 = vmul.f32 %v4327, %v5671
    %v5740 = vmul.f32 %v4329, %v5671
    %v5741 = vmul.f32 %v4331, %v5671
    %v5742 = vmul.f32 %v4333, %v5671
    %v5743 = vmul.f32 %v4335, %v5671
    %v5744 = vmul.f32 %v4337, %v5671
    %v5745 = vmul.f32 %v4339, %v5671
    %v5746 = vmul.f32 %v4341, %v5671
    %v5747 = vmul.f32 %v4343, %v5671
    %v5748 = vmul.f32 %v4345, %v5675
    %v5749 = vmul.f32 %v4347, %v5675
    %v5750 = vmul.f32 %v4349, %v5675
    %v5751 = vmul.f32 %v4351, %v5675
    %v5752 = vmul.f32 %v4353, %v5675
    %v5753 = vmul.f32 %v4355, %v5675
    %v5754 = vmul.f32 %v4357, %v5675
    %v5755 = vmul.f32 %v4359, %v5675
    %v5756 = vmul.f32 %v4361, %v5675
    %v5757 = vmul.f32 %v4363, %v5675
    %v5758 = vmul.f32 %v4365, %v5675
    %v5759 = vmul.f32 %v4367, %v5675
    %v5760 = vmul.f32 %v4369, %v5675
    %v5761 = vmul.f32 %v4371, %v5675
    %v5762 = vmul.f32 %v4373, %v5675
    %v5763 = vmul.f32 %v4375, %v5675
    %v5764 = vmul.f32 %v4377, %v5679
    %v5765 = vmul.f32 %v4379, %v5679
    %v5766 = vmul.f32 %v4381, %v5679
    %v5767 = vmul.f32 %v4383, %v5679
    %v5768 = vmul.f32 %v4385, %v5679
    %v5769 = vmul.f32 %v4387, %v5679
    %v5770 = vmul.f32 %v4389, %v5679
    %v5771 = vmul.f32 %v4391, %v5679
    %v5772 = vmul.f32 %v4393, %v5679
    %v5773 = vmul.f32 %v4395, %v5679
    %v5774 = vmul.f32 %v4397, %v5679
    %v5775 = vmul.f32 %v4399, %v5679
    %v5776 = vmul.f32 %v4401, %v5679
    %v5777 = vmul.f32 %v4403, %v5679
    %v5778 = vmul.f32 %v4405, %v5679
    %v5779 = vmul.f32 %v4407, %v5679
    %v5780 = vmul.f32 %v4409, %v5683
    %v5781 = vmul.f32 %v4411, %v5683
    %v5782 = vmul.f32 %v4413, %v5683
    %v5783 = vmul.f32 %v4415, %v5683
    %v5784 = vmul.f32 %v4417, %v5683
    %v5785 = vmul.f32 %v4419, %v5683
    %v5786 = vmul.f32 %v4421, %v5683
    %v5787 = vmul.f32 %v4423, %v5683
    %v5788 = vmul.f32 %v4425, %v5683
    %v5789 = vmul.f32 %v4427, %v5683
    %v5790 = vmul.f32 %v4429, %v5683
    %v5791 = vmul.f32 %v4431, %v5683
    %v5792 = vmul.f32 %v4433, %v5683
    %v5793 = vmul.f32 %v4435, %v5683
    %v5794 = vmul.f32 %v4437, %v5683
    %v5795 = vmul.f32 %v4439, %v5683
    %v5796 = vmul.f32 %v4441, %v5687
    %v5797 = vmul.f32 %v4443, %v5687
    %v5798 = vmul.f32 %v4445, %v5687
    %v5799 = vmul.f32 %v4447, %v5687
    %v5800 = vmul.f32 %v4449, %v5687
    %v5801 = vmul.f32 %v4451, %v5687
    %v5802 = vmul.f32 %v4453, %v5687
    %v5803 = vmul.f32 %v4455, %v5687
    %v5804 = vmul.f32 %v4457, %v5687
    %v5805 = vmul.f32 %v4459, %v5687
    %v5806 = vmul.f32 %v4461, %v5687
    %v5807 = vmul.f32 %v4463, %v5687
    %v5808 = vmul.f32 %v4465, %v5687
    %v5809 = vmul.f32 %v4467, %v5687
    %v5810 = vmul.f32 %v4469, %v5687
    %v5811 = vmul.f32 %v4471, %v5687
    %v5812 = vmul.f32 %v4473, %v5691
    %v5813 = vmul.f32 %v4475, %v5691
    %v5814 = vmul.f32 %v4477, %v5691
    %v5815 = vmul.f32 %v4479, %v5691
    %v5816 = vmul.f32 %v4481, %v5691
    %v5817 = vmul.f32 %v4483, %v5691
    %v5818 = vmul.f32 %v4485, %v5691
    %v5819 = vmul.f32 %v4487, %v5691
    %v5820 = vmul.f32 %v4489, %v5691
    %v5821 = vmul.f32 %v4491, %v5691
    %v5822 = vmul.f32 %v4493, %v5691
    %v5823 = vmul.f32 %v4495, %v5691
    %v5824 = vmul.f32 %v4497, %v5691
    %v5825 = vmul.f32 %v4499, %v5691
    %v5826 = vmul.f32 %v4501, %v5691
    %v5827 = vmul.f32 %v4503, %v5691
    %v5828 = vunpack.c.l.bf16 %v39
    %v5829 = vunpack.c.l.bf16 %v40
    %v5830 = vunpack.c.l.bf16 %v41
    %v5831 = vunpack.c.l.bf16 %v42
    %v5832 = vunpack.c.l.bf16 %v43
    %v5833 = vunpack.c.l.bf16 %v44
    %v5834 = vunpack.c.l.bf16 %v45
    %v5835 = vunpack.c.l.bf16 %v46
    %v5836 = vunpack.c.l.bf16 %v47
    %v5837 = vunpack.c.l.bf16 %v48
    %v5838 = vunpack.c.l.bf16 %v49
    %v5839 = vunpack.c.l.bf16 %v50
    %v5840 = vunpack.c.l.bf16 %v51
    %v5841 = vunpack.c.l.bf16 %v52
    %v5842 = vunpack.c.l.bf16 %v53
    %v5843 = vunpack.c.l.bf16 %v54
    %v5844 = vunpack.c.l.bf16 %v55
    %v5845 = vunpack.c.l.bf16 %v56
    %v5846 = vunpack.c.l.bf16 %v57
    %v5847 = vunpack.c.l.bf16 %v58
    %v5848 = vunpack.c.l.bf16 %v59
    %v5849 = vunpack.c.l.bf16 %v60
    %v5850 = vunpack.c.l.bf16 %v61
    %v5851 = vunpack.c.l.bf16 %v62
    %v5852 = vunpack.c.l.bf16 %v63
    %v5853 = vunpack.c.l.bf16 %v64
    %v5854 = vunpack.c.l.bf16 %v65
    %v5855 = vunpack.c.l.bf16 %v66
    %v5856 = vunpack.c.l.bf16 %v67
    %v5857 = vunpack.c.l.bf16 %v68
    %v5858 = vunpack.c.l.bf16 %v69
    %v5859 = vunpack.c.l.bf16 %v70
    %v5860 = vunpack.c.l.bf16 %v71
    %v5861 = vunpack.c.l.bf16 %v72
    %v5862 = vunpack.c.l.bf16 %v73
    %v5863 = vunpack.c.l.bf16 %v74
    %v5864 = vunpack.c.l.bf16 %v75
    %v5865 = vunpack.c.l.bf16 %v76
    %v5866 = vunpack.c.l.bf16 %v77
    %v5867 = vunpack.c.l.bf16 %v78
    %v5868 = vunpack.c.l.bf16 %v79
    %v5869 = vunpack.c.l.bf16 %v80
    %v5870 = vunpack.c.l.bf16 %v81
    %v5871 = vunpack.c.l.bf16 %v82
    %v5872 = vunpack.c.l.bf16 %v83
    %v5873 = vunpack.c.l.bf16 %v84
    %v5874 = vunpack.c.l.bf16 %v85
    %v5875 = vunpack.c.l.bf16 %v86
    %v5876 = vunpack.c.l.bf16 %v87
    %v5877 = vunpack.c.l.bf16 %v88
    %v5878 = vunpack.c.l.bf16 %v89
    %v5879 = vunpack.c.l.bf16 %v90
    %v5880 = vunpack.c.l.bf16 %v91
    %v5881 = vunpack.c.l.bf16 %v92
    %v5882 = vunpack.c.l.bf16 %v93
    %v5883 = vunpack.c.l.bf16 %v94
    %v5884 = vunpack.c.l.bf16 %v95
    %v5885 = vunpack.c.l.bf16 %v96
    %v5886 = vunpack.c.l.bf16 %v97
    %v5887 = vunpack.c.l.bf16 %v98
    %v5888 = vunpack.c.l.bf16 %v99
    %v5889 = vunpack.c.l.bf16 %v100
    %v5890 = vunpack.c.l.bf16 %v101
    %v5891 = vunpack.c.l.bf16 %v102
    %v5892 = vunpack.c.l.bf16 %v103
    %v5893 = vunpack.c.l.bf16 %v104
    %v5894 = vunpack.c.l.bf16 %v105
    %v5895 = vunpack.c.l.bf16 %v106
    %v5896 = vunpack.c.l.bf16 %v107
    %v5897 = vunpack.c.l.bf16 %v108
    %v5898 = vunpack.c.l.bf16 %v109
    %v5899 = vunpack.c.l.bf16 %v110
    %v5900 = vunpack.c.l.bf16 %v111
    %v5901 = vunpack.c.l.bf16 %v112
    %v5902 = vunpack.c.l.bf16 %v113
    %v5903 = vunpack.c.l.bf16 %v114
    %v5904 = vunpack.c.l.bf16 %v115
    %v5905 = vunpack.c.l.bf16 %v116
    %v5906 = vunpack.c.l.bf16 %v117
    %v5907 = vunpack.c.l.bf16 %v118
    %v5908 = vunpack.c.l.bf16 %v119
    %v5909 = vunpack.c.l.bf16 %v120
    %v5910 = vunpack.c.l.bf16 %v121
    %v5911 = vunpack.c.l.bf16 %v122
    %v5912 = vunpack.c.l.bf16 %v123
    %v5913 = vunpack.c.l.bf16 %v124
    %v5914 = vunpack.c.l.bf16 %v125
    %v5915 = vunpack.c.l.bf16 %v126
    %v5916 = vunpack.c.l.bf16 %v127
    %v5917 = vunpack.c.l.bf16 %v128
    %v5918 = vunpack.c.l.bf16 %v129
    %v5919 = vunpack.c.l.bf16 %v130
    %v5920 = vunpack.c.l.bf16 %v131
    %v5921 = vunpack.c.l.bf16 %v132
    %v5922 = vunpack.c.l.bf16 %v133
    %v5923 = vunpack.c.l.bf16 %v134
    %v5924 = vunpack.c.l.bf16 %v135
    %v5925 = vunpack.c.l.bf16 %v136
    %v5926 = vunpack.c.l.bf16 %v137
    %v5927 = vunpack.c.l.bf16 %v138
    %v5928 = vunpack.c.l.bf16 %v139
    %v5929 = vunpack.c.l.bf16 %v140
    %v5930 = vunpack.c.l.bf16 %v141
    %v5931 = vunpack.c.l.bf16 %v142
    %v5932 = vunpack.c.l.bf16 %v143
    %v5933 = vunpack.c.l.bf16 %v144
    %v5934 = vunpack.c.l.bf16 %v145
    %v5935 = vunpack.c.l.bf16 %v146
    %v5936 = vunpack.c.l.bf16 %v147
    %v5937 = vunpack.c.l.bf16 %v148
    %v5938 = vunpack.c.l.bf16 %v149
    %v5939 = vunpack.c.l.bf16 %v150
    %v5940 = vunpack.c.l.bf16 %v151
    %v5941 = vunpack.c.l.bf16 %v152
    %v5942 = vunpack.c.l.bf16 %v153
    %v5943 = vunpack.c.l.bf16 %v154
    %v5944 = vunpack.c.l.bf16 %v155
    %v5945 = vunpack.c.l.bf16 %v156
    %v5946 = vunpack.c.l.bf16 %v157
    %v5947 = vunpack.c.l.bf16 %v158
    %v5948 = vunpack.c.l.bf16 %v159
    %v5949 = vunpack.c.l.bf16 %v160
    %v5950 = vunpack.c.l.bf16 %v161
    %v5951 = vunpack.c.l.bf16 %v162
    %v5952 = vunpack.c.l.bf16 %v163
    %v5953 = vunpack.c.l.bf16 %v164
    %v5954 = vunpack.c.l.bf16 %v165
    %v5955 = vunpack.c.l.bf16 %v166
    %5957 = vset.pattern.permute.xlu0 0
    %5958 = vperm.xlu0 %5957, %v5700
    %v5959 = vpop.permute.xlu0 %5958
    %5962 = vset.pattern.permute.xlu0 0
    %5963 = vperm.xlu0 %5962, %v5701
    %v5964 = vpop.permute.xlu0 %5963
    %5967 = vset.pattern.permute.xlu0 0
    %5968 = vperm.xlu0 %5967, %v5702
    %v5969 = vpop.permute.xlu0 %5968
    %5972 = vset.pattern.permute.xlu0 0
    %5973 = vperm.xlu0 %5972, %v5703
    %v5974 = vpop.permute.xlu0 %5973
    %5977 = vset.pattern.permute.xlu0 0
    %5978 = vperm.xlu0 %5977, %v5704
    %v5979 = vpop.permute.xlu0 %5978
    %5982 = vset.pattern.permute.xlu0 0
    %5983 = vperm.xlu0 %5982, %v5705
    %v5984 = vpop.permute.xlu0 %5983
    %5987 = vset.pattern.permute.xlu0 0
    %5988 = vperm.xlu0 %5987, %v5706
    %v5989 = vpop.permute.xlu0 %5988
    %5992 = vset.pattern.permute.xlu0 0
    %5993 = vperm.xlu0 %5992, %v5707
    %v5994 = vpop.permute.xlu0 %5993
    %5997 = vset.pattern.permute.xlu0 0
    %5998 = vperm.xlu0 %5997, %v5708
    %v5999 = vpop.permute.xlu0 %5998
    %6002 = vset.pattern.permute.xlu0 0
    %6003 = vperm.xlu0 %6002, %v5709
    %v6004 = vpop.permute.xlu0 %6003
    %6007 = vset.pattern.permute.xlu0 0
    %6008 = vperm.xlu0 %6007, %v5710
    %v6009 = vpop.permute.xlu0 %6008
    %6012 = vset.pattern.permute.xlu0 0
    %6013 = vperm.xlu0 %6012, %v5711
    %v6014 = vpop.permute.xlu0 %6013
    %6017 = vset.pattern.permute.xlu0 0
    %6018 = vperm.xlu0 %6017, %v5712
    %v6019 = vpop.permute.xlu0 %6018
    %6022 = vset.pattern.permute.xlu0 0
    %6023 = vperm.xlu0 %6022, %v5713
    %v6024 = vpop.permute.xlu0 %6023
    %6027 = vset.pattern.permute.xlu0 0
    %6028 = vperm.xlu0 %6027, %v5714
    %v6029 = vpop.permute.xlu0 %6028
    %6032 = vset.pattern.permute.xlu0 0
    %6033 = vperm.xlu0 %6032, %v5715
    %v6034 = vpop.permute.xlu0 %6033
    %6037 = vset.pattern.permute.xlu0 0
    %6038 = vperm.xlu0 %6037, %v5716
    %v6039 = vpop.permute.xlu0 %6038
    %6042 = vset.pattern.permute.xlu0 0
    %6043 = vperm.xlu0 %6042, %v5717
    %v6044 = vpop.permute.xlu0 %6043
    %6047 = vset.pattern.permute.xlu0 0
    %6048 = vperm.xlu0 %6047, %v5718
    %v6049 = vpop.permute.xlu0 %6048
    %6052 = vset.pattern.permute.xlu0 0
    %6053 = vperm.xlu0 %6052, %v5719
    %v6054 = vpop.permute.xlu0 %6053
    %6057 = vset.pattern.permute.xlu0 0
    %6058 = vperm.xlu0 %6057, %v5720
    %v6059 = vpop.permute.xlu0 %6058
    %6062 = vset.pattern.permute.xlu0 0
    %6063 = vperm.xlu0 %6062, %v5721
    %v6064 = vpop.permute.xlu0 %6063
    %6067 = vset.pattern.permute.xlu0 0
    %6068 = vperm.xlu0 %6067, %v5722
    %v6069 = vpop.permute.xlu0 %6068
    %6072 = vset.pattern.permute.xlu0 0
    %6073 = vperm.xlu0 %6072, %v5723
    %v6074 = vpop.permute.xlu0 %6073
    %6077 = vset.pattern.permute.xlu0 0
    %6078 = vperm.xlu0 %6077, %v5724
    %v6079 = vpop.permute.xlu0 %6078
    %6082 = vset.pattern.permute.xlu0 0
    %6083 = vperm.xlu0 %6082, %v5725
    %v6084 = vpop.permute.xlu0 %6083
    %6087 = vset.pattern.permute.xlu0 0
    %6088 = vperm.xlu0 %6087, %v5726
    %v6089 = vpop.permute.xlu0 %6088
    %6092 = vset.pattern.permute.xlu0 0
    %6093 = vperm.xlu0 %6092, %v5727
    %v6094 = vpop.permute.xlu0 %6093
    %6097 = vset.pattern.permute.xlu0 0
    %6098 = vperm.xlu0 %6097, %v5728
    %v6099 = vpop.permute.xlu0 %6098
    %6102 = vset.pattern.permute.xlu0 0
    %6103 = vperm.xlu0 %6102, %v5729
    %v6104 = vpop.permute.xlu0 %6103
    %6107 = vset.pattern.permute.xlu0 0
    %6108 = vperm.xlu0 %6107, %v5730
    %v6109 = vpop.permute.xlu0 %6108
    %6112 = vset.pattern.permute.xlu0 0
    %6113 = vperm.xlu0 %6112, %v5731
    %v6114 = vpop.permute.xlu0 %6113
    %6117 = vset.pattern.permute.xlu0 0
    %6118 = vperm.xlu0 %6117, %v5732
    %v6119 = vpop.permute.xlu0 %6118
    %6122 = vset.pattern.permute.xlu0 0
    %6123 = vperm.xlu0 %6122, %v5733
    %v6124 = vpop.permute.xlu0 %6123
    %6127 = vset.pattern.permute.xlu0 0
    %6128 = vperm.xlu0 %6127, %v5734
    %v6129 = vpop.permute.xlu0 %6128
    %6132 = vset.pattern.permute.xlu0 0
    %6133 = vperm.xlu0 %6132, %v5735
    %v6134 = vpop.permute.xlu0 %6133
    %6137 = vset.pattern.permute.xlu0 0
    %6138 = vperm.xlu0 %6137, %v5736
    %v6139 = vpop.permute.xlu0 %6138
    %6142 = vset.pattern.permute.xlu0 0
    %6143 = vperm.xlu0 %6142, %v5737
    %v6144 = vpop.permute.xlu0 %6143
    %6147 = vset.pattern.permute.xlu0 0
    %6148 = vperm.xlu0 %6147, %v5738
    %v6149 = vpop.permute.xlu0 %6148
    %6152 = vset.pattern.permute.xlu0 0
    %6153 = vperm.xlu0 %6152, %v5739
    %v6154 = vpop.permute.xlu0 %6153
    %6157 = vset.pattern.permute.xlu0 0
    %6158 = vperm.xlu0 %6157, %v5740
    %v6159 = vpop.permute.xlu0 %6158
    %6162 = vset.pattern.permute.xlu0 0
    %6163 = vperm.xlu0 %6162, %v5741
    %v6164 = vpop.permute.xlu0 %6163
    %6167 = vset.pattern.permute.xlu0 0
    %6168 = vperm.xlu0 %6167, %v5742
    %v6169 = vpop.permute.xlu0 %6168
    %6172 = vset.pattern.permute.xlu0 0
    %6173 = vperm.xlu0 %6172, %v5743
    %v6174 = vpop.permute.xlu0 %6173
    %6177 = vset.pattern.permute.xlu0 0
    %6178 = vperm.xlu0 %6177, %v5744
    %v6179 = vpop.permute.xlu0 %6178
    %6182 = vset.pattern.permute.xlu0 0
    %6183 = vperm.xlu0 %6182, %v5745
    %v6184 = vpop.permute.xlu0 %6183
    %6187 = vset.pattern.permute.xlu0 0
    %6188 = vperm.xlu0 %6187, %v5746
    %v6189 = vpop.permute.xlu0 %6188
    %6192 = vset.pattern.permute.xlu0 0
    %6193 = vperm.xlu0 %6192, %v5747
    %v6194 = vpop.permute.xlu0 %6193
    %6197 = vset.pattern.permute.xlu0 0
    %6198 = vperm.xlu0 %6197, %v5748
    %v6199 = vpop.permute.xlu0 %6198
    %6202 = vset.pattern.permute.xlu0 0
    %6203 = vperm.xlu0 %6202, %v5749
    %v6204 = vpop.permute.xlu0 %6203
    %6207 = vset.pattern.permute.xlu0 0
    %6208 = vperm.xlu0 %6207, %v5750
    %v6209 = vpop.permute.xlu0 %6208
    %6212 = vset.pattern.permute.xlu0 0
    %6213 = vperm.xlu0 %6212, %v5751
    %v6214 = vpop.permute.xlu0 %6213
    %6217 = vset.pattern.permute.xlu0 0
    %6218 = vperm.xlu0 %6217, %v5752
    %v6219 = vpop.permute.xlu0 %6218
    %6222 = vset.pattern.permute.xlu0 0
    %6223 = vperm.xlu0 %6222, %v5753
    %v6224 = vpop.permute.xlu0 %6223
    %6227 = vset.pattern.permute.xlu0 0
    %6228 = vperm.xlu0 %6227, %v5754
    %v6229 = vpop.permute.xlu0 %6228
    %6232 = vset.pattern.permute.xlu0 0
    %6233 = vperm.xlu0 %6232, %v5755
    %v6234 = vpop.permute.xlu0 %6233
    %6237 = vset.pattern.permute.xlu0 0
    %6238 = vperm.xlu0 %6237, %v5756
    %v6239 = vpop.permute.xlu0 %6238
    %6242 = vset.pattern.permute.xlu0 0
    %6243 = vperm.xlu0 %6242, %v5757
    %v6244 = vpop.permute.xlu0 %6243
    %6247 = vset.pattern.permute.xlu0 0
    %6248 = vperm.xlu0 %6247, %v5758
    %v6249 = vpop.permute.xlu0 %6248
    %6252 = vset.pattern.permute.xlu0 0
    %6253 = vperm.xlu0 %6252, %v5759
    %v6254 = vpop.permute.xlu0 %6253
    %6257 = vset.pattern.permute.xlu0 0
    %6258 = vperm.xlu0 %6257, %v5760
    %v6259 = vpop.permute.xlu0 %6258
    %6262 = vset.pattern.permute.xlu0 0
    %6263 = vperm.xlu0 %6262, %v5761
    %v6264 = vpop.permute.xlu0 %6263
    %6267 = vset.pattern.permute.xlu0 0
    %6268 = vperm.xlu0 %6267, %v5762
    %v6269 = vpop.permute.xlu0 %6268
    %6272 = vset.pattern.permute.xlu0 0
    %6273 = vperm.xlu0 %6272, %v5763
    %v6274 = vpop.permute.xlu0 %6273
    %6277 = vset.pattern.permute.xlu0 0
    %6278 = vperm.xlu0 %6277, %v5764
    %v6279 = vpop.permute.xlu0 %6278
    %6282 = vset.pattern.permute.xlu0 0
    %6283 = vperm.xlu0 %6282, %v5765
    %v6284 = vpop.permute.xlu0 %6283
    %6287 = vset.pattern.permute.xlu0 0
    %6288 = vperm.xlu0 %6287, %v5766
    %v6289 = vpop.permute.xlu0 %6288
    %6292 = vset.pattern.permute.xlu0 0
    %6293 = vperm.xlu0 %6292, %v5767
    %v6294 = vpop.permute.xlu0 %6293
    %6297 = vset.pattern.permute.xlu0 0
    %6298 = vperm.xlu0 %6297, %v5768
    %v6299 = vpop.permute.xlu0 %6298
    %6302 = vset.pattern.permute.xlu0 0
    %6303 = vperm.xlu0 %6302, %v5769
    %v6304 = vpop.permute.xlu0 %6303
    %6307 = vset.pattern.permute.xlu0 0
    %6308 = vperm.xlu0 %6307, %v5770
    %v6309 = vpop.permute.xlu0 %6308
    %6312 = vset.pattern.permute.xlu0 0
    %6313 = vperm.xlu0 %6312, %v5771
    %v6314 = vpop.permute.xlu0 %6313
    %6317 = vset.pattern.permute.xlu0 0
    %6318 = vperm.xlu0 %6317, %v5772
    %v6319 = vpop.permute.xlu0 %6318
    %6322 = vset.pattern.permute.xlu0 0
    %6323 = vperm.xlu0 %6322, %v5773
    %v6324 = vpop.permute.xlu0 %6323
    %6327 = vset.pattern.permute.xlu0 0
    %6328 = vperm.xlu0 %6327, %v5774
    %v6329 = vpop.permute.xlu0 %6328
    %6332 = vset.pattern.permute.xlu0 0
    %6333 = vperm.xlu0 %6332, %v5775
    %v6334 = vpop.permute.xlu0 %6333
    %6337 = vset.pattern.permute.xlu0 0
    %6338 = vperm.xlu0 %6337, %v5776
    %v6339 = vpop.permute.xlu0 %6338
    %6342 = vset.pattern.permute.xlu0 0
    %6343 = vperm.xlu0 %6342, %v5777
    %v6344 = vpop.permute.xlu0 %6343
    %6347 = vset.pattern.permute.xlu0 0
    %6348 = vperm.xlu0 %6347, %v5778
    %v6349 = vpop.permute.xlu0 %6348
    %6352 = vset.pattern.permute.xlu0 0
    %6353 = vperm.xlu0 %6352, %v5779
    %v6354 = vpop.permute.xlu0 %6353
    %6357 = vset.pattern.permute.xlu0 0
    %6358 = vperm.xlu0 %6357, %v5780
    %v6359 = vpop.permute.xlu0 %6358
    %6362 = vset.pattern.permute.xlu0 0
    %6363 = vperm.xlu0 %6362, %v5781
    %v6364 = vpop.permute.xlu0 %6363
    %6367 = vset.pattern.permute.xlu0 0
    %6368 = vperm.xlu0 %6367, %v5782
    %v6369 = vpop.permute.xlu0 %6368
    %6372 = vset.pattern.permute.xlu0 0
    %6373 = vperm.xlu0 %6372, %v5783
    %v6374 = vpop.permute.xlu0 %6373
    %6377 = vset.pattern.permute.xlu0 0
    %6378 = vperm.xlu0 %6377, %v5784
    %v6379 = vpop.permute.xlu0 %6378
    %6382 = vset.pattern.permute.xlu0 0
    %6383 = vperm.xlu0 %6382, %v5785
    %v6384 = vpop.permute.xlu0 %6383
    %6387 = vset.pattern.permute.xlu0 0
    %6388 = vperm.xlu0 %6387, %v5786
    %v6389 = vpop.permute.xlu0 %6388
    %6392 = vset.pattern.permute.xlu0 0
    %6393 = vperm.xlu0 %6392, %v5787
    %v6394 = vpop.permute.xlu0 %6393
    %6397 = vset.pattern.permute.xlu0 0
    %6398 = vperm.xlu0 %6397, %v5788
    %v6399 = vpop.permute.xlu0 %6398
    %6402 = vset.pattern.permute.xlu0 0
    %6403 = vperm.xlu0 %6402, %v5789
    %v6404 = vpop.permute.xlu0 %6403
    %6407 = vset.pattern.permute.xlu0 0
    %6408 = vperm.xlu0 %6407, %v5790
    %v6409 = vpop.permute.xlu0 %6408
    %6412 = vset.pattern.permute.xlu0 0
    %6413 = vperm.xlu0 %6412, %v5791
    %v6414 = vpop.permute.xlu0 %6413
    %6417 = vset.pattern.permute.xlu0 0
    %6418 = vperm.xlu0 %6417, %v5792
    %v6419 = vpop.permute.xlu0 %6418
    %6422 = vset.pattern.permute.xlu0 0
    %6423 = vperm.xlu0 %6422, %v5793
    %v6424 = vpop.permute.xlu0 %6423
    %6427 = vset.pattern.permute.xlu0 0
    %6428 = vperm.xlu0 %6427, %v5794
    %v6429 = vpop.permute.xlu0 %6428
    %6432 = vset.pattern.permute.xlu0 0
    %6433 = vperm.xlu0 %6432, %v5795
    %v6434 = vpop.permute.xlu0 %6433
    %6437 = vset.pattern.permute.xlu0 0
    %6438 = vperm.xlu0 %6437, %v5796
    %v6439 = vpop.permute.xlu0 %6438
    %6442 = vset.pattern.permute.xlu0 0
    %6443 = vperm.xlu0 %6442, %v5797
    %v6444 = vpop.permute.xlu0 %6443
    %6447 = vset.pattern.permute.xlu0 0
    %6448 = vperm.xlu0 %6447, %v5798
    %v6449 = vpop.permute.xlu0 %6448
    %6452 = vset.pattern.permute.xlu0 0
    %6453 = vperm.xlu0 %6452, %v5799
    %v6454 = vpop.permute.xlu0 %6453
    %6457 = vset.pattern.permute.xlu0 0
    %6458 = vperm.xlu0 %6457, %v5800
    %v6459 = vpop.permute.xlu0 %6458
    %6462 = vset.pattern.permute.xlu0 0
    %6463 = vperm.xlu0 %6462, %v5801
    %v6464 = vpop.permute.xlu0 %6463
    %6467 = vset.pattern.permute.xlu0 0
    %6468 = vperm.xlu0 %6467, %v5802
    %v6469 = vpop.permute.xlu0 %6468
    %6472 = vset.pattern.permute.xlu0 0
    %6473 = vperm.xlu0 %6472, %v5803
    %v6474 = vpop.permute.xlu0 %6473
    %6477 = vset.pattern.permute.xlu0 0
    %6478 = vperm.xlu0 %6477, %v5804
    %v6479 = vpop.permute.xlu0 %6478
    %6482 = vset.pattern.permute.xlu0 0
    %6483 = vperm.xlu0 %6482, %v5805
    %v6484 = vpop.permute.xlu0 %6483
    %6487 = vset.pattern.permute.xlu0 0
    %6488 = vperm.xlu0 %6487, %v5806
    %v6489 = vpop.permute.xlu0 %6488
    %6492 = vset.pattern.permute.xlu0 0
    %6493 = vperm.xlu0 %6492, %v5807
    %v6494 = vpop.permute.xlu0 %6493
    %6497 = vset.pattern.permute.xlu0 0
    %6498 = vperm.xlu0 %6497, %v5808
    %v6499 = vpop.permute.xlu0 %6498
    %6502 = vset.pattern.permute.xlu0 0
    %6503 = vperm.xlu0 %6502, %v5809
    %v6504 = vpop.permute.xlu0 %6503
    %6507 = vset.pattern.permute.xlu0 0
    %6508 = vperm.xlu0 %6507, %v5810
    %v6509 = vpop.permute.xlu0 %6508
    %6512 = vset.pattern.permute.xlu0 0
    %6513 = vperm.xlu0 %6512, %v5811
    %v6514 = vpop.permute.xlu0 %6513
    %6517 = vset.pattern.permute.xlu0 0
    %6518 = vperm.xlu0 %6517, %v5812
    %v6519 = vpop.permute.xlu0 %6518
    %6522 = vset.pattern.permute.xlu0 0
    %6523 = vperm.xlu0 %6522, %v5813
    %v6524 = vpop.permute.xlu0 %6523
    %6527 = vset.pattern.permute.xlu0 0
    %6528 = vperm.xlu0 %6527, %v5814
    %v6529 = vpop.permute.xlu0 %6528
    %6532 = vset.pattern.permute.xlu0 0
    %6533 = vperm.xlu0 %6532, %v5815
    %v6534 = vpop.permute.xlu0 %6533
    %6537 = vset.pattern.permute.xlu0 0
    %6538 = vperm.xlu0 %6537, %v5816
    %v6539 = vpop.permute.xlu0 %6538
    %6542 = vset.pattern.permute.xlu0 0
    %6543 = vperm.xlu0 %6542, %v5817
    %v6544 = vpop.permute.xlu0 %6543
    %6547 = vset.pattern.permute.xlu0 0
    %6548 = vperm.xlu0 %6547, %v5818
    %v6549 = vpop.permute.xlu0 %6548
    %6552 = vset.pattern.permute.xlu0 0
    %6553 = vperm.xlu0 %6552, %v5819
    %v6554 = vpop.permute.xlu0 %6553
    %6557 = vset.pattern.permute.xlu0 0
    %6558 = vperm.xlu0 %6557, %v5820
    %v6559 = vpop.permute.xlu0 %6558
    %6562 = vset.pattern.permute.xlu0 0
    %6563 = vperm.xlu0 %6562, %v5821
    %v6564 = vpop.permute.xlu0 %6563
    %6567 = vset.pattern.permute.xlu0 0
    %6568 = vperm.xlu0 %6567, %v5822
    %v6569 = vpop.permute.xlu0 %6568
    %6572 = vset.pattern.permute.xlu0 0
    %6573 = vperm.xlu0 %6572, %v5823
    %v6574 = vpop.permute.xlu0 %6573
    %6577 = vset.pattern.permute.xlu0 0
    %6578 = vperm.xlu0 %6577, %v5824
    %v6579 = vpop.permute.xlu0 %6578
    %6582 = vset.pattern.permute.xlu0 0
    %6583 = vperm.xlu0 %6582, %v5825
    %v6584 = vpop.permute.xlu0 %6583
    %6587 = vset.pattern.permute.xlu0 0
    %6588 = vperm.xlu0 %6587, %v5826
    %v6589 = vpop.permute.xlu0 %6588
    %6592 = vset.pattern.permute.xlu0 0
    %6593 = vperm.xlu0 %6592, %v5827
    %v6594 = vpop.permute.xlu0 %6593
    %v6596 = vmul.f32 %v5959, %v5828
    %v6597 = vmul.f32 %v5964, %v5829
    %v6598 = vmul.f32 %v5969, %v5830
    %v6599 = vmul.f32 %v5974, %v5831
    %v6600 = vmul.f32 %v5979, %v5832
    %v6601 = vmul.f32 %v5984, %v5833
    %v6602 = vmul.f32 %v5989, %v5834
    %v6603 = vmul.f32 %v5994, %v5835
    %v6604 = vmul.f32 %v5999, %v5836
    %v6605 = vmul.f32 %v6004, %v5837
    %v6606 = vmul.f32 %v6009, %v5838
    %v6607 = vmul.f32 %v6014, %v5839
    %v6608 = vmul.f32 %v6019, %v5840
    %v6609 = vmul.f32 %v6024, %v5841
    %v6610 = vmul.f32 %v6029, %v5842
    %v6611 = vmul.f32 %v6034, %v5843
    %v6612 = vmul.f32 %v6039, %v5844
    %v6613 = vmul.f32 %v6044, %v5845
    %v6614 = vmul.f32 %v6049, %v5846
    %v6615 = vmul.f32 %v6054, %v5847
    %v6616 = vmul.f32 %v6059, %v5848
    %v6617 = vmul.f32 %v6064, %v5849
    %v6618 = vmul.f32 %v6069, %v5850
    %v6619 = vmul.f32 %v6074, %v5851
    %v6620 = vmul.f32 %v6079, %v5852
    %v6621 = vmul.f32 %v6084, %v5853
    %v6622 = vmul.f32 %v6089, %v5854
    %v6623 = vmul.f32 %v6094, %v5855
    %v6624 = vmul.f32 %v6099, %v5856
    %v6625 = vmul.f32 %v6104, %v5857
    %v6626 = vmul.f32 %v6109, %v5858
    %v6627 = vmul.f32 %v6114, %v5859
    %v6628 = vmul.f32 %v6119, %v5860
    %v6629 = vmul.f32 %v6124, %v5861
    %v6630 = vmul.f32 %v6129, %v5862
    %v6631 = vmul.f32 %v6134, %v5863
    %v6632 = vmul.f32 %v6139, %v5864
    %v6633 = vmul.f32 %v6144, %v5865
    %v6634 = vmul.f32 %v6149, %v5866
    %v6635 = vmul.f32 %v6154, %v5867
    %v6636 = vmul.f32 %v6159, %v5868
    %v6637 = vmul.f32 %v6164, %v5869
    %v6638 = vmul.f32 %v6169, %v5870
    %v6639 = vmul.f32 %v6174, %v5871
    %v6640 = vmul.f32 %v6179, %v5872
    %v6641 = vmul.f32 %v6184, %v5873
    %v6642 = vmul.f32 %v6189, %v5874
    %v6643 = vmul.f32 %v6194, %v5875
    %v6644 = vmul.f32 %v6199, %v5876
    %v6645 = vmul.f32 %v6204, %v5877
    %v6646 = vmul.f32 %v6209, %v5878
    %v6647 = vmul.f32 %v6214, %v5879
    %v6648 = vmul.f32 %v6219, %v5880
    %v6649 = vmul.f32 %v6224, %v5881
    %v6650 = vmul.f32 %v6229, %v5882
    %v6651 = vmul.f32 %v6234, %v5883
    %v6652 = vmul.f32 %v6239, %v5884
    %v6653 = vmul.f32 %v6244, %v5885
    %v6654 = vmul.f32 %v6249, %v5886
    %v6655 = vmul.f32 %v6254, %v5887
    %v6656 = vmul.f32 %v6259, %v5888
    %v6657 = vmul.f32 %v6264, %v5889
    %v6658 = vmul.f32 %v6269, %v5890
    %v6659 = vmul.f32 %v6274, %v5891
    %v6660 = vmul.f32 %v6279, %v5892
    %v6661 = vmul.f32 %v6284, %v5893
    %v6662 = vmul.f32 %v6289, %v5894
    %v6663 = vmul.f32 %v6294, %v5895
    %v6664 = vmul.f32 %v6299, %v5896
    %v6665 = vmul.f32 %v6304, %v5897
    %v6666 = vmul.f32 %v6309, %v5898
    %v6667 = vmul.f32 %v6314, %v5899
    %v6668 = vmul.f32 %v6319, %v5900
    %v6669 = vmul.f32 %v6324, %v5901
    %v6670 = vmul.f32 %v6329, %v5902
    %v6671 = vmul.f32 %v6334, %v5903
    %v6672 = vmul.f32 %v6339, %v5904
    %v6673 = vmul.f32 %v6344, %v5905
    %v6674 = vmul.f32 %v6349, %v5906
    %v6675 = vmul.f32 %v6354, %v5907
    %v6676 = vmul.f32 %v6359, %v5908
    %v6677 = vmul.f32 %v6364, %v5909
    %v6678 = vmul.f32 %v6369, %v5910
    %v6679 = vmul.f32 %v6374, %v5911
    %v6680 = vmul.f32 %v6379, %v5912
    %v6681 = vmul.f32 %v6384, %v5913
    %v6682 = vmul.f32 %v6389, %v5914
    %v6683 = vmul.f32 %v6394, %v5915
    %v6684 = vmul.f32 %v6399, %v5916
    %v6685 = vmul.f32 %v6404, %v5917
    %v6686 = vmul.f32 %v6409, %v5918
    %v6687 = vmul.f32 %v6414, %v5919
    %v6688 = vmul.f32 %v6419, %v5920
    %v6689 = vmul.f32 %v6424, %v5921
    %v6690 = vmul.f32 %v6429, %v5922
    %v6691 = vmul.f32 %v6434, %v5923
    %v6692 = vmul.f32 %v6439, %v5924
    %v6693 = vmul.f32 %v6444, %v5925
    %v6694 = vmul.f32 %v6449, %v5926
    %v6695 = vmul.f32 %v6454, %v5927
    %v6696 = vmul.f32 %v6459, %v5928
    %v6697 = vmul.f32 %v6464, %v5929
    %v6698 = vmul.f32 %v6469, %v5930
    %v6699 = vmul.f32 %v6474, %v5931
    %v6700 = vmul.f32 %v6479, %v5932
    %v6701 = vmul.f32 %v6484, %v5933
    %v6702 = vmul.f32 %v6489, %v5934
    %v6703 = vmul.f32 %v6494, %v5935
    %v6704 = vmul.f32 %v6499, %v5936
    %v6705 = vmul.f32 %v6504, %v5937
    %v6706 = vmul.f32 %v6509, %v5938
    %v6707 = vmul.f32 %v6514, %v5939
    %v6708 = vmul.f32 %v6519, %v5940
    %v6709 = vmul.f32 %v6524, %v5941
    %v6710 = vmul.f32 %v6529, %v5942
    %v6711 = vmul.f32 %v6534, %v5943
    %v6712 = vmul.f32 %v6539, %v5944
    %v6713 = vmul.f32 %v6544, %v5945
    %v6714 = vmul.f32 %v6549, %v5946
    %v6715 = vmul.f32 %v6554, %v5947
    %v6716 = vmul.f32 %v6559, %v5948
    %v6717 = vmul.f32 %v6564, %v5949
    %v6718 = vmul.f32 %v6569, %v5950
    %v6719 = vmul.f32 %v6574, %v5951
    %v6720 = vmul.f32 %v6579, %v5952
    %v6721 = vmul.f32 %v6584, %v5953
    %v6722 = vmul.f32 %v6589, %v5954
    %v6723 = vmul.f32 %v6594, %v5955
    %v6724 = vadd.f32 %v6596, %v6597
    %v6725 = vadd.f32 %v6724, %v6598
    %v6726 = vadd.f32 %v6725, %v6599
    %v6727 = vadd.f32 %v6726, %v6600
    %v6728 = vadd.f32 %v6727, %v6601
    %v6729 = vadd.f32 %v6728, %v6602
    %v6730 = vadd.f32 %v6729, %v6603
    %v6731 = vadd.f32 %v6730, %v6604
    %v6732 = vadd.f32 %v6731, %v6605
    %v6733 = vadd.f32 %v6732, %v6606
    %v6734 = vadd.f32 %v6733, %v6607
    %v6735 = vadd.f32 %v6734, %v6608
    %v6736 = vadd.f32 %v6735, %v6609
    %v6737 = vadd.f32 %v6736, %v6610
    %v6738 = vadd.f32 %v6737, %v6611
    %v6739 = vrot.slane %v6738, 4
    %v6740 = vadd.f32 %v6738, %v6739
    %v6741 = vrot.slane %v6740, 2
    %v6742 = vadd.f32 %v6740, %v6741
    %v6743 = vrot.slane %v6742, 1
    %v6744 = vadd.f32 %v6742, %v6743
    %v6745 = vadd.f32 %v6612, %v6613
    %v6746 = vadd.f32 %v6745, %v6614
    %v6747 = vadd.f32 %v6746, %v6615
    %v6748 = vadd.f32 %v6747, %v6616
    %v6749 = vadd.f32 %v6748, %v6617
    %v6750 = vadd.f32 %v6749, %v6618
    %v6751 = vadd.f32 %v6750, %v6619
    %v6752 = vadd.f32 %v6751, %v6620
    %v6753 = vadd.f32 %v6752, %v6621
    %v6754 = vadd.f32 %v6753, %v6622
    %v6755 = vadd.f32 %v6754, %v6623
    %v6756 = vadd.f32 %v6755, %v6624
    %v6757 = vadd.f32 %v6756, %v6625
    %v6758 = vadd.f32 %v6757, %v6626
    %v6759 = vadd.f32 %v6758, %v6627
    %v6760 = vrot.slane %v6759, 4
    %v6761 = vadd.f32 %v6759, %v6760
    %v6762 = vrot.slane %v6761, 2
    %v6763 = vadd.f32 %v6761, %v6762
    %v6764 = vrot.slane %v6763, 1
    %v6765 = vadd.f32 %v6763, %v6764
    %v6766 = vadd.f32 %v6628, %v6629
    %v6767 = vadd.f32 %v6766, %v6630
    %v6768 = vadd.f32 %v6767, %v6631
    %v6769 = vadd.f32 %v6768, %v6632
    %v6770 = vadd.f32 %v6769, %v6633
    %v6771 = vadd.f32 %v6770, %v6634
    %v6772 = vadd.f32 %v6771, %v6635
    %v6773 = vadd.f32 %v6772, %v6636
    %v6774 = vadd.f32 %v6773, %v6637
    %v6775 = vadd.f32 %v6774, %v6638
    %v6776 = vadd.f32 %v6775, %v6639
    %v6777 = vadd.f32 %v6776, %v6640
    %v6778 = vadd.f32 %v6777, %v6641
    %v6779 = vadd.f32 %v6778, %v6642
    %v6780 = vadd.f32 %v6779, %v6643
    %v6781 = vrot.slane %v6780, 4
    %v6782 = vadd.f32 %v6780, %v6781
    %v6783 = vrot.slane %v6782, 2
    %v6784 = vadd.f32 %v6782, %v6783
    %v6785 = vrot.slane %v6784, 1
    %v6786 = vadd.f32 %v6784, %v6785
    %v6787 = vadd.f32 %v6644, %v6645
    %v6788 = vadd.f32 %v6787, %v6646
    %v6789 = vadd.f32 %v6788, %v6647
    %v6790 = vadd.f32 %v6789, %v6648
    %v6791 = vadd.f32 %v6790, %v6649
    %v6792 = vadd.f32 %v6791, %v6650
    %v6793 = vadd.f32 %v6792, %v6651
    %v6794 = vadd.f32 %v6793, %v6652
    %v6795 = vadd.f32 %v6794, %v6653
    %v6796 = vadd.f32 %v6795, %v6654
    %v6797 = vadd.f32 %v6796, %v6655
    %v6798 = vadd.f32 %v6797, %v6656
    %v6799 = vadd.f32 %v6798, %v6657
    %v6800 = vadd.f32 %v6799, %v6658
    %v6801 = vadd.f32 %v6800, %v6659
    %v6802 = vrot.slane %v6801, 4
    %v6803 = vadd.f32 %v6801, %v6802
    %v6804 = vrot.slane %v6803, 2
    %v6805 = vadd.f32 %v6803, %v6804
    %v6806 = vrot.slane %v6805, 1
    %v6807 = vadd.f32 %v6805, %v6806
    %v6808 = vadd.f32 %v6660, %v6661
    %v6809 = vadd.f32 %v6808, %v6662
    %v6810 = vadd.f32 %v6809, %v6663
    %v6811 = vadd.f32 %v6810, %v6664
    %v6812 = vadd.f32 %v6811, %v6665
    %v6813 = vadd.f32 %v6812, %v6666
    %v6814 = vadd.f32 %v6813, %v6667
    %v6815 = vadd.f32 %v6814, %v6668
    %v6816 = vadd.f32 %v6815, %v6669
    %v6817 = vadd.f32 %v6816, %v6670
    %v6818 = vadd.f32 %v6817, %v6671
    %v6819 = vadd.f32 %v6818, %v6672
    %v6820 = vadd.f32 %v6819, %v6673
    %v6821 = vadd.f32 %v6820, %v6674
    %v6822 = vadd.f32 %v6821, %v6675
    %v6823 = vrot.slane %v6822, 4
    %v6824 = vadd.f32 %v6822, %v6823
    %v6825 = vrot.slane %v6824, 2
    %v6826 = vadd.f32 %v6824, %v6825
    %v6827 = vrot.slane %v6826, 1
    %v6828 = vadd.f32 %v6826, %v6827
    %v6829 = vadd.f32 %v6676, %v6677
    %v6830 = vadd.f32 %v6829, %v6678
    %v6831 = vadd.f32 %v6830, %v6679
    %v6832 = vadd.f32 %v6831, %v6680
    %v6833 = vadd.f32 %v6832, %v6681
    %v6834 = vadd.f32 %v6833, %v6682
    %v6835 = vadd.f32 %v6834, %v6683
    %v6836 = vadd.f32 %v6835, %v6684
    %v6837 = vadd.f32 %v6836, %v6685
    %v6838 = vadd.f32 %v6837, %v6686
    %v6839 = vadd.f32 %v6838, %v6687
    %v6840 = vadd.f32 %v6839, %v6688
    %v6841 = vadd.f32 %v6840, %v6689
    %v6842 = vadd.f32 %v6841, %v6690
    %v6843 = vadd.f32 %v6842, %v6691
    %v6844 = vrot.slane %v6843, 4
    %v6845 = vadd.f32 %v6843, %v6844
    %v6846 = vrot.slane %v6845, 2
    %v6847 = vadd.f32 %v6845, %v6846
    %v6848 = vrot.slane %v6847, 1
    %v6849 = vadd.f32 %v6847, %v6848
    %v6850 = vadd.f32 %v6692, %v6693
    %v6851 = vadd.f32 %v6850, %v6694
    %v6852 = vadd.f32 %v6851, %v6695
    %v6853 = vadd.f32 %v6852, %v6696
    %v6854 = vadd.f32 %v6853, %v6697
    %v6855 = vadd.f32 %v6854, %v6698
    %v6856 = vadd.f32 %v6855, %v6699
    %v6857 = vadd.f32 %v6856, %v6700
    %v6858 = vadd.f32 %v6857, %v6701
    %v6859 = vadd.f32 %v6858, %v6702
    %v6860 = vadd.f32 %v6859, %v6703
    %v6861 = vadd.f32 %v6860, %v6704
    %v6862 = vadd.f32 %v6861, %v6705
    %v6863 = vadd.f32 %v6862, %v6706
    %v6864 = vadd.f32 %v6863, %v6707
    %v6865 = vrot.slane %v6864, 4
    %v6866 = vadd.f32 %v6864, %v6865
    %v6867 = vrot.slane %v6866, 2
    %v6868 = vadd.f32 %v6866, %v6867
    %v6869 = vrot.slane %v6868, 1
    %v6870 = vadd.f32 %v6868, %v6869
    %v6871 = vadd.f32 %v6708, %v6709
    %v6872 = vadd.f32 %v6871, %v6710
    %v6873 = vadd.f32 %v6872, %v6711
    %v6874 = vadd.f32 %v6873, %v6712
    %v6875 = vadd.f32 %v6874, %v6713
    %v6876 = vadd.f32 %v6875, %v6714
    %v6877 = vadd.f32 %v6876, %v6715
    %v6878 = vadd.f32 %v6877, %v6716
    %v6879 = vadd.f32 %v6878, %v6717
    %v6880 = vadd.f32 %v6879, %v6718
    %v6881 = vadd.f32 %v6880, %v6719
    %v6882 = vadd.f32 %v6881, %v6720
    %v6883 = vadd.f32 %v6882, %v6721
    %v6884 = vadd.f32 %v6883, %v6722
    %v6885 = vadd.f32 %v6884, %v6723
    %v6886 = vrot.slane %v6885, 4
    %v6887 = vadd.f32 %v6885, %v6886
    %v6888 = vrot.slane %v6887, 2
    %v6889 = vadd.f32 %v6887, %v6888
    %v6890 = vrot.slane %v6889, 1
    %v6891 = vadd.f32 %v6889, %v6890
    %v6900 = vsel %vm4062, %v6765, %v6744
    %v6901 = vsel %vm4064, %v6786, %v6900
    %v6902 = vsel %vm4066, %v6807, %v6901
    %v6903 = vsel %vm4068, %v6828, %v6902
    %v6904 = vsel %vm4070, %v6849, %v6903
    %v6905 = vsel %vm4072, %v6870, %v6904
    %v6906 = vsel %vm4074, %v6891, %v6905
    %6908 = vst [vmem:[#allocation5] sm:$0xff] %v6906
    %v6909 = vlaneseq
    %v6910 = vshrl.u32 %v6909, 7
    %v6911 = vsub.s32 %v3399, %v6910
    %v6912 = vrot.slane %v5959, %v6911
    %v6913 = vlaneseq
    %v6914 = vshrl.u32 %v6913, 7
    %v6915 = vsub.s32 %v3404, %v6914
    %v6916 = vrot.slane %v5964, %v6915
    %v6917 = vsel %vm3409, %v6916, %v6912
    %v6918 = vlaneseq
    %v6919 = vshrl.u32 %v6918, 7
    %v6920 = vsub.s32 %v3411, %v6919
    %v6921 = vrot.slane %v5969, %v6920
    %v6922 = vsel %vm3416, %v6921, %v6917
    %v6923 = vlaneseq
    %v6924 = vshrl.u32 %v6923, 7
    %v6925 = vsub.s32 %v3418, %v6924
    %v6926 = vrot.slane %v5974, %v6925
    %v6927 = vsel %vm3423, %v6926, %v6922
    %v6928 = vlaneseq
    %v6929 = vshrl.u32 %v6928, 7
    %v6930 = vsub.s32 %v3425, %v6929
    %v6931 = vrot.slane %v5979, %v6930
    %v6932 = vsel %vm3430, %v6931, %v6927
    %v6933 = vlaneseq
    %v6934 = vshrl.u32 %v6933, 7
    %v6935 = vsub.s32 %v3432, %v6934
    %v6936 = vrot.slane %v5984, %v6935
    %v6937 = vsel %vm3437, %v6936, %v6932
    %v6938 = vlaneseq
    %v6939 = vshrl.u32 %v6938, 7
    %v6940 = vsub.s32 %v3439, %v6939
    %v6941 = vrot.slane %v5989, %v6940
    %v6942 = vsel %vm3444, %v6941, %v6937
    %v6943 = vlaneseq
    %v6944 = vshrl.u32 %v6943, 7
    %v6945 = vsub.s32 %v3446, %v6944
    %v6946 = vrot.slane %v5994, %v6945
    %v6947 = vsel %vm3451, %v6946, %v6942
    %v6948 = vlaneseq
    %v6949 = vshrl.u32 %v6948, 7
    %v6950 = vsub.s32 %v3453, %v6949
    %v6951 = vrot.slane %v5999, %v6950
    %v6952 = vsel %vm3458, %v6951, %v6947
    %v6953 = vlaneseq
    %v6954 = vshrl.u32 %v6953, 7
    %v6955 = vsub.s32 %v3460, %v6954
    %v6956 = vrot.slane %v6004, %v6955
    %v6957 = vsel %vm3465, %v6956, %v6952
    %v6958 = vlaneseq
    %v6959 = vshrl.u32 %v6958, 7
    %v6960 = vsub.s32 %v3467, %v6959
    %v6961 = vrot.slane %v6009, %v6960
    %v6962 = vsel %vm3472, %v6961, %v6957
    %v6963 = vlaneseq
    %v6964 = vshrl.u32 %v6963, 7
    %v6965 = vsub.s32 %v3474, %v6964
    %v6966 = vrot.slane %v6014, %v6965
    %v6967 = vsel %vm3479, %v6966, %v6962
    %v6968 = vlaneseq
    %v6969 = vshrl.u32 %v6968, 7
    %v6970 = vsub.s32 %v3481, %v6969
    %v6971 = vrot.slane %v6019, %v6970
    %v6972 = vsel %vm3486, %v6971, %v6967
    %v6973 = vlaneseq
    %v6974 = vshrl.u32 %v6973, 7
    %v6975 = vsub.s32 %v3488, %v6974
    %v6976 = vrot.slane %v6024, %v6975
    %v6977 = vsel %vm3493, %v6976, %v6972
    %v6978 = vlaneseq
    %v6979 = vshrl.u32 %v6978, 7
    %v6980 = vsub.s32 %v3495, %v6979
    %v6981 = vrot.slane %v6029, %v6980
    %v6982 = vsel %vm3500, %v6981, %v6977
    %v6983 = vlaneseq
    %v6984 = vshrl.u32 %v6983, 7
    %v6985 = vsub.s32 %v3502, %v6984
    %v6986 = vrot.slane %v6034, %v6985
    %v6987 = vsel %vm3507, %v6986, %v6982
    %v6988 = vlaneseq
    %v6989 = vshrl.u32 %v6988, 7
    %v6990 = vsub.s32 %v3399, %v6989
    %v6991 = vrot.slane %v6039, %v6990
    %v6992 = vlaneseq
    %v6993 = vshrl.u32 %v6992, 7
    %v6994 = vsub.s32 %v3404, %v6993
    %v6995 = vrot.slane %v6044, %v6994
    %v6996 = vsel %vm3409, %v6995, %v6991
    %v6997 = vlaneseq
    %v6998 = vshrl.u32 %v6997, 7
    %v6999 = vsub.s32 %v3411, %v6998
    %v7000 = vrot.slane %v6049, %v6999
    %v7001 = vsel %vm3416, %v7000, %v6996
    %v7002 = vlaneseq
    %v7003 = vshrl.u32 %v7002, 7
    %v7004 = vsub.s32 %v3418, %v7003
    %v7005 = vrot.slane %v6054, %v7004
    %v7006 = vsel %vm3423, %v7005, %v7001
    %v7007 = vlaneseq
    %v7008 = vshrl.u32 %v7007, 7
    %v7009 = vsub.s32 %v3425, %v7008
    %v7010 = vrot.slane %v6059, %v7009
    %v7011 = vsel %vm3430, %v7010, %v7006
    %v7012 = vlaneseq
    %v7013 = vshrl.u32 %v7012, 7
    %v7014 = vsub.s32 %v3432, %v7013
    %v7015 = vrot.slane %v6064, %v7014
    %v7016 = vsel %vm3437, %v7015, %v7011
    %v7017 = vlaneseq
    %v7018 = vshrl.u32 %v7017, 7
    %v7019 = vsub.s32 %v3439, %v7018
    %v7020 = vrot.slane %v6069, %v7019
    %v7021 = vsel %vm3444, %v7020, %v7016
    %v7022 = vlaneseq
    %v7023 = vshrl.u32 %v7022, 7
    %v7024 = vsub.s32 %v3446, %v7023
    %v7025 = vrot.slane %v6074, %v7024
    %v7026 = vsel %vm3451, %v7025, %v7021
    %v7027 = vlaneseq
    %v7028 = vshrl.u32 %v7027, 7
    %v7029 = vsub.s32 %v3453, %v7028
    %v7030 = vrot.slane %v6079, %v7029
    %v7031 = vsel %vm3458, %v7030, %v7026
    %v7032 = vlaneseq
    %v7033 = vshrl.u32 %v7032, 7
    %v7034 = vsub.s32 %v3460, %v7033
    %v7035 = vrot.slane %v6084, %v7034
    %v7036 = vsel %vm3465, %v7035, %v7031
    %v7037 = vlaneseq
    %v7038 = vshrl.u32 %v7037, 7
    %v7039 = vsub.s32 %v3467, %v7038
    %v7040 = vrot.slane %v6089, %v7039
    %v7041 = vsel %vm3472, %v7040, %v7036
    %v7042 = vlaneseq
    %v7043 = vshrl.u32 %v7042, 7
    %v7044 = vsub.s32 %v3474, %v7043
    %v7045 = vrot.slane %v6094, %v7044
    %v7046 = vsel %vm3479, %v7045, %v7041
    %v7047 = vlaneseq
    %v7048 = vshrl.u32 %v7047, 7
    %v7049 = vsub.s32 %v3481, %v7048
    %v7050 = vrot.slane %v6099, %v7049
    %v7051 = vsel %vm3486, %v7050, %v7046
    %v7052 = vlaneseq
    %v7053 = vshrl.u32 %v7052, 7
    %v7054 = vsub.s32 %v3488, %v7053
    %v7055 = vrot.slane %v6104, %v7054
    %v7056 = vsel %vm3493, %v7055, %v7051
    %v7057 = vlaneseq
    %v7058 = vshrl.u32 %v7057, 7
    %v7059 = vsub.s32 %v3495, %v7058
    %v7060 = vrot.slane %v6109, %v7059
    %v7061 = vsel %vm3500, %v7060, %v7056
    %v7062 = vlaneseq
    %v7063 = vshrl.u32 %v7062, 7
    %v7064 = vsub.s32 %v3502, %v7063
    %v7065 = vrot.slane %v6114, %v7064
    %v7066 = vsel %vm3507, %v7065, %v7061
    %v7067 = vlaneseq
    %v7068 = vshrl.u32 %v7067, 7
    %v7069 = vsub.s32 %v3399, %v7068
    %v7070 = vrot.slane %v6119, %v7069
    %v7071 = vlaneseq
    %v7072 = vshrl.u32 %v7071, 7
    %v7073 = vsub.s32 %v3404, %v7072
    %v7074 = vrot.slane %v6124, %v7073
    %v7075 = vsel %vm3409, %v7074, %v7070
    %v7076 = vlaneseq
    %v7077 = vshrl.u32 %v7076, 7
    %v7078 = vsub.s32 %v3411, %v7077
    %v7079 = vrot.slane %v6129, %v7078
    %v7080 = vsel %vm3416, %v7079, %v7075
    %v7081 = vlaneseq
    %v7082 = vshrl.u32 %v7081, 7
    %v7083 = vsub.s32 %v3418, %v7082
    %v7084 = vrot.slane %v6134, %v7083
    %v7085 = vsel %vm3423, %v7084, %v7080
    %v7086 = vlaneseq
    %v7087 = vshrl.u32 %v7086, 7
    %v7088 = vsub.s32 %v3425, %v7087
    %v7089 = vrot.slane %v6139, %v7088
    %v7090 = vsel %vm3430, %v7089, %v7085
    %v7091 = vlaneseq
    %v7092 = vshrl.u32 %v7091, 7
    %v7093 = vsub.s32 %v3432, %v7092
    %v7094 = vrot.slane %v6144, %v7093
    %v7095 = vsel %vm3437, %v7094, %v7090
    %v7096 = vlaneseq
    %v7097 = vshrl.u32 %v7096, 7
    %v7098 = vsub.s32 %v3439, %v7097
    %v7099 = vrot.slane %v6149, %v7098
    %v7100 = vsel %vm3444, %v7099, %v7095
    %v7101 = vlaneseq
    %v7102 = vshrl.u32 %v7101, 7
    %v7103 = vsub.s32 %v3446, %v7102
    %v7104 = vrot.slane %v6154, %v7103
    %v7105 = vsel %vm3451, %v7104, %v7100
    %v7106 = vlaneseq
    %v7107 = vshrl.u32 %v7106, 7
    %v7108 = vsub.s32 %v3453, %v7107
    %v7109 = vrot.slane %v6159, %v7108
    %v7110 = vsel %vm3458, %v7109, %v7105
    %v7111 = vlaneseq
    %v7112 = vshrl.u32 %v7111, 7
    %v7113 = vsub.s32 %v3460, %v7112
    %v7114 = vrot.slane %v6164, %v7113
    %v7115 = vsel %vm3465, %v7114, %v7110
    %v7116 = vlaneseq
    %v7117 = vshrl.u32 %v7116, 7
    %v7118 = vsub.s32 %v3467, %v7117
    %v7119 = vrot.slane %v6169, %v7118
    %v7120 = vsel %vm3472, %v7119, %v7115
    %v7121 = vlaneseq
    %v7122 = vshrl.u32 %v7121, 7
    %v7123 = vsub.s32 %v3474, %v7122
    %v7124 = vrot.slane %v6174, %v7123
    %v7125 = vsel %vm3479, %v7124, %v7120
    %v7126 = vlaneseq
    %v7127 = vshrl.u32 %v7126, 7
    %v7128 = vsub.s32 %v3481, %v7127
    %v7129 = vrot.slane %v6179, %v7128
    %v7130 = vsel %vm3486, %v7129, %v7125
    %v7131 = vlaneseq
    %v7132 = vshrl.u32 %v7131, 7
    %v7133 = vsub.s32 %v3488, %v7132
    %v7134 = vrot.slane %v6184, %v7133
    %v7135 = vsel %vm3493, %v7134, %v7130
    %v7136 = vlaneseq
    %v7137 = vshrl.u32 %v7136, 7
    %v7138 = vsub.s32 %v3495, %v7137
    %v7139 = vrot.slane %v6189, %v7138
    %v7140 = vsel %vm3500, %v7139, %v7135
    %v7141 = vlaneseq
    %v7142 = vshrl.u32 %v7141, 7
    %v7143 = vsub.s32 %v3502, %v7142
    %v7144 = vrot.slane %v6194, %v7143
    %v7145 = vsel %vm3507, %v7144, %v7140
    %v7146 = vlaneseq
    %v7147 = vshrl.u32 %v7146, 7
    %v7148 = vsub.s32 %v3399, %v7147
    %v7149 = vrot.slane %v6199, %v7148
    %v7150 = vlaneseq
    %v7151 = vshrl.u32 %v7150, 7
    %v7152 = vsub.s32 %v3404, %v7151
    %v7153 = vrot.slane %v6204, %v7152
    %v7154 = vsel %vm3409, %v7153, %v7149
    %v7155 = vlaneseq
    %v7156 = vshrl.u32 %v7155, 7
    %v7157 = vsub.s32 %v3411, %v7156
    %v7158 = vrot.slane %v6209, %v7157
    %v7159 = vsel %vm3416, %v7158, %v7154
    %v7160 = vlaneseq
    %v7161 = vshrl.u32 %v7160, 7
    %v7162 = vsub.s32 %v3418, %v7161
    %v7163 = vrot.slane %v6214, %v7162
    %v7164 = vsel %vm3423, %v7163, %v7159
    %v7165 = vlaneseq
    %v7166 = vshrl.u32 %v7165, 7
    %v7167 = vsub.s32 %v3425, %v7166
    %v7168 = vrot.slane %v6219, %v7167
    %v7169 = vsel %vm3430, %v7168, %v7164
    %v7170 = vlaneseq
    %v7171 = vshrl.u32 %v7170, 7
    %v7172 = vsub.s32 %v3432, %v7171
    %v7173 = vrot.slane %v6224, %v7172
    %v7174 = vsel %vm3437, %v7173, %v7169
    %v7175 = vlaneseq
    %v7176 = vshrl.u32 %v7175, 7
    %v7177 = vsub.s32 %v3439, %v7176
    %v7178 = vrot.slane %v6229, %v7177
    %v7179 = vsel %vm3444, %v7178, %v7174
    %v7180 = vlaneseq
    %v7181 = vshrl.u32 %v7180, 7
    %v7182 = vsub.s32 %v3446, %v7181
    %v7183 = vrot.slane %v6234, %v7182
    %v7184 = vsel %vm3451, %v7183, %v7179
    %v7185 = vlaneseq
    %v7186 = vshrl.u32 %v7185, 7
    %v7187 = vsub.s32 %v3453, %v7186
    %v7188 = vrot.slane %v6239, %v7187
    %v7189 = vsel %vm3458, %v7188, %v7184
    %v7190 = vlaneseq
    %v7191 = vshrl.u32 %v7190, 7
    %v7192 = vsub.s32 %v3460, %v7191
    %v7193 = vrot.slane %v6244, %v7192
    %v7194 = vsel %vm3465, %v7193, %v7189
    %v7195 = vlaneseq
    %v7196 = vshrl.u32 %v7195, 7
    %v7197 = vsub.s32 %v3467, %v7196
    %v7198 = vrot.slane %v6249, %v7197
    %v7199 = vsel %vm3472, %v7198, %v7194
    %v7200 = vlaneseq
    %v7201 = vshrl.u32 %v7200, 7
    %v7202 = vsub.s32 %v3474, %v7201
    %v7203 = vrot.slane %v6254, %v7202
    %v7204 = vsel %vm3479, %v7203, %v7199
    %v7205 = vlaneseq
    %v7206 = vshrl.u32 %v7205, 7
    %v7207 = vsub.s32 %v3481, %v7206
    %v7208 = vrot.slane %v6259, %v7207
    %v7209 = vsel %vm3486, %v7208, %v7204
    %v7210 = vlaneseq
    %v7211 = vshrl.u32 %v7210, 7
    %v7212 = vsub.s32 %v3488, %v7211
    %v7213 = vrot.slane %v6264, %v7212
    %v7214 = vsel %vm3493, %v7213, %v7209
    %v7215 = vlaneseq
    %v7216 = vshrl.u32 %v7215, 7
    %v7217 = vsub.s32 %v3495, %v7216
    %v7218 = vrot.slane %v6269, %v7217
    %v7219 = vsel %vm3500, %v7218, %v7214
    %v7220 = vlaneseq
    %v7221 = vshrl.u32 %v7220, 7
    %v7222 = vsub.s32 %v3502, %v7221
    %v7223 = vrot.slane %v6274, %v7222
    %v7224 = vsel %vm3507, %v7223, %v7219
    %v7225 = vlaneseq
    %v7226 = vshrl.u32 %v7225, 7
    %v7227 = vsub.s32 %v3399, %v7226
    %v7228 = vrot.slane %v6279, %v7227
    %v7229 = vlaneseq
    %v7230 = vshrl.u32 %v7229, 7
    %v7231 = vsub.s32 %v3404, %v7230
    %v7232 = vrot.slane %v6284, %v7231
    %v7233 = vsel %vm3409, %v7232, %v7228
    %v7234 = vlaneseq
    %v7235 = vshrl.u32 %v7234, 7
    %v7236 = vsub.s32 %v3411, %v7235
    %v7237 = vrot.slane %v6289, %v7236
    %v7238 = vsel %vm3416, %v7237, %v7233
    %v7239 = vlaneseq
    %v7240 = vshrl.u32 %v7239, 7
    %v7241 = vsub.s32 %v3418, %v7240
    %v7242 = vrot.slane %v6294, %v7241
    %v7243 = vsel %vm3423, %v7242, %v7238
    %v7244 = vlaneseq
    %v7245 = vshrl.u32 %v7244, 7
    %v7246 = vsub.s32 %v3425, %v7245
    %v7247 = vrot.slane %v6299, %v7246
    %v7248 = vsel %vm3430, %v7247, %v7243
    %v7249 = vlaneseq
    %v7250 = vshrl.u32 %v7249, 7
    %v7251 = vsub.s32 %v3432, %v7250
    %v7252 = vrot.slane %v6304, %v7251
    %v7253 = vsel %vm3437, %v7252, %v7248
    %v7254 = vlaneseq
    %v7255 = vshrl.u32 %v7254, 7
    %v7256 = vsub.s32 %v3439, %v7255
    %v7257 = vrot.slane %v6309, %v7256
    %v7258 = vsel %vm3444, %v7257, %v7253
    %v7259 = vlaneseq
    %v7260 = vshrl.u32 %v7259, 7
    %v7261 = vsub.s32 %v3446, %v7260
    %v7262 = vrot.slane %v6314, %v7261
    %v7263 = vsel %vm3451, %v7262, %v7258
    %v7264 = vlaneseq
    %v7265 = vshrl.u32 %v7264, 7
    %v7266 = vsub.s32 %v3453, %v7265
    %v7267 = vrot.slane %v6319, %v7266
    %v7268 = vsel %vm3458, %v7267, %v7263
    %v7269 = vlaneseq
    %v7270 = vshrl.u32 %v7269, 7
    %v7271 = vsub.s32 %v3460, %v7270
    %v7272 = vrot.slane %v6324, %v7271
    %v7273 = vsel %vm3465, %v7272, %v7268
    %v7274 = vlaneseq
    %v7275 = vshrl.u32 %v7274, 7
    %v7276 = vsub.s32 %v3467, %v7275
    %v7277 = vrot.slane %v6329, %v7276
    %v7278 = vsel %vm3472, %v7277, %v7273
    %v7279 = vlaneseq
    %v7280 = vshrl.u32 %v7279, 7
    %v7281 = vsub.s32 %v3474, %v7280
    %v7282 = vrot.slane %v6334, %v7281
    %v7283 = vsel %vm3479, %v7282, %v7278
    %v7284 = vlaneseq
    %v7285 = vshrl.u32 %v7284, 7
    %v7286 = vsub.s32 %v3481, %v7285
    %v7287 = vrot.slane %v6339, %v7286
    %v7288 = vsel %vm3486, %v7287, %v7283
    %v7289 = vlaneseq
    %v7290 = vshrl.u32 %v7289, 7
    %v7291 = vsub.s32 %v3488, %v7290
    %v7292 = vrot.slane %v6344, %v7291
    %v7293 = vsel %vm3493, %v7292, %v7288
    %v7294 = vlaneseq
    %v7295 = vshrl.u32 %v7294, 7
    %v7296 = vsub.s32 %v3495, %v7295
    %v7297 = vrot.slane %v6349, %v7296
    %v7298 = vsel %vm3500, %v7297, %v7293
    %v7299 = vlaneseq
    %v7300 = vshrl.u32 %v7299, 7
    %v7301 = vsub.s32 %v3502, %v7300
    %v7302 = vrot.slane %v6354, %v7301
    %v7303 = vsel %vm3507, %v7302, %v7298
    %v7304 = vlaneseq
    %v7305 = vshrl.u32 %v7304, 7
    %v7306 = vsub.s32 %v3399, %v7305
    %v7307 = vrot.slane %v6359, %v7306
    %v7308 = vlaneseq
    %v7309 = vshrl.u32 %v7308, 7
    %v7310 = vsub.s32 %v3404, %v7309
    %v7311 = vrot.slane %v6364, %v7310
    %v7312 = vsel %vm3409, %v7311, %v7307
    %v7313 = vlaneseq
    %v7314 = vshrl.u32 %v7313, 7
    %v7315 = vsub.s32 %v3411, %v7314
    %v7316 = vrot.slane %v6369, %v7315
    %v7317 = vsel %vm3416, %v7316, %v7312
    %v7318 = vlaneseq
    %v7319 = vshrl.u32 %v7318, 7
    %v7320 = vsub.s32 %v3418, %v7319
    %v7321 = vrot.slane %v6374, %v7320
    %v7322 = vsel %vm3423, %v7321, %v7317
    %v7323 = vlaneseq
    %v7324 = vshrl.u32 %v7323, 7
    %v7325 = vsub.s32 %v3425, %v7324
    %v7326 = vrot.slane %v6379, %v7325
    %v7327 = vsel %vm3430, %v7326, %v7322
    %v7328 = vlaneseq
    %v7329 = vshrl.u32 %v7328, 7
    %v7330 = vsub.s32 %v3432, %v7329
    %v7331 = vrot.slane %v6384, %v7330
    %v7332 = vsel %vm3437, %v7331, %v7327
    %v7333 = vlaneseq
    %v7334 = vshrl.u32 %v7333, 7
    %v7335 = vsub.s32 %v3439, %v7334
    %v7336 = vrot.slane %v6389, %v7335
    %v7337 = vsel %vm3444, %v7336, %v7332
    %v7338 = vlaneseq
    %v7339 = vshrl.u32 %v7338, 7
    %v7340 = vsub.s32 %v3446, %v7339
    %v7341 = vrot.slane %v6394, %v7340
    %v7342 = vsel %vm3451, %v7341, %v7337
    %v7343 = vlaneseq
    %v7344 = vshrl.u32 %v7343, 7
    %v7345 = vsub.s32 %v3453, %v7344
    %v7346 = vrot.slane %v6399, %v7345
    %v7347 = vsel %vm3458, %v7346, %v7342
    %v7348 = vlaneseq
    %v7349 = vshrl.u32 %v7348, 7
    %v7350 = vsub.s32 %v3460, %v7349
    %v7351 = vrot.slane %v6404, %v7350
    %v7352 = vsel %vm3465, %v7351, %v7347
    %v7353 = vlaneseq
    %v7354 = vshrl.u32 %v7353, 7
    %v7355 = vsub.s32 %v3467, %v7354
    %v7356 = vrot.slane %v6409, %v7355
    %v7357 = vsel %vm3472, %v7356, %v7352
    %v7358 = vlaneseq
    %v7359 = vshrl.u32 %v7358, 7
    %v7360 = vsub.s32 %v3474, %v7359
    %v7361 = vrot.slane %v6414, %v7360
    %v7362 = vsel %vm3479, %v7361, %v7357
    %v7363 = vlaneseq
    %v7364 = vshrl.u32 %v7363, 7
    %v7365 = vsub.s32 %v3481, %v7364
    %v7366 = vrot.slane %v6419, %v7365
    %v7367 = vsel %vm3486, %v7366, %v7362
    %v7368 = vlaneseq
    %v7369 = vshrl.u32 %v7368, 7
    %v7370 = vsub.s32 %v3488, %v7369
    %v7371 = vrot.slane %v6424, %v7370
    %v7372 = vsel %vm3493, %v7371, %v7367
    %v7373 = vlaneseq
    %v7374 = vshrl.u32 %v7373, 7
    %v7375 = vsub.s32 %v3495, %v7374
    %v7376 = vrot.slane %v6429, %v7375
    %v7377 = vsel %vm3500, %v7376, %v7372
    %v7378 = vlaneseq
    %v7379 = vshrl.u32 %v7378, 7
    %v7380 = vsub.s32 %v3502, %v7379
    %v7381 = vrot.slane %v6434, %v7380
    %v7382 = vsel %vm3507, %v7381, %v7377
    %v7383 = vlaneseq
    %v7384 = vshrl.u32 %v7383, 7
    %v7385 = vsub.s32 %v3399, %v7384
    %v7386 = vrot.slane %v6439, %v7385
    %v7387 = vlaneseq
    %v7388 = vshrl.u32 %v7387, 7
    %v7389 = vsub.s32 %v3404, %v7388
    %v7390 = vrot.slane %v6444, %v7389
    %v7391 = vsel %vm3409, %v7390, %v7386
    %v7392 = vlaneseq
    %v7393 = vshrl.u32 %v7392, 7
    %v7394 = vsub.s32 %v3411, %v7393
    %v7395 = vrot.slane %v6449, %v7394
    %v7396 = vsel %vm3416, %v7395, %v7391
    %v7397 = vlaneseq
    %v7398 = vshrl.u32 %v7397, 7
    %v7399 = vsub.s32 %v3418, %v7398
    %v7400 = vrot.slane %v6454, %v7399
    %v7401 = vsel %vm3423, %v7400, %v7396
    %v7402 = vlaneseq
    %v7403 = vshrl.u32 %v7402, 7
    %v7404 = vsub.s32 %v3425, %v7403
    %v7405 = vrot.slane %v6459, %v7404
    %v7406 = vsel %vm3430, %v7405, %v7401
    %v7407 = vlaneseq
    %v7408 = vshrl.u32 %v7407, 7
    %v7409 = vsub.s32 %v3432, %v7408
    %v7410 = vrot.slane %v6464, %v7409
    %v7411 = vsel %vm3437, %v7410, %v7406
    %v7412 = vlaneseq
    %v7413 = vshrl.u32 %v7412, 7
    %v7414 = vsub.s32 %v3439, %v7413
    %v7415 = vrot.slane %v6469, %v7414
    %v7416 = vsel %vm3444, %v7415, %v7411
    %v7417 = vlaneseq
    %v7418 = vshrl.u32 %v7417, 7
    %v7419 = vsub.s32 %v3446, %v7418
    %v7420 = vrot.slane %v6474, %v7419
    %v7421 = vsel %vm3451, %v7420, %v7416
    %v7422 = vlaneseq
    %v7423 = vshrl.u32 %v7422, 7
    %v7424 = vsub.s32 %v3453, %v7423
    %v7425 = vrot.slane %v6479, %v7424
    %v7426 = vsel %vm3458, %v7425, %v7421
    %v7427 = vlaneseq
    %v7428 = vshrl.u32 %v7427, 7
    %v7429 = vsub.s32 %v3460, %v7428
    %v7430 = vrot.slane %v6484, %v7429
    %v7431 = vsel %vm3465, %v7430, %v7426
    %v7432 = vlaneseq
    %v7433 = vshrl.u32 %v7432, 7
    %v7434 = vsub.s32 %v3467, %v7433
    %v7435 = vrot.slane %v6489, %v7434
    %v7436 = vsel %vm3472, %v7435, %v7431
    %v7437 = vlaneseq
    %v7438 = vshrl.u32 %v7437, 7
    %v7439 = vsub.s32 %v3474, %v7438
    %v7440 = vrot.slane %v6494, %v7439
    %v7441 = vsel %vm3479, %v7440, %v7436
    %v7442 = vlaneseq
    %v7443 = vshrl.u32 %v7442, 7
    %v7444 = vsub.s32 %v3481, %v7443
    %v7445 = vrot.slane %v6499, %v7444
    %v7446 = vsel %vm3486, %v7445, %v7441
    %v7447 = vlaneseq
    %v7448 = vshrl.u32 %v7447, 7
    %v7449 = vsub.s32 %v3488, %v7448
    %v7450 = vrot.slane %v6504, %v7449
    %v7451 = vsel %vm3493, %v7450, %v7446
    %v7452 = vlaneseq
    %v7453 = vshrl.u32 %v7452, 7
    %v7454 = vsub.s32 %v3495, %v7453
    %v7455 = vrot.slane %v6509, %v7454
    %v7456 = vsel %vm3500, %v7455, %v7451
    %v7457 = vlaneseq
    %v7458 = vshrl.u32 %v7457, 7
    %v7459 = vsub.s32 %v3502, %v7458
    %v7460 = vrot.slane %v6514, %v7459
    %v7461 = vsel %vm3507, %v7460, %v7456
    %v7462 = vlaneseq
    %v7463 = vshrl.u32 %v7462, 7
    %v7464 = vsub.s32 %v3399, %v7463
    %v7465 = vrot.slane %v6519, %v7464
    %v7466 = vlaneseq
    %v7467 = vshrl.u32 %v7466, 7
    %v7468 = vsub.s32 %v3404, %v7467
    %v7469 = vrot.slane %v6524, %v7468
    %v7470 = vsel %vm3409, %v7469, %v7465
    %v7471 = vlaneseq
    %v7472 = vshrl.u32 %v7471, 7
    %v7473 = vsub.s32 %v3411, %v7472
    %v7474 = vrot.slane %v6529, %v7473
    %v7475 = vsel %vm3416, %v7474, %v7470
    %v7476 = vlaneseq
    %v7477 = vshrl.u32 %v7476, 7
    %v7478 = vsub.s32 %v3418, %v7477
    %v7479 = vrot.slane %v6534, %v7478
    %v7480 = vsel %vm3423, %v7479, %v7475
    %v7481 = vlaneseq
    %v7482 = vshrl.u32 %v7481, 7
    %v7483 = vsub.s32 %v3425, %v7482
    %v7484 = vrot.slane %v6539, %v7483
    %v7485 = vsel %vm3430, %v7484, %v7480
    %v7486 = vlaneseq
    %v7487 = vshrl.u32 %v7486, 7
    %v7488 = vsub.s32 %v3432, %v7487
    %v7489 = vrot.slane %v6544, %v7488
    %v7490 = vsel %vm3437, %v7489, %v7485
    %v7491 = vlaneseq
    %v7492 = vshrl.u32 %v7491, 7
    %v7493 = vsub.s32 %v3439, %v7492
    %v7494 = vrot.slane %v6549, %v7493
    %v7495 = vsel %vm3444, %v7494, %v7490
    %v7496 = vlaneseq
    %v7497 = vshrl.u32 %v7496, 7
    %v7498 = vsub.s32 %v3446, %v7497
    %v7499 = vrot.slane %v6554, %v7498
    %v7500 = vsel %vm3451, %v7499, %v7495
    %v7501 = vlaneseq
    %v7502 = vshrl.u32 %v7501, 7
    %v7503 = vsub.s32 %v3453, %v7502
    %v7504 = vrot.slane %v6559, %v7503
    %v7505 = vsel %vm3458, %v7504, %v7500
    %v7506 = vlaneseq
    %v7507 = vshrl.u32 %v7506, 7
    %v7508 = vsub.s32 %v3460, %v7507
    %v7509 = vrot.slane %v6564, %v7508
    %v7510 = vsel %vm3465, %v7509, %v7505
    %v7511 = vlaneseq
    %v7512 = vshrl.u32 %v7511, 7
    %v7513 = vsub.s32 %v3467, %v7512
    %v7514 = vrot.slane %v6569, %v7513
    %v7515 = vsel %vm3472, %v7514, %v7510
    %v7516 = vlaneseq
    %v7517 = vshrl.u32 %v7516, 7
    %v7518 = vsub.s32 %v3474, %v7517
    %v7519 = vrot.slane %v6574, %v7518
    %v7520 = vsel %vm3479, %v7519, %v7515
    %v7521 = vlaneseq
    %v7522 = vshrl.u32 %v7521, 7
    %v7523 = vsub.s32 %v3481, %v7522
    %v7524 = vrot.slane %v6579, %v7523
    %v7525 = vsel %vm3486, %v7524, %v7520
    %v7526 = vlaneseq
    %v7527 = vshrl.u32 %v7526, 7
    %v7528 = vsub.s32 %v3488, %v7527
    %v7529 = vrot.slane %v6584, %v7528
    %v7530 = vsel %vm3493, %v7529, %v7525
    %v7531 = vlaneseq
    %v7532 = vshrl.u32 %v7531, 7
    %v7533 = vsub.s32 %v3495, %v7532
    %v7534 = vrot.slane %v6589, %v7533
    %v7535 = vsel %vm3500, %v7534, %v7530
    %v7536 = vlaneseq
    %v7537 = vshrl.u32 %v7536, 7
    %v7538 = vsub.s32 %v3502, %v7537
    %v7539 = vrot.slane %v6594, %v7538
    %v7540 = vsel %vm3507, %v7539, %v7535
    %v7541 = vsel %vm4062, %v7066, %v6987
    %v7542 = vsel %vm4064, %v7145, %v7541
    %v7543 = vsel %vm4066, %v7224, %v7542
    %v7544 = vsel %vm4068, %v7303, %v7543
    %v7545 = vsel %vm4070, %v7382, %v7544
    %v7546 = vsel %vm4072, %v7461, %v7545
    %v7547 = vsel %vm4074, %v7540, %v7546
    %7549 = vst [vmem:[#allocation6] sm:$0xff] %v7547
    // Predicated region
    $region26: #{tpu_custom_call.1} parent=1 // pred_check
      _
    $region27: #{tpu_custom_call.1} parent=1 // pred_check_branch
      %7551 = sbr.rel (0) target = $region29
    $region28: #{tpu_custom_call.1} parent=1 // pred_region
      %s7553 = ssub.s32 128, 128
      %7554 = vsyncadd [#allocation4], %s7553
      %s7556 = sshll.u32 [#allocation5], 4
      %s7557 = int_to_ptr.vmem [resolvable:$true] %s7556
      %7559 = dma.vmem_to_hbm [thread:$0]  %s7557, 128, %s5, [#allocation4]
    $region29: #{tpu_custom_call.1} parent=1 // pred_fallthru
      _
    // Predicated region
    $region30: #{tpu_custom_call.1} parent=1 // pred_check
      _
    $region31: #{tpu_custom_call.1} parent=1 // pred_check_branch
      %7561 = sbr.rel (0) target = $region33
    $region32: #{tpu_custom_call.1} parent=1 // pred_region
      %s7563 = ssub.s32 128, 128
      %7564 = vsyncadd [#allocation7], %s7563
      %s7566 = sshll.u32 [#allocation6], 4
      %s7567 = int_to_ptr.vmem [resolvable:$true] %s7566
      %7569 = dma.vmem_to_hbm [thread:$0]  %s7567, 128, %s6, [#allocation7]
    $region33: #{tpu_custom_call.1} parent=1 // pred_fallthru
      _
    // Predicated region
    $region34: #{tpu_custom_call.1} parent=1 // pred_check
      _
    $region35: #{tpu_custom_call.1} parent=1 // pred_check_branch
      %7571 = sbr.rel (0) target = $region37
    $region36: #{tpu_custom_call.1} parent=1 // pred_region
      %7572 = dma.done [#allocation4], 128
    $region37: #{tpu_custom_call.1} parent=1 // pred_fallthru
      _
    // Predicated region
    $region38: #{tpu_custom_call.1} parent=1 // pred_check
      _
    $region39: #{tpu_custom_call.1} parent=1 // pred_check_branch
      %7574 = sbr.rel (0) target = $region41
    $region40: #{tpu_custom_call.1} parent=1 // pred_region
      %7575 = dma.done [#allocation7], 128
    $region41: #{tpu_custom_call.1} parent=1 // pred_fallthru
      _
    %7576 = vsyncpa [#allocation3], 1
    %7577 = vsyncpa [#allocation4], 1
    %7578 = vsyncpa [#allocation7], 1

</llo_original>
